<compile_context>
chip_gen: v5e
topology: v5e:2x2
jax: 0.10.0
libtpu: 0.0.40
codegen_flags: <defaults>
</compile_context>

<pallas_src>
import math
import jax
import jax.numpy as jnp
from jax.experimental import pallas as pl
from jax.experimental.pallas import tpu as pltpu

# --- module hyper-parameters (from the PyTorch script) ---
INPUT_SIZE = 1
H = 64               # hidden_size (d_model)
NHEAD = 8
HEAD_DIM = H // NHEAD
FF = 2048            # nn.TransformerEncoderLayer default dim_feedforward
OUTPUT_SIZE = 1
EPS = 1e-5           # nn.LayerNorm default eps


def _encoder_kernel(
    x_ref, pe_ref, wemb_ref,
    wqkv_ref, bqkv_ref, wo_ref, bo_ref,
    g1_ref, beta1_ref,
    w1_ref, b1_ref, w2_ref, b2_ref,
    g2_ref, beta2_ref, wfc_ref, bfc_ref,
    gseg_ref, gexp_ref,
    out_ref):
  NB, S, B, _ = x_ref.shape
  R = NB * S * B
  NS = NB * S

  # embedding (nn.Linear(1, H)) + positional encoding.  b_emb is pre-folded
  # into pe_ref host-side; pe rows are indexed by the PyTorch batch axis (B).
  x = x_ref[...]                                               # (NB, S, B, 1)
  h = x * wemb_ref[...] + pe_ref[...][None, None]              # (NB, S, B, H)
  h2d = h.reshape(R, H)                                        # rows: (n, s, b)

  # ----- multi-head self-attention (attends over B, batched over (n, s)) ----
  # fused QKV projection (bf16 operands, f32 accumulate); 1/sqrt(head_dim) is
  # folded into the Q columns / bias host-side.
  qkv = (jnp.dot(h2d.astype(jnp.bfloat16), wqkv_ref[...],
                 preferred_element_type=jnp.float32) + bqkv_ref[...])   # (R, 3H)
  q3 = qkv[:, 0 * H:1 * H].reshape(NS, B, H)
  k3 = qkv[:, 1 * H:2 * H].reshape(NS, B, H)
  v3 = qkv[:, 2 * H:3 * H].reshape(NS, B, H)

  # per-head scores with no head loop and no transposes:
  #   scores[ns,q,k,h] = sum_d q3[ns,q,h*hd+d] * k3[ns,k,h*hd+d]
  #                    = ((q3 x k3 outer over (q,k)) @ Gseg),  Gseg[c,h]=1{c//hd==h}
  prod = q3[:, :, None, :] * k3[:, None, :, :]                 # (NS, B, B, H)
  scores = jnp.dot(prod.reshape(NS * B * B, H), gseg_ref[...],
                   preferred_element_type=jnp.float32)
  scores = scores.reshape(NS, B, B, NHEAD)                     # (ns, q, k, head)
  scores = scores - jnp.max(scores, axis=2, keepdims=True)
  p = jnp.exp(scores)
  p = p * pl.reciprocal(jnp.sum(p, axis=2, keepdims=True), approx=True)

  # context: ctx[ns,q,c] = sum_k p[ns,q,k,c//hd] * v3[ns,k,c]
  # Gexp[h,c]=1{c//hd==h} broadcasts each head's weights across its hd columns.
  p_exp = jnp.dot(p.reshape(NS * B * B, NHEAD), gexp_ref[...],
                  preferred_element_type=jnp.float32).reshape(NS, B, B, H)
  ctx = jnp.sum(p_exp * v3[:, None, :, :], axis=2)             # (NS, B, H), head-major cols
  ctx2d = ctx.reshape(R, H)

  # fused output projection (bf16 operands, f32 accumulate)
  attn = (jnp.dot(ctx2d.astype(jnp.bfloat16), wo_ref[...],
                  preferred_element_type=jnp.float32) + bo_ref[...])

  def layer_norm(t, g, b):
    mu = jnp.mean(t, axis=-1, keepdims=True)
    var = jnp.mean((t - mu) * (t - mu), axis=-1, keepdims=True)
    return (t - mu) * jax.lax.rsqrt(var + EPS) * g + b

  # TODO(synk): all nn.Dropout layers are treated as identity (eval mode).
  h1 = layer_norm(h2d + attn, g1_ref[...], beta1_ref[...])

  # ----- feed-forward (Linear -> ReLU -> Linear), bf16 weights, f32 accumulate -----
  ff = (jnp.dot(h1.astype(jnp.bfloat16), w1_ref[...],
                preferred_element_type=jnp.float32) + b1_ref[...])
  ff = jnp.maximum(ff, 0.0)
  ff = (jnp.dot(ff.astype(jnp.bfloat16), w2_ref[...],
                preferred_element_type=jnp.float32) + b2_ref[...])
  h2 = layer_norm(h1 + ff, g2_ref[...], beta2_ref[...])

  # PyTorch x[:, -1, :]  ==  rows with s == S-1  ->  (NB, B, H)
  last = h2.reshape(NB, S, B, H)[:, S - 1]
  # fc: nn.Linear(H, 1) as a lane reduction (tiny; not worth an MXU dot)
  out_ref[...] = jnp.sum(last * wfc_ref[...], axis=-1) + bfc_ref[...]


def transformer_encoder_forward(x, params, *, n_block=8):
  """x: (B, S, 1) or (N, B, S, 1) float32.

  Each (B, S, 1) slice is processed exactly like the PyTorch module.  The
  optional leading N axis is a batch of independent instances; the kernel is
  weight-resident and processes `n_block` instances per grid step (raise to
  32-64 on 128 MiB-VMEM parts like v5e/v6e)."""
  squeeze = (x.ndim == 3)
  if squeeze:
    x = x[None]
  N, B, S, _ = x.shape

  # instance blocking (block second-to-last output dim must be 8-aligned or full)
  if n_block >= N:
    n_blk = N
  else:
    n_blk = max(8, (n_block // 8) * 8)
  n_pad = (-N) % n_blk
  if n_pad:
    x = jnp.concatenate([x, jnp.zeros((n_pad,) + x.shape[1:], x.dtype)], axis=0)
  n_total = N + n_pad

  x_t = jnp.transpose(x, (0, 2, 1, 3)).astype(jnp.float32)     # (Nt, S, B, 1)

  # positional-encoding table rows 0..B-1 (matches pe[:x.size(0)])
  pos = jnp.arange(B, dtype=jnp.float32)[:, None]
  div = jnp.exp(jnp.arange(0, H, 2, dtype=jnp.float32) * (-math.log(10000.0) / H))
  pe = jnp.zeros((B, H), dtype=jnp.float32)
  pe = pe.at[:, 0::2].set(jnp.sin(pos * div))
  pe = pe.at[:, 1::2].set(jnp.cos(pos * div))

  p = params
  scale = 1.0 / math.sqrt(HEAD_DIM)
  # plain-JAX glue: fold / transpose parameters into kernel-friendly views
  wemb = p['W_emb'][:, 0].reshape(1, H)
  pe_b = pe + p['b_emb'][None, :]                                     # b_emb folded in
  wqkv = jnp.concatenate([p['Wq'].T * scale, p['Wk'].T, p['Wv'].T],
                         axis=1).astype(jnp.bfloat16)                 # (H, 3H), scale folded
  bqkv = jnp.concatenate([p['bq'] * scale, p['bk'], p['bv']]).reshape(1, 3 * H)
  wo = p['Wo'].T.astype(jnp.bfloat16)                                 # (H, H)
  bo = p['bo'].reshape(1, H)
  g1, beta1 = p['ln1_g'].reshape(1, H), p['ln1_b'].reshape(1, H)
  w1 = p['W1'].T.astype(jnp.bfloat16)                                 # (H, FF)
  b1 = p['b1'].reshape(1, FF)
  w2 = p['W2'].T.astype(jnp.bfloat16)                                 # (FF, H)
  b2 = p['b2'].reshape(1, H)
  g2, beta2 = p['ln2_g'].reshape(1, H), p['ln2_b'].reshape(1, H)
  wfc = p['W_fc'].reshape(1, H)
  bfc = p['b_fc'].reshape(1, 1)
  # constant head-selection matrices for the loop-free multi-head attention
  head_of_col = jnp.arange(H, dtype=jnp.int32) // HEAD_DIM
  gseg = (head_of_col[:, None] == jnp.arange(NHEAD)[None, :]).astype(jnp.float32)  # (H, NHEAD)
  gexp = gseg.T                                                                     # (NHEAD, H)

  consts = (pe_b, wemb, wqkv, bqkv, wo, bo, g1, beta1,
            w1, b1, w2, b2, g2, beta2, wfc, bfc, gseg, gexp)

  def const_spec(a):
    nd = a.ndim
    # constant block index across the grid -> weight stays VMEM-resident
    return pl.BlockSpec(a.shape, lambda n, _nd=nd: (0,) * _nd)

  in_specs = ([pl.BlockSpec((n_blk, S, B, 1), lambda n: (n, 0, 0, 0))]
              + [const_spec(a) for a in consts])
  out_spec = pl.BlockSpec((n_blk, B), lambda n: (n, 0))

  out = pl.pallas_call(
      _encoder_kernel,
      out_shape=jax.ShapeDtypeStruct((n_total, B), jnp.float32),
      grid_spec=pltpu.PrefetchScalarGridSpec(
          num_scalar_prefetch=0,
          grid=(n_total // n_blk,),
          in_specs=in_specs,
          out_specs=out_spec),
      compiler_params=pltpu.CompilerParams(
          dimension_semantics=("parallel",),
          vmem_limit_bytes=48 << 20),
  )(x_t, *consts)

  out = out[:N, :, None]                                       # (N, B, 1)
  return out[0] if squeeze else out


def _init_params(key):
  ks = jax.random.split(key, 20)

  def nrm(k, shape, scale=0.1):
    return (scale * jax.random.normal(k, shape)).astype(jnp.float32)

  return {
      'W_emb': nrm(ks[0], (H, INPUT_SIZE)),
      'b_emb': nrm(ks[1], (H,)),
      'Wq': nrm(ks[2], (H, H)), 'bq': nrm(ks[3], (H,)),
      'Wk': nrm(ks[4], (H, H)), 'bk': nrm(ks[5], (H,)),
      'Wv': nrm(ks[6], (H, H)), 'bv': nrm(ks[7], (H,)),
      'Wo': nrm(ks[8], (H, H)), 'bo': nrm(ks[9], (H,)),
      'ln1_g': jnp.ones((H,), jnp.float32),
      'ln1_b': jnp.zeros((H,), jnp.float32),
      'W1': nrm(ks[10], (FF, H), 0.05), 'b1': nrm(ks[11], (FF,), 0.05),
      'W2': nrm(ks[12], (H, FF), 0.05), 'b2': nrm(ks[13], (H,), 0.05),
      'ln2_g': jnp.ones((H,), jnp.float32),
      'ln2_b': jnp.zeros((H,), jnp.float32),
      'W_fc': nrm(ks[14], (OUTPUT_SIZE, H)),
      'b_fc': nrm(ks[15], (OUTPUT_SIZE,)),
  }


if __name__ == "__main__":
  N, B, S = 16, 8, 8                       # 16 instances, batch=8, seq=8
  key = jax.random.PRNGKey(0)
  k_x, k_p = jax.random.split(key)
  params = _init_params(k_p)

  # single input, exactly the PyTorch module's signature
  x_single = jax.random.normal(k_x, (B, S, INPUT_SIZE), dtype=jnp.float32)
  out_single = jax.block_until_ready(transformer_encoder_forward(x_single, params))
  assert out_single.shape == (B, OUTPUT_SIZE)
  assert bool(jnp.all(jnp.isfinite(out_single)))

  # batched instances: weight-resident grid, 8 instances per step, 2 steps (parallel)
  x_batch = jax.random.normal(k_x, (N, B, S, INPUT_SIZE), dtype=jnp.float32)
  out_batch = jax.block_until_ready(transformer_encoder_forward(x_batch, params))
  assert out_batch.shape == (N, B, OUTPUT_SIZE)
  assert bool(jnp.all(jnp.isfinite(out_batch)))

  print("KERNEL_OK")
</pallas_src>

<mosaic_0001>
module attributes {stable_mosaic.version = 11 : i64} {
  func.func @_encoder_kernel(%arg0: i32, %arg1: memref<1x8x8x1xf32, #tpu.memory_space<vmem>>, %arg2: memref<8x64xf32, #tpu.memory_space<vmem>>, %arg3: memref<1x64xf32, #tpu.memory_space<vmem>>, %arg4: memref<64x192xbf16, #tpu.memory_space<vmem>>, %arg5: memref<1x192xf32, #tpu.memory_space<vmem>>, %arg6: memref<64x64xbf16, #tpu.memory_space<vmem>>, %arg7: memref<1x64xf32, #tpu.memory_space<vmem>>, %arg8: memref<1x64xf32, #tpu.memory_space<vmem>>, %arg9: memref<1x64xf32, #tpu.memory_space<vmem>>, %arg10: memref<64x2048xbf16, #tpu.memory_space<vmem>>, %arg11: memref<1x2048xf32, #tpu.memory_space<vmem>>, %arg12: memref<2048x64xbf16, #tpu.memory_space<vmem>>, %arg13: memref<1x64xf32, #tpu.memory_space<vmem>>, %arg14: memref<1x64xf32, #tpu.memory_space<vmem>>, %arg15: memref<1x64xf32, #tpu.memory_space<vmem>>, %arg16: memref<1x64xf32, #tpu.memory_space<vmem>>, %arg17: memref<1x1xf32, #tpu.memory_space<vmem>>, %arg18: memref<64x8xf32, #tpu.memory_space<vmem>>, %arg19: memref<8x64xf32, #tpu.memory_space<vmem>>, %arg20: memref<1x8xf32, #tpu.memory_space<vmem>>) attributes {dimension_semantics = [#tpu.dimension_semantics<parallel>], iteration_bounds = array<i64: 1>, scalar_prefetch = 0 : i64, scratch_operands = 0 : i64, tpu.core_type = #tpu.core_type<tc>, window_params = [{transform_indices = @transform_0, window_bounds = array<i64: 1, 8, 8, 1>}, {pipeline_mode = #tpu.pipeline_mode<synchronous>, transform_indices = @transform_1, window_bounds = array<i64: 8, 64>}, {pipeline_mode = #tpu.pipeline_mode<synchronous>, transform_indices = @transform_2, window_bounds = array<i64: 1, 64>}, {pipeline_mode = #tpu.pipeline_mode<synchronous>, transform_indices = @transform_3, window_bounds = array<i64: 64, 192>}, {pipeline_mode = #tpu.pipeline_mode<synchronous>, transform_indices = @transform_4, window_bounds = array<i64: 1, 192>}, {pipeline_mode = #tpu.pipeline_mode<synchronous>, transform_indices = @transform_5, window_bounds = array<i64: 64, 64>}, {pipeline_mode = #tpu.pipeline_mode<synchronous>, transform_indices = @transform_6, window_bounds = array<i64: 1, 64>}, {pipeline_mode = #tpu.pipeline_mode<synchronous>, transform_indices = @transform_7, window_bounds = array<i64: 1, 64>}, {pipeline_mode = #tpu.pipeline_mode<synchronous>, transform_indices = @transform_8, window_bounds = array<i64: 1, 64>}, {pipeline_mode = #tpu.pipeline_mode<synchronous>, transform_indices = @transform_9, window_bounds = array<i64: 64, 2048>}, {pipeline_mode = #tpu.pipeline_mode<synchronous>, transform_indices = @transform_10, window_bounds = array<i64: 1, 2048>}, {pipeline_mode = #tpu.pipeline_mode<synchronous>, transform_indices = @transform_11, window_bounds = array<i64: 2048, 64>}, {pipeline_mode = #tpu.pipeline_mode<synchronous>, transform_indices = @transform_12, window_bounds = array<i64: 1, 64>}, {pipeline_mode = #tpu.pipeline_mode<synchronous>, transform_indices = @transform_13, window_bounds = array<i64: 1, 64>}, {pipeline_mode = #tpu.pipeline_mode<synchronous>, transform_indices = @transform_14, window_bounds = array<i64: 1, 64>}, {pipeline_mode = #tpu.pipeline_mode<synchronous>, transform_indices = @transform_15, window_bounds = array<i64: 1, 64>}, {pipeline_mode = #tpu.pipeline_mode<synchronous>, transform_indices = @transform_16, window_bounds = array<i64: 1, 1>}, {pipeline_mode = #tpu.pipeline_mode<synchronous>, transform_indices = @transform_17, window_bounds = array<i64: 64, 8>}, {pipeline_mode = #tpu.pipeline_mode<synchronous>, transform_indices = @transform_18, window_bounds = array<i64: 8, 64>}, {transform_indices = @transform_19, window_bounds = array<i64: 1, 8>}]} {
    %c0 = arith.constant 0 : index
    %c0_0 = arith.constant 0 : index
    %c0_1 = arith.constant 0 : index
    %c0_2 = arith.constant 0 : index
    %0 = vector.load %arg1[%c0, %c0_0, %c0_1, %c0_2] : memref<1x8x8x1xf32, #tpu.memory_space<vmem>>, vector<1x8x8x1xf32>
    %c0_3 = arith.constant 0 : index
    %c0_4 = arith.constant 0 : index
    %1 = vector.load %arg3[%c0_3, %c0_4] : memref<1x64xf32, #tpu.memory_space<vmem>>, vector<1x64xf32>
    %2 = vector.shape_cast %1 : vector<1x64xf32> to vector<1x1x1x64xf32>
    %3 = vector.broadcast %0 : vector<1x8x8x1xf32> to vector<1x8x8x64xf32>
    %4 = vector.broadcast %2 : vector<1x1x1x64xf32> to vector<1x8x8x64xf32>
    %5 = arith.mulf %3, %4 : vector<1x8x8x64xf32>
    %c0_5 = arith.constant 0 : index
    %c0_6 = arith.constant 0 : index
    %6 = vector.load %arg2[%c0_5, %c0_6] : memref<8x64xf32, #tpu.memory_space<vmem>>, vector<8x64xf32>
    %7 = vector.shape_cast %6 : vector<8x64xf32> to vector<1x1x8x64xf32>
    %8 = vector.broadcast %7 : vector<1x1x8x64xf32> to vector<1x8x8x64xf32>
    %9 = arith.addf %5, %8 : vector<1x8x8x64xf32>
    %10 = vector.shape_cast %9 : vector<1x8x8x64xf32> to vector<64x64xf32>
    %11 = arith.truncf %10 : vector<64x64xf32> to vector<64x64xbf16>
    %c0_7 = arith.constant 0 : index
    %c0_8 = arith.constant 0 : index
    %12 = vector.load %arg4[%c0_7, %c0_8] : memref<64x192xbf16, #tpu.memory_space<vmem>>, vector<64x192xbf16>
    %cst = arith.constant dense<0.000000e+00> : vector<64x192xf32>
    %13 = tpu.matmul %11, %12, %cst {dimension_numbers = #tpu.dot_dimension_numbers<[1], [0], [0], [1], [0, 0, 1, 1], [], []>} : vector<64x64xbf16>, vector<64x192xbf16>, vector<64x192xf32> -> vector<64x192xf32>
    %c0_9 = arith.constant 0 : index
    %c0_10 = arith.constant 0 : index
    %14 = vector.load %arg5[%c0_9, %c0_10] : memref<1x192xf32, #tpu.memory_space<vmem>>, vector<1x192xf32>
    %15 = vector.broadcast %14 : vector<1x192xf32> to vector<64x192xf32>
    %16 = arith.addf %13, %15 : vector<64x192xf32>
    %17 = vector.extract_strided_slice %16 {offsets = [0, 0], sizes = [64, 64], strides = [1, 1]} : vector<64x192xf32> to vector<64x64xf32>
    %18 = vector.shape_cast %17 : vector<64x64xf32> to vector<8x8x64xf32>
    %19 = vector.extract_strided_slice %16 {offsets = [0, 64], sizes = [64, 64], strides = [1, 1]} : vector<64x192xf32> to vector<64x64xf32>
    %20 = vector.shape_cast %19 : vector<64x64xf32> to vector<8x8x64xf32>
    %21 = vector.extract_strided_slice %16 {offsets = [0, 128], sizes = [64, 64], strides = [1, 1]} : vector<64x192xf32> to vector<64x64xf32>
    %22 = vector.shape_cast %21 : vector<64x64xf32> to vector<8x8x64xf32>
    %23 = vector.shape_cast %18 : vector<8x8x64xf32> to vector<8x8x1x64xf32>
    %24 = vector.shape_cast %20 : vector<8x8x64xf32> to vector<8x1x8x64xf32>
    %25 = vector.broadcast %23 : vector<8x8x1x64xf32> to vector<8x8x8x64xf32>
    %26 = vector.broadcast %24 : vector<8x1x8x64xf32> to vector<8x8x8x64xf32>
    %27 = arith.mulf %25, %26 : vector<8x8x8x64xf32>
    %28 = vector.shape_cast %27 : vector<8x8x8x64xf32> to vector<512x64xf32>
    %c0_11 = arith.constant 0 : index
    %c0_12 = arith.constant 0 : index
    %29 = vector.load %arg18[%c0_11, %c0_12] : memref<64x8xf32, #tpu.memory_space<vmem>>, vector<64x8xf32>
    %cst_13 = arith.constant dense<0.000000e+00> : vector<512x8xf32>
    %30 = tpu.matmul %28, %29, %cst_13 {dimension_numbers = #tpu.dot_dimension_numbers<[1], [0], [0], [1], [0, 0, 1, 1], [], []>} : vector<512x64xf32>, vector<64x8xf32>, vector<512x8xf32> -> vector<512x8xf32>
    %31 = vector.shape_cast %30 : vector<512x8xf32> to vector<8x8x8x8xf32>
    %cst_14 = arith.constant dense<0xFF800000> : vector<8x8x8xf32>
    %32 = vector.multi_reduction <maximumf>, %31, %cst_14 [2] : vector<8x8x8x8xf32> to vector<8x8x8xf32>
    %33 = vector.shape_cast %32 : vector<8x8x8xf32> to vector<8x8x1x8xf32>
    %34 = vector.broadcast %33 : vector<8x8x1x8xf32> to vector<8x8x8x8xf32>
    %35 = arith.subf %31, %34 : vector<8x8x8x8xf32>
    %36 = math.exp %35 : vector<8x8x8x8xf32>
    %cst_15 = arith.constant dense<0.000000e+00> : vector<8x8x8xf32>
    %37 = vector.multi_reduction <add>, %36, %cst_15 [2] : vector<8x8x8x8xf32> to vector<8x8x8xf32>
    %38 = vector.shape_cast %37 : vector<8x8x8xf32> to vector<8x8x1x8xf32>
    %39 = tpu.reciprocal %38 {approx = true} : vector<8x8x1x8xf32> -> vector<8x8x1x8xf32>
    %40 = vector.broadcast %39 : vector<8x8x1x8xf32> to vector<8x8x8x8xf32>
    %41 = arith.mulf %36, %40 : vector<8x8x8x8xf32>
    %42 = vector.shape_cast %41 : vector<8x8x8x8xf32> to vector<512x8xf32>
    %c0_16 = arith.constant 0 : index
    %c0_17 = arith.constant 0 : index
    %43 = vector.load %arg19[%c0_16, %c0_17] : memref<8x64xf32, #tpu.memory_space<vmem>>, vector<8x64xf32>
    %cst_18 = arith.constant dense<0.000000e+00> : vector<512x64xf32>
    %44 = tpu.matmul %42, %43, %cst_18 {dimension_numbers = #tpu.dot_dimension_numbers<[1], [0], [0], [1], [0, 0, 1, 1], [], []>} : vector<512x8xf32>, vector<8x64xf32>, vector<512x64xf32> -> vector<512x64xf32>
    %45 = vector.shape_cast %44 : vector<512x64xf32> to vector<8x8x8x64xf32>
    %46 = vector.shape_cast %22 : vector<8x8x64xf32> to vector<8x1x8x64xf32>
    %47 = vector.broadcast %46 : vector<8x1x8x64xf32> to vector<8x8x8x64xf32>
    %48 = arith.mulf %45, %47 : vector<8x8x8x64xf32>
    %cst_19 = arith.constant dense<0.000000e+00> : vector<8x8x64xf32>
    %49 = vector.multi_reduction <add>, %48, %cst_19 [2] : vector<8x8x8x64xf32> to vector<8x8x64xf32>
    %50 = vector.shape_cast %49 : vector<8x8x64xf32> to vector<64x64xf32>
    %51 = arith.truncf %50 : vector<64x64xf32> to vector<64x64xbf16>
    %c0_20 = arith.constant 0 : index
    %c0_21 = arith.constant 0 : index
    %52 = vector.load %arg6[%c0_20, %c0_21] : memref<64x64xbf16, #tpu.memory_space<vmem>>, vector<64x64xbf16>
    %cst_22 = arith.constant dense<0.000000e+00> : vector<64x64xf32>
    %53 = tpu.matmul %51, %52, %cst_22 {dimension_numbers = #tpu.dot_dimension_numbers<[1], [0], [0], [1], [0, 0, 1, 1], [], []>} : vector<64x64xbf16>, vector<64x64xbf16>, vector<64x64xf32> -> vector<64x64xf32>
    %c0_23 = arith.constant 0 : index
    %c0_24 = arith.constant 0 : index
    %54 = vector.load %arg7[%c0_23, %c0_24] : memref<1x64xf32, #tpu.memory_space<vmem>>, vector<1x64xf32>
    %55 = vector.broadcast %54 : vector<1x64xf32> to vector<64x64xf32>
    %56 = arith.addf %53, %55 : vector<64x64xf32>
    %57 = arith.addf %10, %56 : vector<64x64xf32>
    %c0_25 = arith.constant 0 : index
    %c0_26 = arith.constant 0 : index
    %58 = vector.load %arg8[%c0_25, %c0_26] : memref<1x64xf32, #tpu.memory_space<vmem>>, vector<1x64xf32>
    %c0_27 = arith.constant 0 : index
    %c0_28 = arith.constant 0 : index
    %59 = vector.load %arg9[%c0_27, %c0_28] : memref<1x64xf32, #tpu.memory_space<vmem>>, vector<1x64xf32>
    %cst_29 = arith.constant dense<0.000000e+00> : vector<64xf32>
    %60 = vector.multi_reduction <add>, %57, %cst_29 [1] : vector<64x64xf32> to vector<64xf32>
    %61 = vector.shape_cast %60 : vector<64xf32> to vector<64x1xf32>
    %cst_30 = arith.constant 6.400000e+01 : f32
    %62 = vector.broadcast %cst_30 : f32 to vector<64x1xf32>
    %63 = arith.divf %61, %62 : vector<64x1xf32>
    %64 = vector.broadcast %63 : vector<64x1xf32> to vector<64x64xf32>
    %65 = arith.subf %57, %64 : vector<64x64xf32>
    %66 = vector.broadcast %63 : vector<64x1xf32> to vector<64x64xf32>
    %67 = arith.subf %57, %66 : vector<64x64xf32>
    %68 = arith.mulf %65, %67 : vector<64x64xf32>
    %cst_31 = arith.constant dense<0.000000e+00> : vector<64xf32>
    %69 = vector.multi_reduction <add>, %68, %cst_31 [1] : vector<64x64xf32> to vector<64xf32>
    %70 = vector.shape_cast %69 : vector<64xf32> to vector<64x1xf32>
    %cst_32 = arith.constant 6.400000e+01 : f32
    %71 = vector.broadcast %cst_32 : f32 to vector<64x1xf32>
    %72 = arith.divf %70, %71 : vector<64x1xf32>
    %73 = vector.broadcast %63 : vector<64x1xf32> to vector<64x64xf32>
    %74 = arith.subf %57, %73 : vector<64x64xf32>
    %cst_33 = arith.constant 9.99999974E-6 : f32
    %75 = vector.broadcast %cst_33 : f32 to vector<64x1xf32>
    %76 = arith.addf %72, %75 : vector<64x1xf32>
    %77 = math.rsqrt %76 : vector<64x1xf32>
    %78 = vector.broadcast %77 : vector<64x1xf32> to vector<64x64xf32>
    %79 = arith.mulf %74, %78 : vector<64x64xf32>
    %80 = vector.broadcast %58 : vector<1x64xf32> to vector<64x64xf32>
    %81 = arith.mulf %79, %80 : vector<64x64xf32>
    %82 = vector.broadcast %59 : vector<1x64xf32> to vector<64x64xf32>
    %83 = arith.addf %81, %82 : vector<64x64xf32>
    %84 = arith.truncf %83 : vector<64x64xf32> to vector<64x64xbf16>
    %c0_34 = arith.constant 0 : index
    %c0_35 = arith.constant 0 : index
    %85 = vector.load %arg10[%c0_34, %c0_35] : memref<64x2048xbf16, #tpu.memory_space<vmem>>, vector<64x2048xbf16>
    %cst_36 = arith.constant dense<0.000000e+00> : vector<64x2048xf32>
    %86 = tpu.matmul %84, %85, %cst_36 {dimension_numbers = #tpu.dot_dimension_numbers<[1], [0], [0], [1], [0, 0, 1, 1], [], []>} : vector<64x64xbf16>, vector<64x2048xbf16>, vector<64x2048xf32> -> vector<64x2048xf32>
    %c0_37 = arith.constant 0 : index
    %c0_38 = arith.constant 0 : index
    %87 = vector.load %arg11[%c0_37, %c0_38] : memref<1x2048xf32, #tpu.memory_space<vmem>>, vector<1x2048xf32>
    %88 = vector.broadcast %87 : vector<1x2048xf32> to vector<64x2048xf32>
    %89 = arith.addf %86, %88 : vector<64x2048xf32>
    %cst_39 = arith.constant 0.000000e+00 : f32
    %90 = vector.broadcast %cst_39 : f32 to vector<64x2048xf32>
    %91 = arith.maximumf %89, %90 : vector<64x2048xf32>
    %92 = arith.truncf %91 : vector<64x2048xf32> to vector<64x2048xbf16>
    %c0_40 = arith.constant 0 : index
    %c0_41 = arith.constant 0 : index
    %93 = vector.load %arg12[%c0_40, %c0_41] : memref<2048x64xbf16, #tpu.memory_space<vmem>>, vector<2048x64xbf16>
    %cst_42 = arith.constant dense<0.000000e+00> : vector<64x64xf32>
    %94 = tpu.matmul %92, %93, %cst_42 {dimension_numbers = #tpu.dot_dimension_numbers<[1], [0], [0], [1], [0, 0, 1, 1], [], []>} : vector<64x2048xbf16>, vector<2048x64xbf16>, vector<64x64xf32> -> vector<64x64xf32>
    %c0_43 = arith.constant 0 : index
    %c0_44 = arith.constant 0 : index
    %95 = vector.load %arg13[%c0_43, %c0_44] : memref<1x64xf32, #tpu.memory_space<vmem>>, vector<1x64xf32>
    %96 = vector.broadcast %95 : vector<1x64xf32> to vector<64x64xf32>
    %97 = arith.addf %94, %96 : vector<64x64xf32>
    %98 = arith.addf %83, %97 : vector<64x64xf32>
    %c0_45 = arith.constant 0 : index
    %c0_46 = arith.constant 0 : index
    %99 = vector.load %arg14[%c0_45, %c0_46] : memref<1x64xf32, #tpu.memory_space<vmem>>, vector<1x64xf32>
    %c0_47 = arith.constant 0 : index
    %c0_48 = arith.constant 0 : index
    %100 = vector.load %arg15[%c0_47, %c0_48] : memref<1x64xf32, #tpu.memory_space<vmem>>, vector<1x64xf32>
    %cst_49 = arith.constant dense<0.000000e+00> : vector<64xf32>
    %101 = vector.multi_reduction <add>, %98, %cst_49 [1] : vector<64x64xf32> to vector<64xf32>
    %102 = vector.shape_cast %101 : vector<64xf32> to vector<64x1xf32>
    %cst_50 = arith.constant 6.400000e+01 : f32
    %103 = vector.broadcast %cst_50 : f32 to vector<64x1xf32>
    %104 = arith.divf %102, %103 : vector<64x1xf32>
    %105 = vector.broadcast %104 : vector<64x1xf32> to vector<64x64xf32>
    %106 = arith.subf %98, %105 : vector<64x64xf32>
    %107 = vector.broadcast %104 : vector<64x1xf32> to vector<64x64xf32>
    %108 = arith.subf %98, %107 : vector<64x64xf32>
    %109 = arith.mulf %106, %108 : vector<64x64xf32>
    %cst_51 = arith.constant dense<0.000000e+00> : vector<64xf32>
    %110 = vector.multi_reduction <add>, %109, %cst_51 [1] : vector<64x64xf32> to vector<64xf32>
    %111 = vector.shape_cast %110 : vector<64xf32> to vector<64x1xf32>
    %cst_52 = arith.constant 6.400000e+01 : f32
    %112 = vector.broadcast %cst_52 : f32 to vector<64x1xf32>
    %113 = arith.divf %111, %112 : vector<64x1xf32>
    %114 = vector.broadcast %104 : vector<64x1xf32> to vector<64x64xf32>
    %115 = arith.subf %98, %114 : vector<64x64xf32>
    %cst_53 = arith.constant 9.99999974E-6 : f32
    %116 = vector.broadcast %cst_53 : f32 to vector<64x1xf32>
    %117 = arith.addf %113, %116 : vector<64x1xf32>
    %118 = math.rsqrt %117 : vector<64x1xf32>
    %119 = vector.broadcast %118 : vector<64x1xf32> to vector<64x64xf32>
    %120 = arith.mulf %115, %119 : vector<64x64xf32>
    %121 = vector.broadcast %99 : vector<1x64xf32> to vector<64x64xf32>
    %122 = arith.mulf %120, %121 : vector<64x64xf32>
    %123 = vector.broadcast %100 : vector<1x64xf32> to vector<64x64xf32>
    %124 = arith.addf %122, %123 : vector<64x64xf32>
    %125 = vector.shape_cast %124 : vector<64x64xf32> to vector<1x8x8x64xf32>
    %126 = vector.extract_strided_slice %125 {offsets = [0, 7, 0, 0], sizes = [1, 1, 8, 64], strides = [1, 1, 1, 1]} : vector<1x8x8x64xf32> to vector<1x1x8x64xf32>
    %127 = vector.shape_cast %126 : vector<1x1x8x64xf32> to vector<1x8x64xf32>
    %c0_54 = arith.constant 0 : index
    %c0_55 = arith.constant 0 : index
    %128 = vector.load %arg16[%c0_54, %c0_55] : memref<1x64xf32, #tpu.memory_space<vmem>>, vector<1x64xf32>
    %129 = vector.shape_cast %128 : vector<1x64xf32> to vector<1x1x64xf32>
    %130 = vector.broadcast %129 : vector<1x1x64xf32> to vector<1x8x64xf32>
    %131 = arith.mulf %127, %130 : vector<1x8x64xf32>
    %cst_56 = arith.constant dense<0.000000e+00> : vector<1x8xf32>
    %132 = vector.multi_reduction <add>, %131, %cst_56 [2] : vector<1x8x64xf32> to vector<1x8xf32>
    %c0_57 = arith.constant 0 : index
    %c0_58 = arith.constant 0 : index
    %133 = vector.load %arg17[%c0_57, %c0_58] : memref<1x1xf32, #tpu.memory_space<vmem>>, vector<1x1xf32>
    %134 = vector.broadcast %133 : vector<1x1xf32> to vector<1x8xf32>
    %135 = arith.addf %132, %134 : vector<1x8xf32>
    %c0_59 = arith.constant 0 : index
    %c0_60 = arith.constant 0 : index
    %136 = vector.load %arg20[%c0_59, %c0_60] : memref<1x8xf32, #tpu.memory_space<vmem>>, vector<1x8xf32>
    tpu.vector_store %arg20[%c0_59, %c0_60], %135 {strides = array<i32>} : memref<1x8xf32, #tpu.memory_space<vmem>>, vector<1x8xf32>,
    return
  }
  func.func @transform_0(%arg0: i32) -> (i32, i32, i32, i32) {
    %c0_i32 = arith.constant 0 : i32
    %c0_i32_0 = arith.constant 0 : i32
    %c0_i32_1 = arith.constant 0 : i32
    %c0_i32_2 = arith.constant 0 : i32
    return %arg0, %c0_i32, %c0_i32_0, %c0_i32_1 : i32, i32, i32, i32
  }
  func.func @transform_1(%arg0: i32) -> (i32, i32) {
    %c0_i32 = arith.constant 0 : i32
    %c0_i32_0 = arith.constant 0 : i32
    %c0_i32_1 = arith.constant 0 : i32
    return %c0_i32, %c0_i32_0 : i32, i32
  }
  func.func @transform_2(%arg0: i32) -> (i32, i32) {
    %c0_i32 = arith.constant 0 : i32
    %c0_i32_0 = arith.constant 0 : i32
    %c0_i32_1 = arith.constant 0 : i32
    return %c0_i32, %c0_i32_0 : i32, i32
  }
  func.func @transform_3(%arg0: i32) -> (i32, i32) {
    %c0_i32 = arith.constant 0 : i32
    %c0_i32_0 = arith.constant 0 : i32
    %c0_i32_1 = arith.constant 0 : i32
    return %c0_i32, %c0_i32_0 : i32, i32
  }
  func.func @transform_4(%arg0: i32) -> (i32, i32) {
    %c0_i32 = arith.constant 0 : i32
    %c0_i32_0 = arith.constant 0 : i32
    %c0_i32_1 = arith.constant 0 : i32
    return %c0_i32, %c0_i32_0 : i32, i32
  }
  func.func @transform_5(%arg0: i32) -> (i32, i32) {
    %c0_i32 = arith.constant 0 : i32
    %c0_i32_0 = arith.constant 0 : i32
    %c0_i32_1 = arith.constant 0 : i32
    return %c0_i32, %c0_i32_0 : i32, i32
  }
  func.func @transform_6(%arg0: i32) -> (i32, i32) {
    %c0_i32 = arith.constant 0 : i32
    %c0_i32_0 = arith.constant 0 : i32
    %c0_i32_1 = arith.constant 0 : i32
    return %c0_i32, %c0_i32_0 : i32, i32
  }
  func.func @transform_7(%arg0: i32) -> (i32, i32) {
    %c0_i32 = arith.constant 0 : i32
    %c0_i32_0 = arith.constant 0 : i32
    %c0_i32_1 = arith.constant 0 : i32
    return %c0_i32, %c0_i32_0 : i32, i32
  }
  func.func @transform_8(%arg0: i32) -> (i32, i32) {
    %c0_i32 = arith.constant 0 : i32
    %c0_i32_0 = arith.constant 0 : i32
    %c0_i32_1 = arith.constant 0 : i32
    return %c0_i32, %c0_i32_0 : i32, i32
  }
  func.func @transform_9(%arg0: i32) -> (i32, i32) {
    %c0_i32 = arith.constant 0 : i32
    %c0_i32_0 = arith.constant 0 : i32
    %c0_i32_1 = arith.constant 0 : i32
    return %c0_i32, %c0_i32_0 : i32, i32
  }
  func.func @transform_10(%arg0: i32) -> (i32, i32) {
    %c0_i32 = arith.constant 0 : i32
    %c0_i32_0 = arith.constant 0 : i32
    %c0_i32_1 = arith.constant 0 : i32
    return %c0_i32, %c0_i32_0 : i32, i32
  }
  func.func @transform_11(%arg0: i32) -> (i32, i32) {
    %c0_i32 = arith.constant 0 : i32
    %c0_i32_0 = arith.constant 0 : i32
    %c0_i32_1 = arith.constant 0 : i32
    return %c0_i32, %c0_i32_0 : i32, i32
  }
  func.func @transform_12(%arg0: i32) -> (i32, i32) {
    %c0_i32 = arith.constant 0 : i32
    %c0_i32_0 = arith.constant 0 : i32
    %c0_i32_1 = arith.constant 0 : i32
    return %c0_i32, %c0_i32_0 : i32, i32
  }
  func.func @transform_13(%arg0: i32) -> (i32, i32) {
    %c0_i32 = arith.constant 0 : i32
    %c0_i32_0 = arith.constant 0 : i32
    %c0_i32_1 = arith.constant 0 : i32
    return %c0_i32, %c0_i32_0 : i32, i32
  }
  func.func @transform_14(%arg0: i32) -> (i32, i32) {
    %c0_i32 = arith.constant 0 : i32
    %c0_i32_0 = arith.constant 0 : i32
    %c0_i32_1 = arith.constant 0 : i32
    return %c0_i32, %c0_i32_0 : i32, i32
  }
  func.func @transform_15(%arg0: i32) -> (i32, i32) {
    %c0_i32 = arith.constant 0 : i32
    %c0_i32_0 = arith.constant 0 : i32
    %c0_i32_1 = arith.constant 0 : i32
    return %c0_i32, %c0_i32_0 : i32, i32
  }
  func.func @transform_16(%arg0: i32) -> (i32, i32) {
    %c0_i32 = arith.constant 0 : i32
    %c0_i32_0 = arith.constant 0 : i32
    %c0_i32_1 = arith.constant 0 : i32
    return %c0_i32, %c0_i32_0 : i32, i32
  }
  func.func @transform_17(%arg0: i32) -> (i32, i32) {
    %c0_i32 = arith.constant 0 : i32
    %c0_i32_0 = arith.constant 0 : i32
    %c0_i32_1 = arith.constant 0 : i32
    return %c0_i32, %c0_i32_0 : i32, i32
  }
  func.func @transform_18(%arg0: i32) -> (i32, i32) {
    %c0_i32 = arith.constant 0 : i32
    %c0_i32_0 = arith.constant 0 : i32
    %c0_i32_1 = arith.constant 0 : i32
    return %c0_i32, %c0_i32_0 : i32, i32
  }
  func.func @transform_19(%arg0: i32) -> (i32, i32) {
    %c0_i32 = arith.constant 0 : i32
    %c0_i32_0 = arith.constant 0 : i32
    return %arg0, %c0_i32 : i32, i32
  }
}

</mosaic_0001>

<llo_original>
// kernel: tpu_custom_call.1
$region0: #{tpu_custom_call.1}
  #allocation0 [shape = 'u32[]', space=smem, size = 0x4, offset = 0x4, fixed_abs, tag = 'smem constant byte address 0x4 - core index']
  #allocation1 [shape = 'u32[72,128]{1,0:T(1,128)}', space=vmem, size = 0x9000, scoped, tag = 'internal scratch']
  #allocation2 [shape = 'f32[1,1]{1,0:T(1,128)S(1)}', space=vmem, size = 0x200, scoped, tag = 'scoped memory for tpu_custom_call.1']
  %s0 = inlined_call_operand.vmem [shape: f32[1,8,8,1], index: 0, kind: input, shape index: {}]
  %s1 = inlined_call_operand.vmem [shape: f32[8,64], index: 1, kind: input, shape index: {}]
  %s2 = inlined_call_operand.vmem [shape: f32[1,64], index: 2, kind: input, shape index: {}]
  %s3 = inlined_call_operand.vmem [shape: bf16[64,192], index: 3, kind: input, shape index: {}]
  %s4 = inlined_call_operand.vmem [shape: f32[1,192], index: 4, kind: input, shape index: {}]
  %s5 = inlined_call_operand.vmem [shape: bf16[64,64], index: 5, kind: input, shape index: {}]
  %s6 = inlined_call_operand.vmem [shape: f32[1,64], index: 6, kind: input, shape index: {}]
  %s7 = inlined_call_operand.vmem [shape: f32[1,64], index: 7, kind: input, shape index: {}]
  %s8 = inlined_call_operand.vmem [shape: f32[1,64], index: 8, kind: input, shape index: {}]
  %s9 = inlined_call_operand.vmem [shape: bf16[64,2048], index: 9, kind: input, shape index: {}]
  %s10 = inlined_call_operand.vmem [shape: f32[1,2048], index: 10, kind: input, shape index: {}]
  %s11 = inlined_call_operand.vmem [shape: bf16[2048,64], index: 11, kind: input, shape index: {}]
  %s12 = inlined_call_operand.vmem [shape: f32[1,64], index: 12, kind: input, shape index: {}]
  %s13 = inlined_call_operand.vmem [shape: f32[1,64], index: 13, kind: input, shape index: {}]
  %s14 = inlined_call_operand.vmem [shape: f32[1,64], index: 14, kind: input, shape index: {}]
  %s15 = inlined_call_operand.vmem [shape: f32[1,64], index: 15, kind: input, shape index: {}]
  %s16 = inlined_call_operand.<no memory space> [shape: f32[1,1], index: 16, kind: input, shape index: {}]
  %s17 = inlined_call_operand.vmem [shape: f32[64,8], index: 17, kind: input, shape index: {}]
  %s18 = inlined_call_operand.vmem [shape: f32[8,64], index: 18, kind: input, shape index: {}]
  %s19 = inlined_call_operand.hbm [shape: f32[1,8], index: 19, kind: output, shape index: {}]
  %s20 = sld [smem:[#allocation0]]
  $region86: #{tpu_custom_call.1} parent=0
    _
  %s22 = ssub.s32 1, %s20
  %s23 = scalar_select 0, %s22, %s20
  %v24 = vstv %s16
  %25 = vst [vmem:[#allocation2] sm:$0x1] %v24
  $region1: #{tpu_custom_call.1} parent=0
    #allocation3 [shape = 'u8[512]{0}', space=vmem, size = 0x400, scoped, tag = 'output window, operand 0, single buffered']
    #allocation4 [shape = 's32[1]{0}', space=sflag, size = 0x4, scoped, tag = 'scoped memory for tpu_custom_call.1']
    %26 = vsyncpa [#allocation4], 0
    // Predicated region
    $region2: #{tpu_custom_call.1} parent=1 // pred_check
      _
    $region3: #{tpu_custom_call.1} parent=1 // pred_check_branch
      %28 = sbr.rel (0) target = $region5
    $region4: #{tpu_custom_call.1} parent=1 // pred_region
      _
    $region5: #{tpu_custom_call.1} parent=1 // pred_fallthru
      _
    // Predicated region
    $region6: #{tpu_custom_call.1} parent=1 // pred_check
      _
    $region7: #{tpu_custom_call.1} parent=1 // pred_check_branch
      %30 = sbr.rel (0) target = $region9
    $region8: #{tpu_custom_call.1} parent=1 // pred_region
      _
    $region9: #{tpu_custom_call.1} parent=1 // pred_fallthru
      _
    // Predicated region
    $region10: #{tpu_custom_call.1} parent=1 // pred_check
      _
    $region11: #{tpu_custom_call.1} parent=1 // pred_check_branch
      %32 = sbr.rel (0) target = $region13
    $region12: #{tpu_custom_call.1} parent=1 // pred_region
      _
    $region13: #{tpu_custom_call.1} parent=1 // pred_fallthru
      _
    // Predicated region
    $region14: #{tpu_custom_call.1} parent=1 // pred_check
      _
    $region15: #{tpu_custom_call.1} parent=1 // pred_check_branch
      %34 = sbr.rel (0) target = $region17
    $region16: #{tpu_custom_call.1} parent=1 // pred_region
      _
    $region17: #{tpu_custom_call.1} parent=1 // pred_fallthru
      _
    // Predicated region
    $region18: #{tpu_custom_call.1} parent=1 // pred_check
      _
    $region19: #{tpu_custom_call.1} parent=1 // pred_check_branch
      %36 = sbr.rel (0) target = $region21
    $region20: #{tpu_custom_call.1} parent=1 // pred_region
      _
    $region21: #{tpu_custom_call.1} parent=1 // pred_fallthru
      _
    // Predicated region
    $region22: #{tpu_custom_call.1} parent=1 // pred_check
      _
    $region23: #{tpu_custom_call.1} parent=1 // pred_check_branch
      %38 = sbr.rel (0) target = $region25
    $region24: #{tpu_custom_call.1} parent=1 // pred_region
      _
    $region25: #{tpu_custom_call.1} parent=1 // pred_fallthru
      _
    // Predicated region
    $region26: #{tpu_custom_call.1} parent=1 // pred_check
      _
    $region27: #{tpu_custom_call.1} parent=1 // pred_check_branch
      %40 = sbr.rel (0) target = $region29
    $region28: #{tpu_custom_call.1} parent=1 // pred_region
      _
    $region29: #{tpu_custom_call.1} parent=1 // pred_fallthru
      _
    // Predicated region
    $region30: #{tpu_custom_call.1} parent=1 // pred_check
      _
    $region31: #{tpu_custom_call.1} parent=1 // pred_check_branch
      %42 = sbr.rel (0) target = $region33
    $region32: #{tpu_custom_call.1} parent=1 // pred_region
      _
    $region33: #{tpu_custom_call.1} parent=1 // pred_fallthru
      _
    // Predicated region
    $region34: #{tpu_custom_call.1} parent=1 // pred_check
      _
    $region35: #{tpu_custom_call.1} parent=1 // pred_check_branch
      %44 = sbr.rel (0) target = $region37
    $region36: #{tpu_custom_call.1} parent=1 // pred_region
      _
    $region37: #{tpu_custom_call.1} parent=1 // pred_fallthru
      _
    // Predicated region
    $region38: #{tpu_custom_call.1} parent=1 // pred_check
      _
    $region39: #{tpu_custom_call.1} parent=1 // pred_check_branch
      %46 = sbr.rel (0) target = $region41
    $region40: #{tpu_custom_call.1} parent=1 // pred_region
      _
    $region41: #{tpu_custom_call.1} parent=1 // pred_fallthru
      _
    // Predicated region
    $region42: #{tpu_custom_call.1} parent=1 // pred_check
      _
    $region43: #{tpu_custom_call.1} parent=1 // pred_check_branch
      %48 = sbr.rel (0) target = $region45
    $region44: #{tpu_custom_call.1} parent=1 // pred_region
      _
    $region45: #{tpu_custom_call.1} parent=1 // pred_fallthru
      _
    // Predicated region
    $region46: #{tpu_custom_call.1} parent=1 // pred_check
      _
    $region47: #{tpu_custom_call.1} parent=1 // pred_check_branch
      %50 = sbr.rel (0) target = $region49
    $region48: #{tpu_custom_call.1} parent=1 // pred_region
      _
    $region49: #{tpu_custom_call.1} parent=1 // pred_fallthru
      _
    // Predicated region
    $region50: #{tpu_custom_call.1} parent=1 // pred_check
      _
    $region51: #{tpu_custom_call.1} parent=1 // pred_check_branch
      %52 = sbr.rel (0) target = $region53
    $region52: #{tpu_custom_call.1} parent=1 // pred_region
      _
    $region53: #{tpu_custom_call.1} parent=1 // pred_fallthru
      _
    // Predicated region
    $region54: #{tpu_custom_call.1} parent=1 // pred_check
      _
    $region55: #{tpu_custom_call.1} parent=1 // pred_check_branch
      %54 = sbr.rel (0) target = $region57
    $region56: #{tpu_custom_call.1} parent=1 // pred_region
      _
    $region57: #{tpu_custom_call.1} parent=1 // pred_fallthru
      _
    // Predicated region
    $region58: #{tpu_custom_call.1} parent=1 // pred_check
      _
    $region59: #{tpu_custom_call.1} parent=1 // pred_check_branch
      %56 = sbr.rel (0) target = $region61
    $region60: #{tpu_custom_call.1} parent=1 // pred_region
      _
    $region61: #{tpu_custom_call.1} parent=1 // pred_fallthru
      _
    // Predicated region
    $region62: #{tpu_custom_call.1} parent=1 // pred_check
      _
    $region63: #{tpu_custom_call.1} parent=1 // pred_check_branch
      %58 = sbr.rel (0) target = $region65
    $region64: #{tpu_custom_call.1} parent=1 // pred_region
      _
    $region65: #{tpu_custom_call.1} parent=1 // pred_fallthru
      _
    // Predicated region
    $region66: #{tpu_custom_call.1} parent=1 // pred_check
      _
    $region67: #{tpu_custom_call.1} parent=1 // pred_check_branch
      %60 = sbr.rel (0) target = $region69
    $region68: #{tpu_custom_call.1} parent=1 // pred_region
      _
    $region69: #{tpu_custom_call.1} parent=1 // pred_fallthru
      _
    // Predicated region
    $region70: #{tpu_custom_call.1} parent=1 // pred_check
      _
    $region71: #{tpu_custom_call.1} parent=1 // pred_check_branch
      %62 = sbr.rel (0) target = $region73
    $region72: #{tpu_custom_call.1} parent=1 // pred_region
      _
    $region73: #{tpu_custom_call.1} parent=1 // pred_fallthru
      _
    // Predicated region
    $region74: #{tpu_custom_call.1} parent=1 // pred_check
      _
    $region75: #{tpu_custom_call.1} parent=1 // pred_check_branch
      %64 = sbr.rel (0) target = $region77
    $region76: #{tpu_custom_call.1} parent=1 // pred_region
      _
    $region77: #{tpu_custom_call.1} parent=1 // pred_fallthru
      _
    %v66 = vld [vmem:[%s0] sm:$0xff]
    %v67 = vld [vmem:[%s0 + $0x8] sm:$0xff]
    %v68 = vld [vmem:[%s0 + $0x10] sm:$0xff]
    %v69 = vld [vmem:[%s0 + $0x18] sm:$0xff]
    %v70 = vld [vmem:[%s0 + $0x20] sm:$0xff]
    %v71 = vld [vmem:[%s0 + $0x28] sm:$0xff]
    %v72 = vld [vmem:[%s0 + $0x30] sm:$0xff]
    %v73 = vld [vmem:[%s0 + $0x38] sm:$0xff]
    %v74 = vld [vmem:[%s2] sm:$0x1]
    %76 = vset.pattern.permute.xlu0 0
    %77 = vperm.xlu0 %76, %v66
    %v78 = vpop.permute.xlu0 %77
    %81 = vset.pattern.permute.xlu0 0
    %82 = vperm.xlu0 %81, %v67
    %v83 = vpop.permute.xlu0 %82
    %86 = vset.pattern.permute.xlu0 0
    %87 = vperm.xlu0 %86, %v68
    %v88 = vpop.permute.xlu0 %87
    %91 = vset.pattern.permute.xlu0 0
    %92 = vperm.xlu0 %91, %v69
    %v93 = vpop.permute.xlu0 %92
    %96 = vset.pattern.permute.xlu0 0
    %97 = vperm.xlu0 %96, %v70
    %v98 = vpop.permute.xlu0 %97
    %101 = vset.pattern.permute.xlu0 0
    %102 = vperm.xlu0 %101, %v71
    %v103 = vpop.permute.xlu0 %102
    %106 = vset.pattern.permute.xlu0 0
    %107 = vperm.xlu0 %106, %v72
    %v108 = vpop.permute.xlu0 %107
    %111 = vset.pattern.permute.xlu0 0
    %112 = vperm.xlu0 %111, %v73
    %v113 = vpop.permute.xlu0 %112
    %v116 = vperm.slane %v74, 0
    %v118 = vmul.f32 %v78, %v116
    %v119 = vmul.f32 %v83, %v116
    %v120 = vmul.f32 %v88, %v116
    %v121 = vmul.f32 %v93, %v116
    %v122 = vmul.f32 %v98, %v116
    %v123 = vmul.f32 %v103, %v116
    %v124 = vmul.f32 %v108, %v116
    %v125 = vmul.f32 %v113, %v116
    %v126 = vld [vmem:[%s1] sm:$0xff]
    %v127 = vadd.f32 %v118, %v126
    %v128 = vadd.f32 %v119, %v126
    %v129 = vadd.f32 %v120, %v126
    %v130 = vadd.f32 %v121, %v126
    %v131 = vadd.f32 %v122, %v126
    %v132 = vadd.f32 %v123, %v126
    %v133 = vadd.f32 %v124, %v126
    %v134 = vadd.f32 %v125, %v126
    %v135 = vpack.c.bf16 %v128, %v127
    %v136 = vpack.c.bf16 %v130, %v129
    %v137 = vpack.c.bf16 %v132, %v131
    %v138 = vpack.c.bf16 %v134, %v133
    %v139 = vld [vmem:[%s3] sm:$0xff]
    %v140 = vld [vmem:[%s3 + $0x8] sm:$0xff]
    %v141 = vld [vmem:[%s3 + $0x10] sm:$0xff]
    %v142 = vld [vmem:[%s3 + $0x18] sm:$0xff]
    %v143 = vld [vmem:[%s3 + $0x20] sm:$0xff]
    %v144 = vld [vmem:[%s3 + $0x28] sm:$0xff]
    %v145 = vld [vmem:[%s3 + $0x30] sm:$0xff]
    %v146 = vld [vmem:[%s3 + $0x38] sm:$0xff]
    %v147 = vld [vmem:[%s4] sm:$0x3]
    %v149 = vperm.slane %v147, 0
    %v150 = vperm.slane %v147, 1
    %v161 = vunpack.c.l.b16 %v139
    %v162 = vunpack.c.h.b16 %v139
    %v163 = vunpack.c.l.b16 %v140
    %v164 = vunpack.c.h.b16 %v140
    %v165 = vunpack.c.l.b16 %v141
    %v166 = vunpack.c.h.b16 %v141
    %v167 = vunpack.c.l.b16 %v142
    %v168 = vunpack.c.h.b16 %v142
    %v169 = vunpack.c.l.b16 %v143
    %v170 = vunpack.c.h.b16 %v143
    %v171 = vunpack.c.l.b16 %v144
    %v172 = vunpack.c.h.b16 %v144
    %v173 = vunpack.c.l.b16 %v145
    %v174 = vunpack.c.h.b16 %v145
    %v175 = vunpack.c.l.b16 %v146
    %v176 = vunpack.c.h.b16 %v146
    %v177 = vpack.c.b16 %v163, %v161
    %v178 = vpack.c.b16 %v164, %v162
    %v179 = vpack.c.b16 %v167, %v165
    %v180 = vpack.c.b16 %v168, %v166
    %v181 = vpack.c.b16 %v171, %v169
    %v182 = vpack.c.b16 %v172, %v170
    %v183 = vpack.c.b16 %v175, %v173
    %v184 = vpack.c.b16 %v176, %v174
    %vm193 = vcmask 523264
    %v195 = vsel %vm193, %v135, 0
    %v198 = vsel %vm193, %v136, 0
    %v201 = vsel %vm193, %v137, 0
    %v204 = vsel %vm193, %v138, 0
    %206 = vmatpush.bf16.msra.mxu0 0
    %207 = vmatpush.bf16.msra.mxu0 0
    %208 = vmatpush.bf16.msra.mxu0 0
    %209 = vmatpush.bf16.msra.mxu0 0
    %210 = vmatpush.bf16.msra.mxu0 %v183
    %211 = vmatpush.bf16.msra.mxu0 %v181
    %212 = vmatpush.bf16.msra.mxu0 %v179
    %213 = vmatpush.bf16.msra.mxu0 %v177
    %214 = vmatmul.bf16.gmra.mxu0 %v195
    %v215 = vpop.f32.mrf.mxu0
    %v216 = vadd.f32 %v149, %v215
    %v217 = vpop.f32.mrf.mxu0
    %v218 = vadd.f32 %v149, %v217
    %219 = vmatmul.bf16.gmra.mxu0 %v198
    %v220 = vpop.f32.mrf.mxu0
    %v221 = vadd.f32 %v149, %v220
    %v222 = vpop.f32.mrf.mxu0
    %v223 = vadd.f32 %v149, %v222
    %224 = vmatmul.bf16.gmra.mxu0 %v201
    %v225 = vpop.f32.mrf.mxu0
    %v226 = vadd.f32 %v149, %v225
    %v227 = vpop.f32.mrf.mxu0
    %v228 = vadd.f32 %v149, %v227
    %229 = vmatmul.bf16.gmra.mxu0 %v204
    %v230 = vpop.f32.mrf.mxu0
    %v231 = vadd.f32 %v149, %v230
    %v232 = vpop.f32.mrf.mxu0
    %v233 = vadd.f32 %v149, %v232
    %234 = vdwg.mxu0
    %235 = vmatpush.bf16.msra.mxu0 0
    %236 = vmatpush.bf16.msra.mxu0 0
    %237 = vmatpush.bf16.msra.mxu0 0
    %238 = vmatpush.bf16.msra.mxu0 0
    %239 = vmatpush.bf16.msra.mxu0 %v184
    %240 = vmatpush.bf16.msra.mxu0 %v182
    %241 = vmatpush.bf16.msra.mxu0 %v180
    %242 = vmatpush.bf16.msra.mxu0 %v178
    %243 = vmatmul.bf16.gmra.mxu0 %v195
    %v244 = vpop.f32.mrf.mxu0
    %v245 = vadd.f32 %v150, %v244
    %v246 = vpop.f32.mrf.mxu0
    %v247 = vadd.f32 %v150, %v246
    %248 = vmatmul.bf16.gmra.mxu0 %v198
    %v249 = vpop.f32.mrf.mxu0
    %v250 = vadd.f32 %v150, %v249
    %v251 = vpop.f32.mrf.mxu0
    %v252 = vadd.f32 %v150, %v251
    %253 = vmatmul.bf16.gmra.mxu0 %v201
    %v254 = vpop.f32.mrf.mxu0
    %v255 = vadd.f32 %v150, %v254
    %v256 = vpop.f32.mrf.mxu0
    %v257 = vadd.f32 %v150, %v256
    %258 = vmatmul.bf16.gmra.mxu0 %v204
    %v259 = vpop.f32.mrf.mxu0
    %v260 = vadd.f32 %v150, %v259
    %v261 = vpop.f32.mrf.mxu0
    %v262 = vadd.f32 %v150, %v261
    %263 = vdwg.mxu0
    %v272 = vrot.slane %v216, 1
    %v273 = vrot.slane %v216, 2
    %v274 = vrot.slane %v216, 3
    %v275 = vrot.slane %v216, 4
    %v276 = vrot.slane %v216, 5
    %v277 = vrot.slane %v216, 6
    %v278 = vrot.slane %v216, 7
    %v279 = vrot.slane %v218, 1
    %v280 = vrot.slane %v218, 2
    %v281 = vrot.slane %v218, 3
    %v282 = vrot.slane %v218, 4
    %v283 = vrot.slane %v218, 5
    %v284 = vrot.slane %v218, 6
    %v285 = vrot.slane %v218, 7
    %v286 = vrot.slane %v221, 1
    %v287 = vrot.slane %v221, 2
    %v288 = vrot.slane %v221, 3
    %v289 = vrot.slane %v221, 4
    %v290 = vrot.slane %v221, 5
    %v291 = vrot.slane %v221, 6
    %v292 = vrot.slane %v221, 7
    %v293 = vrot.slane %v223, 1
    %v294 = vrot.slane %v223, 2
    %v295 = vrot.slane %v223, 3
    %v296 = vrot.slane %v223, 4
    %v297 = vrot.slane %v223, 5
    %v298 = vrot.slane %v223, 6
    %v299 = vrot.slane %v223, 7
    %v300 = vrot.slane %v226, 1
    %v301 = vrot.slane %v226, 2
    %v302 = vrot.slane %v226, 3
    %v303 = vrot.slane %v226, 4
    %v304 = vrot.slane %v226, 5
    %v305 = vrot.slane %v226, 6
    %v306 = vrot.slane %v226, 7
    %v307 = vrot.slane %v228, 1
    %v308 = vrot.slane %v228, 2
    %v309 = vrot.slane %v228, 3
    %v310 = vrot.slane %v228, 4
    %v311 = vrot.slane %v228, 5
    %v312 = vrot.slane %v228, 6
    %v313 = vrot.slane %v228, 7
    %v314 = vrot.slane %v231, 1
    %v315 = vrot.slane %v231, 2
    %v316 = vrot.slane %v231, 3
    %v317 = vrot.slane %v231, 4
    %v318 = vrot.slane %v231, 5
    %v319 = vrot.slane %v231, 6
    %v320 = vrot.slane %v231, 7
    %v321 = vrot.slane %v233, 1
    %v322 = vrot.slane %v233, 2
    %v323 = vrot.slane %v233, 3
    %v324 = vrot.slane %v233, 4
    %v325 = vrot.slane %v233, 5
    %v326 = vrot.slane %v233, 6
    %v327 = vrot.slane %v233, 7
    %v328 = vperm.slane %v216, 0
    %v329 = vperm.slane %v272, 0
    %v330 = vperm.slane %v273, 0
    %v331 = vperm.slane %v274, 0
    %v332 = vperm.slane %v275, 0
    %v333 = vperm.slane %v276, 0
    %v334 = vperm.slane %v277, 0
    %v335 = vperm.slane %v278, 0
    %v336 = vperm.slane %v218, 0
    %v337 = vperm.slane %v279, 0
    %v338 = vperm.slane %v280, 0
    %v339 = vperm.slane %v281, 0
    %v340 = vperm.slane %v282, 0
    %v341 = vperm.slane %v283, 0
    %v342 = vperm.slane %v284, 0
    %v343 = vperm.slane %v285, 0
    %v344 = vperm.slane %v221, 0
    %v345 = vperm.slane %v286, 0
    %v346 = vperm.slane %v287, 0
    %v347 = vperm.slane %v288, 0
    %v348 = vperm.slane %v289, 0
    %v349 = vperm.slane %v290, 0
    %v350 = vperm.slane %v291, 0
    %v351 = vperm.slane %v292, 0
    %v352 = vperm.slane %v223, 0
    %v353 = vperm.slane %v293, 0
    %v354 = vperm.slane %v294, 0
    %v355 = vperm.slane %v295, 0
    %v356 = vperm.slane %v296, 0
    %v357 = vperm.slane %v297, 0
    %v358 = vperm.slane %v298, 0
    %v359 = vperm.slane %v299, 0
    %v360 = vperm.slane %v226, 0
    %v361 = vperm.slane %v300, 0
    %v362 = vperm.slane %v301, 0
    %v363 = vperm.slane %v302, 0
    %v364 = vperm.slane %v303, 0
    %v365 = vperm.slane %v304, 0
    %v366 = vperm.slane %v305, 0
    %v367 = vperm.slane %v306, 0
    %v368 = vperm.slane %v228, 0
    %v369 = vperm.slane %v307, 0
    %v370 = vperm.slane %v308, 0
    %v371 = vperm.slane %v309, 0
    %v372 = vperm.slane %v310, 0
    %v373 = vperm.slane %v311, 0
    %v374 = vperm.slane %v312, 0
    %v375 = vperm.slane %v313, 0
    %v376 = vperm.slane %v231, 0
    %v377 = vperm.slane %v314, 0
    %v378 = vperm.slane %v315, 0
    %v379 = vperm.slane %v316, 0
    %v380 = vperm.slane %v317, 0
    %v381 = vperm.slane %v318, 0
    %v382 = vperm.slane %v319, 0
    %v383 = vperm.slane %v320, 0
    %v384 = vperm.slane %v233, 0
    %v385 = vperm.slane %v321, 0
    %v386 = vperm.slane %v322, 0
    %v387 = vperm.slane %v323, 0
    %v388 = vperm.slane %v324, 0
    %v389 = vperm.slane %v325, 0
    %v390 = vperm.slane %v326, 0
    %v391 = vperm.slane %v327, 0
    %456 = vrot.lane.b32.xlu0 %v216, 64
    %v457 = vpop.permute.xlu0 %456
    %458 = vrot.lane.b32.xlu0 %v218, 64
    %v459 = vpop.permute.xlu0 %458
    %460 = vrot.lane.b32.xlu0 %v221, 64
    %v461 = vpop.permute.xlu0 %460
    %462 = vrot.lane.b32.xlu0 %v223, 64
    %v463 = vpop.permute.xlu0 %462
    %464 = vrot.lane.b32.xlu0 %v226, 64
    %v465 = vpop.permute.xlu0 %464
    %466 = vrot.lane.b32.xlu0 %v228, 64
    %v467 = vpop.permute.xlu0 %466
    %468 = vrot.lane.b32.xlu0 %v231, 64
    %v469 = vpop.permute.xlu0 %468
    %470 = vrot.lane.b32.xlu0 %v233, 64
    %v471 = vpop.permute.xlu0 %470
    %v480 = vmul.f32 %v328, %v457
    %v481 = vmul.f32 %v329, %v457
    %v482 = vmul.f32 %v330, %v457
    %v483 = vmul.f32 %v331, %v457
    %v484 = vmul.f32 %v332, %v457
    %v485 = vmul.f32 %v333, %v457
    %v486 = vmul.f32 %v334, %v457
    %v487 = vmul.f32 %v335, %v457
    %v488 = vmul.f32 %v336, %v459
    %v489 = vmul.f32 %v337, %v459
    %v490 = vmul.f32 %v338, %v459
    %v491 = vmul.f32 %v339, %v459
    %v492 = vmul.f32 %v340, %v459
    %v493 = vmul.f32 %v341, %v459
    %v494 = vmul.f32 %v342, %v459
    %v495 = vmul.f32 %v343, %v459
    %v496 = vmul.f32 %v344, %v461
    %v497 = vmul.f32 %v345, %v461
    %v498 = vmul.f32 %v346, %v461
    %v499 = vmul.f32 %v347, %v461
    %v500 = vmul.f32 %v348, %v461
    %v501 = vmul.f32 %v349, %v461
    %v502 = vmul.f32 %v350, %v461
    %v503 = vmul.f32 %v351, %v461
    %v504 = vmul.f32 %v352, %v463
    %v505 = vmul.f32 %v353, %v463
    %v506 = vmul.f32 %v354, %v463
    %v507 = vmul.f32 %v355, %v463
    %v508 = vmul.f32 %v356, %v463
    %v509 = vmul.f32 %v357, %v463
    %v510 = vmul.f32 %v358, %v463
    %v511 = vmul.f32 %v359, %v463
    %v512 = vmul.f32 %v360, %v465
    %v513 = vmul.f32 %v361, %v465
    %v514 = vmul.f32 %v362, %v465
    %v515 = vmul.f32 %v363, %v465
    %v516 = vmul.f32 %v364, %v465
    %v517 = vmul.f32 %v365, %v465
    %v518 = vmul.f32 %v366, %v465
    %v519 = vmul.f32 %v367, %v465
    %v520 = vmul.f32 %v368, %v467
    %v521 = vmul.f32 %v369, %v467
    %v522 = vmul.f32 %v370, %v467
    %v523 = vmul.f32 %v371, %v467
    %v524 = vmul.f32 %v372, %v467
    %v525 = vmul.f32 %v373, %v467
    %v526 = vmul.f32 %v374, %v467
    %v527 = vmul.f32 %v375, %v467
    %v528 = vmul.f32 %v376, %v469
    %v529 = vmul.f32 %v377, %v469
    %v530 = vmul.f32 %v378, %v469
    %v531 = vmul.f32 %v379, %v469
    %v532 = vmul.f32 %v380, %v469
    %v533 = vmul.f32 %v381, %v469
    %v534 = vmul.f32 %v382, %v469
    %v535 = vmul.f32 %v383, %v469
    %v536 = vmul.f32 %v384, %v471
    %v537 = vmul.f32 %v385, %v471
    %v538 = vmul.f32 %v386, %v471
    %v539 = vmul.f32 %v387, %v471
    %v540 = vmul.f32 %v388, %v471
    %v541 = vmul.f32 %v389, %v471
    %v542 = vmul.f32 %v390, %v471
    %v543 = vmul.f32 %v391, %v471
    %v544 = vld [vmem:[%s17] sm:$0xff]
    %v545 = vld [vmem:[%s17 + $0x8] sm:$0xff]
    %v546 = vld [vmem:[%s17 + $0x10] sm:$0xff]
    %v547 = vld [vmem:[%s17 + $0x18] sm:$0xff]
    %v548 = vld [vmem:[%s17 + $0x20] sm:$0xff]
    %v549 = vld [vmem:[%s17 + $0x28] sm:$0xff]
    %v550 = vld [vmem:[%s17 + $0x30] sm:$0xff]
    %v551 = vld [vmem:[%s17 + $0x38] sm:$0xff]
    %v553 = vsel %vm193, %v480, 0
    %v556 = vsel %vm193, %v481, 0
    %v559 = vsel %vm193, %v482, 0
    %v562 = vsel %vm193, %v483, 0
    %v565 = vsel %vm193, %v484, 0
    %v568 = vsel %vm193, %v485, 0
    %v571 = vsel %vm193, %v486, 0
    %v574 = vsel %vm193, %v487, 0
    %v577 = vsel %vm193, %v488, 0
    %v580 = vsel %vm193, %v489, 0
    %v583 = vsel %vm193, %v490, 0
    %v586 = vsel %vm193, %v491, 0
    %v589 = vsel %vm193, %v492, 0
    %v592 = vsel %vm193, %v493, 0
    %v595 = vsel %vm193, %v494, 0
    %v598 = vsel %vm193, %v495, 0
    %v601 = vsel %vm193, %v496, 0
    %v604 = vsel %vm193, %v497, 0
    %v607 = vsel %vm193, %v498, 0
    %v610 = vsel %vm193, %v499, 0
    %v613 = vsel %vm193, %v500, 0
    %v616 = vsel %vm193, %v501, 0
    %v619 = vsel %vm193, %v502, 0
    %v622 = vsel %vm193, %v503, 0
    %v625 = vsel %vm193, %v504, 0
    %v628 = vsel %vm193, %v505, 0
    %v631 = vsel %vm193, %v506, 0
    %v634 = vsel %vm193, %v507, 0
    %v637 = vsel %vm193, %v508, 0
    %v640 = vsel %vm193, %v509, 0
    %v643 = vsel %vm193, %v510, 0
    %v646 = vsel %vm193, %v511, 0
    %v649 = vsel %vm193, %v512, 0
    %v652 = vsel %vm193, %v513, 0
    %v655 = vsel %vm193, %v514, 0
    %v658 = vsel %vm193, %v515, 0
    %v661 = vsel %vm193, %v516, 0
    %v664 = vsel %vm193, %v517, 0
    %v667 = vsel %vm193, %v518, 0
    %v670 = vsel %vm193, %v519, 0
    %v673 = vsel %vm193, %v520, 0
    %v676 = vsel %vm193, %v521, 0
    %v679 = vsel %vm193, %v522, 0
    %v682 = vsel %vm193, %v523, 0
    %v685 = vsel %vm193, %v524, 0
    %v688 = vsel %vm193, %v525, 0
    %v691 = vsel %vm193, %v526, 0
    %v694 = vsel %vm193, %v527, 0
    %v697 = vsel %vm193, %v528, 0
    %v700 = vsel %vm193, %v529, 0
    %v703 = vsel %vm193, %v530, 0
    %v706 = vsel %vm193, %v531, 0
    %v709 = vsel %vm193, %v532, 0
    %v712 = vsel %vm193, %v533, 0
    %v715 = vsel %vm193, %v534, 0
    %v718 = vsel %vm193, %v535, 0
    %v721 = vsel %vm193, %v536, 0
    %v724 = vsel %vm193, %v537, 0
    %v727 = vsel %vm193, %v538, 0
    %v730 = vsel %vm193, %v539, 0
    %v733 = vsel %vm193, %v540, 0
    %v736 = vsel %vm193, %v541, 0
    %v739 = vsel %vm193, %v542, 0
    %v742 = vsel %vm193, %v543, 0
    %744 = vmatpush.msra.mxu0 0.0
    %745 = vmatpush.msra.mxu0 0.0
    %746 = vmatpush.msra.mxu0 0.0
    %747 = vmatpush.msra.mxu0 0.0
    %748 = vmatpush.msra.mxu0 0.0
    %749 = vmatpush.msra.mxu0 0.0
    %750 = vmatpush.msra.mxu0 0.0
    %751 = vmatpush.msra.mxu0 0.0
    %752 = vmatpush.msra.mxu0 %v551
    %753 = vmatpush.msra.mxu0 %v550
    %754 = vmatpush.msra.mxu0 %v549
    %755 = vmatpush.msra.mxu0 %v548
    %756 = vmatpush.msra.mxu0 %v547
    %757 = vmatpush.msra.mxu0 %v546
    %758 = vmatpush.msra.mxu0 %v545
    %759 = vmatpush.msra.mxu0 %v544
    %760 = vmatmul.f32.gmra.mxu0 %v553
    %v761 = vpop.f32.mrf.mxu0
    %v762 = vadd.f32 0.0, %v761
    %763 = vmatmul.f32.gmra.mxu0 %v556
    %v764 = vpop.f32.mrf.mxu0
    %v765 = vadd.f32 0.0, %v764
    %766 = vmatmul.f32.gmra.mxu0 %v559
    %v767 = vpop.f32.mrf.mxu0
    %v768 = vadd.f32 0.0, %v767
    %769 = vmatmul.f32.gmra.mxu0 %v562
    %v770 = vpop.f32.mrf.mxu0
    %v771 = vadd.f32 0.0, %v770
    %772 = vmatmul.f32.gmra.mxu0 %v565
    %v773 = vpop.f32.mrf.mxu0
    %v774 = vadd.f32 0.0, %v773
    %775 = vmatmul.f32.gmra.mxu0 %v568
    %v776 = vpop.f32.mrf.mxu0
    %v777 = vadd.f32 0.0, %v776
    %778 = vmatmul.f32.gmra.mxu0 %v571
    %v779 = vpop.f32.mrf.mxu0
    %v780 = vadd.f32 0.0, %v779
    %781 = vmatmul.f32.gmra.mxu0 %v574
    %v782 = vpop.f32.mrf.mxu0
    %v783 = vadd.f32 0.0, %v782
    %784 = vmatmul.f32.gmra.mxu0 %v577
    %v785 = vpop.f32.mrf.mxu0
    %v786 = vadd.f32 0.0, %v785
    %787 = vmatmul.f32.gmra.mxu0 %v580
    %v788 = vpop.f32.mrf.mxu0
    %v789 = vadd.f32 0.0, %v788
    %790 = vmatmul.f32.gmra.mxu0 %v583
    %v791 = vpop.f32.mrf.mxu0
    %v792 = vadd.f32 0.0, %v791
    %793 = vmatmul.f32.gmra.mxu0 %v586
    %v794 = vpop.f32.mrf.mxu0
    %v795 = vadd.f32 0.0, %v794
    %796 = vmatmul.f32.gmra.mxu0 %v589
    %v797 = vpop.f32.mrf.mxu0
    %v798 = vadd.f32 0.0, %v797
    %799 = vmatmul.f32.gmra.mxu0 %v592
    %v800 = vpop.f32.mrf.mxu0
    %v801 = vadd.f32 0.0, %v800
    %802 = vmatmul.f32.gmra.mxu0 %v595
    %v803 = vpop.f32.mrf.mxu0
    %v804 = vadd.f32 0.0, %v803
    %805 = vmatmul.f32.gmra.mxu0 %v598
    %v806 = vpop.f32.mrf.mxu0
    %v807 = vadd.f32 0.0, %v806
    %808 = vmatmul.f32.gmra.mxu0 %v601
    %v809 = vpop.f32.mrf.mxu0
    %v810 = vadd.f32 0.0, %v809
    %811 = vmatmul.f32.gmra.mxu0 %v604
    %v812 = vpop.f32.mrf.mxu0
    %v813 = vadd.f32 0.0, %v812
    %814 = vmatmul.f32.gmra.mxu0 %v607
    %v815 = vpop.f32.mrf.mxu0
    %v816 = vadd.f32 0.0, %v815
    %817 = vmatmul.f32.gmra.mxu0 %v610
    %v818 = vpop.f32.mrf.mxu0
    %v819 = vadd.f32 0.0, %v818
    %820 = vmatmul.f32.gmra.mxu0 %v613
    %v821 = vpop.f32.mrf.mxu0
    %v822 = vadd.f32 0.0, %v821
    %823 = vmatmul.f32.gmra.mxu0 %v616
    %v824 = vpop.f32.mrf.mxu0
    %v825 = vadd.f32 0.0, %v824
    %826 = vmatmul.f32.gmra.mxu0 %v619
    %v827 = vpop.f32.mrf.mxu0
    %v828 = vadd.f32 0.0, %v827
    %829 = vmatmul.f32.gmra.mxu0 %v622
    %v830 = vpop.f32.mrf.mxu0
    %v831 = vadd.f32 0.0, %v830
    %832 = vmatmul.f32.gmra.mxu0 %v625
    %v833 = vpop.f32.mrf.mxu0
    %v834 = vadd.f32 0.0, %v833
    %835 = vmatmul.f32.gmra.mxu0 %v628
    %v836 = vpop.f32.mrf.mxu0
    %v837 = vadd.f32 0.0, %v836
    %838 = vmatmul.f32.gmra.mxu0 %v631
    %v839 = vpop.f32.mrf.mxu0
    %v840 = vadd.f32 0.0, %v839
    %841 = vmatmul.f32.gmra.mxu0 %v634
    %v842 = vpop.f32.mrf.mxu0
    %v843 = vadd.f32 0.0, %v842
    %844 = vmatmul.f32.gmra.mxu0 %v637
    %v845 = vpop.f32.mrf.mxu0
    %v846 = vadd.f32 0.0, %v845
    %847 = vmatmul.f32.gmra.mxu0 %v640
    %v848 = vpop.f32.mrf.mxu0
    %v849 = vadd.f32 0.0, %v848
    %850 = vmatmul.f32.gmra.mxu0 %v643
    %v851 = vpop.f32.mrf.mxu0
    %v852 = vadd.f32 0.0, %v851
    %853 = vmatmul.f32.gmra.mxu0 %v646
    %v854 = vpop.f32.mrf.mxu0
    %v855 = vadd.f32 0.0, %v854
    %856 = vmatmul.f32.gmra.mxu0 %v649
    %v857 = vpop.f32.mrf.mxu0
    %v858 = vadd.f32 0.0, %v857
    %859 = vmatmul.f32.gmra.mxu0 %v652
    %v860 = vpop.f32.mrf.mxu0
    %v861 = vadd.f32 0.0, %v860
    %862 = vmatmul.f32.gmra.mxu0 %v655
    %v863 = vpop.f32.mrf.mxu0
    %v864 = vadd.f32 0.0, %v863
    %865 = vmatmul.f32.gmra.mxu0 %v658
    %v866 = vpop.f32.mrf.mxu0
    %v867 = vadd.f32 0.0, %v866
    %868 = vmatmul.f32.gmra.mxu0 %v661
    %v869 = vpop.f32.mrf.mxu0
    %v870 = vadd.f32 0.0, %v869
    %871 = vmatmul.f32.gmra.mxu0 %v664
    %v872 = vpop.f32.mrf.mxu0
    %v873 = vadd.f32 0.0, %v872
    %874 = vmatmul.f32.gmra.mxu0 %v667
    %v875 = vpop.f32.mrf.mxu0
    %v876 = vadd.f32 0.0, %v875
    %877 = vmatmul.f32.gmra.mxu0 %v670
    %v878 = vpop.f32.mrf.mxu0
    %v879 = vadd.f32 0.0, %v878
    %880 = vmatmul.f32.gmra.mxu0 %v673
    %v881 = vpop.f32.mrf.mxu0
    %v882 = vadd.f32 0.0, %v881
    %883 = vmatmul.f32.gmra.mxu0 %v676
    %v884 = vpop.f32.mrf.mxu0
    %v885 = vadd.f32 0.0, %v884
    %886 = vmatmul.f32.gmra.mxu0 %v679
    %v887 = vpop.f32.mrf.mxu0
    %v888 = vadd.f32 0.0, %v887
    %889 = vmatmul.f32.gmra.mxu0 %v682
    %v890 = vpop.f32.mrf.mxu0
    %v891 = vadd.f32 0.0, %v890
    %892 = vmatmul.f32.gmra.mxu0 %v685
    %v893 = vpop.f32.mrf.mxu0
    %v894 = vadd.f32 0.0, %v893
    %895 = vmatmul.f32.gmra.mxu0 %v688
    %v896 = vpop.f32.mrf.mxu0
    %v897 = vadd.f32 0.0, %v896
    %898 = vmatmul.f32.gmra.mxu0 %v691
    %v899 = vpop.f32.mrf.mxu0
    %v900 = vadd.f32 0.0, %v899
    %901 = vmatmul.f32.gmra.mxu0 %v694
    %v902 = vpop.f32.mrf.mxu0
    %v903 = vadd.f32 0.0, %v902
    %904 = vmatmul.f32.gmra.mxu0 %v697
    %v905 = vpop.f32.mrf.mxu0
    %v906 = vadd.f32 0.0, %v905
    %907 = vmatmul.f32.gmra.mxu0 %v700
    %v908 = vpop.f32.mrf.mxu0
    %v909 = vadd.f32 0.0, %v908
    %910 = vmatmul.f32.gmra.mxu0 %v703
    %v911 = vpop.f32.mrf.mxu0
    %v912 = vadd.f32 0.0, %v911
    %913 = vmatmul.f32.gmra.mxu0 %v706
    %v914 = vpop.f32.mrf.mxu0
    %v915 = vadd.f32 0.0, %v914
    %916 = vmatmul.f32.gmra.mxu0 %v709
    %v917 = vpop.f32.mrf.mxu0
    %v918 = vadd.f32 0.0, %v917
    %919 = vmatmul.f32.gmra.mxu0 %v712
    %v920 = vpop.f32.mrf.mxu0
    %v921 = vadd.f32 0.0, %v920
    %922 = vmatmul.f32.gmra.mxu0 %v715
    %v923 = vpop.f32.mrf.mxu0
    %v924 = vadd.f32 0.0, %v923
    %925 = vmatmul.f32.gmra.mxu0 %v718
    %v926 = vpop.f32.mrf.mxu0
    %v927 = vadd.f32 0.0, %v926
    %928 = vmatmul.f32.gmra.mxu0 %v721
    %v929 = vpop.f32.mrf.mxu0
    %v930 = vadd.f32 0.0, %v929
    %931 = vmatmul.f32.gmra.mxu0 %v724
    %v932 = vpop.f32.mrf.mxu0
    %v933 = vadd.f32 0.0, %v932
    %934 = vmatmul.f32.gmra.mxu0 %v727
    %v935 = vpop.f32.mrf.mxu0
    %v936 = vadd.f32 0.0, %v935
    %937 = vmatmul.f32.gmra.mxu0 %v730
    %v938 = vpop.f32.mrf.mxu0
    %v939 = vadd.f32 0.0, %v938
    %940 = vmatmul.f32.gmra.mxu0 %v733
    %v941 = vpop.f32.mrf.mxu0
    %v942 = vadd.f32 0.0, %v941
    %943 = vmatmul.f32.gmra.mxu0 %v736
    %v944 = vpop.f32.mrf.mxu0
    %v945 = vadd.f32 0.0, %v944
    %946 = vmatmul.f32.gmra.mxu0 %v739
    %v947 = vpop.f32.mrf.mxu0
    %v948 = vadd.f32 0.0, %v947
    %949 = vmatmul.f32.gmra.mxu0 %v742
    %v950 = vpop.f32.mrf.mxu0
    %v951 = vadd.f32 0.0, %v950
    %952 = vdwg.mxu0
    %vm953 = vcmask 64512
    %v954 = vsel %vm953, %v762, -inf
    %v955 = vrot.slane %v954, 4
    %v956 = vmax.f32 %v954, %v955
    %v957 = vrot.slane %v956, 2
    %v958 = vmax.f32 %v956, %v957
    %v959 = vrot.slane %v958, 1
    %v960 = vmax.f32 %v958, %v959
    %v961 = vsel %vm953, %v765, -inf
    %v962 = vrot.slane %v961, 4
    %v963 = vmax.f32 %v961, %v962
    %v964 = vrot.slane %v963, 2
    %v965 = vmax.f32 %v963, %v964
    %v966 = vrot.slane %v965, 1
    %v967 = vmax.f32 %v965, %v966
    %v968 = vsel %vm953, %v768, -inf
    %v969 = vrot.slane %v968, 4
    %v970 = vmax.f32 %v968, %v969
    %v971 = vrot.slane %v970, 2
    %v972 = vmax.f32 %v970, %v971
    %v973 = vrot.slane %v972, 1
    %v974 = vmax.f32 %v972, %v973
    %v975 = vsel %vm953, %v771, -inf
    %v976 = vrot.slane %v975, 4
    %v977 = vmax.f32 %v975, %v976
    %v978 = vrot.slane %v977, 2
    %v979 = vmax.f32 %v977, %v978
    %v980 = vrot.slane %v979, 1
    %v981 = vmax.f32 %v979, %v980
    %v982 = vsel %vm953, %v774, -inf
    %v983 = vrot.slane %v982, 4
    %v984 = vmax.f32 %v982, %v983
    %v985 = vrot.slane %v984, 2
    %v986 = vmax.f32 %v984, %v985
    %v987 = vrot.slane %v986, 1
    %v988 = vmax.f32 %v986, %v987
    %v989 = vsel %vm953, %v777, -inf
    %v990 = vrot.slane %v989, 4
    %v991 = vmax.f32 %v989, %v990
    %v992 = vrot.slane %v991, 2
    %v993 = vmax.f32 %v991, %v992
    %v994 = vrot.slane %v993, 1
    %v995 = vmax.f32 %v993, %v994
    %v996 = vsel %vm953, %v780, -inf
    %v997 = vrot.slane %v996, 4
    %v998 = vmax.f32 %v996, %v997
    %v999 = vrot.slane %v998, 2
    %v1000 = vmax.f32 %v998, %v999
    %v1001 = vrot.slane %v1000, 1
    %v1002 = vmax.f32 %v1000, %v1001
    %v1003 = vsel %vm953, %v783, -inf
    %v1004 = vrot.slane %v1003, 4
    %v1005 = vmax.f32 %v1003, %v1004
    %v1006 = vrot.slane %v1005, 2
    %v1007 = vmax.f32 %v1005, %v1006
    %v1008 = vrot.slane %v1007, 1
    %v1009 = vmax.f32 %v1007, %v1008
    %v1010 = vsel %vm953, %v786, -inf
    %v1011 = vrot.slane %v1010, 4
    %v1012 = vmax.f32 %v1010, %v1011
    %v1013 = vrot.slane %v1012, 2
    %v1014 = vmax.f32 %v1012, %v1013
    %v1015 = vrot.slane %v1014, 1
    %v1016 = vmax.f32 %v1014, %v1015
    %v1017 = vsel %vm953, %v789, -inf
    %v1018 = vrot.slane %v1017, 4
    %v1019 = vmax.f32 %v1017, %v1018
    %v1020 = vrot.slane %v1019, 2
    %v1021 = vmax.f32 %v1019, %v1020
    %v1022 = vrot.slane %v1021, 1
    %v1023 = vmax.f32 %v1021, %v1022
    %v1024 = vsel %vm953, %v792, -inf
    %v1025 = vrot.slane %v1024, 4
    %v1026 = vmax.f32 %v1024, %v1025
    %v1027 = vrot.slane %v1026, 2
    %v1028 = vmax.f32 %v1026, %v1027
    %v1029 = vrot.slane %v1028, 1
    %v1030 = vmax.f32 %v1028, %v1029
    %v1031 = vsel %vm953, %v795, -inf
    %v1032 = vrot.slane %v1031, 4
    %v1033 = vmax.f32 %v1031, %v1032
    %v1034 = vrot.slane %v1033, 2
    %v1035 = vmax.f32 %v1033, %v1034
    %v1036 = vrot.slane %v1035, 1
    %v1037 = vmax.f32 %v1035, %v1036
    %v1038 = vsel %vm953, %v798, -inf
    %v1039 = vrot.slane %v1038, 4
    %v1040 = vmax.f32 %v1038, %v1039
    %v1041 = vrot.slane %v1040, 2
    %v1042 = vmax.f32 %v1040, %v1041
    %v1043 = vrot.slane %v1042, 1
    %v1044 = vmax.f32 %v1042, %v1043
    %v1045 = vsel %vm953, %v801, -inf
    %v1046 = vrot.slane %v1045, 4
    %v1047 = vmax.f32 %v1045, %v1046
    %v1048 = vrot.slane %v1047, 2
    %v1049 = vmax.f32 %v1047, %v1048
    %v1050 = vrot.slane %v1049, 1
    %v1051 = vmax.f32 %v1049, %v1050
    %v1052 = vsel %vm953, %v804, -inf
    %v1053 = vrot.slane %v1052, 4
    %v1054 = vmax.f32 %v1052, %v1053
    %v1055 = vrot.slane %v1054, 2
    %v1056 = vmax.f32 %v1054, %v1055
    %v1057 = vrot.slane %v1056, 1
    %v1058 = vmax.f32 %v1056, %v1057
    %v1059 = vsel %vm953, %v807, -inf
    %v1060 = vrot.slane %v1059, 4
    %v1061 = vmax.f32 %v1059, %v1060
    %v1062 = vrot.slane %v1061, 2
    %v1063 = vmax.f32 %v1061, %v1062
    %v1064 = vrot.slane %v1063, 1
    %v1065 = vmax.f32 %v1063, %v1064
    %v1066 = vsel %vm953, %v810, -inf
    %v1067 = vrot.slane %v1066, 4
    %v1068 = vmax.f32 %v1066, %v1067
    %v1069 = vrot.slane %v1068, 2
    %v1070 = vmax.f32 %v1068, %v1069
    %v1071 = vrot.slane %v1070, 1
    %v1072 = vmax.f32 %v1070, %v1071
    %v1073 = vsel %vm953, %v813, -inf
    %v1074 = vrot.slane %v1073, 4
    %v1075 = vmax.f32 %v1073, %v1074
    %v1076 = vrot.slane %v1075, 2
    %v1077 = vmax.f32 %v1075, %v1076
    %v1078 = vrot.slane %v1077, 1
    %v1079 = vmax.f32 %v1077, %v1078
    %v1080 = vsel %vm953, %v816, -inf
    %v1081 = vrot.slane %v1080, 4
    %v1082 = vmax.f32 %v1080, %v1081
    %v1083 = vrot.slane %v1082, 2
    %v1084 = vmax.f32 %v1082, %v1083
    %v1085 = vrot.slane %v1084, 1
    %v1086 = vmax.f32 %v1084, %v1085
    %v1087 = vsel %vm953, %v819, -inf
    %v1088 = vrot.slane %v1087, 4
    %v1089 = vmax.f32 %v1087, %v1088
    %v1090 = vrot.slane %v1089, 2
    %v1091 = vmax.f32 %v1089, %v1090
    %v1092 = vrot.slane %v1091, 1
    %v1093 = vmax.f32 %v1091, %v1092
    %v1094 = vsel %vm953, %v822, -inf
    %v1095 = vrot.slane %v1094, 4
    %v1096 = vmax.f32 %v1094, %v1095
    %v1097 = vrot.slane %v1096, 2
    %v1098 = vmax.f32 %v1096, %v1097
    %v1099 = vrot.slane %v1098, 1
    %v1100 = vmax.f32 %v1098, %v1099
    %v1101 = vsel %vm953, %v825, -inf
    %v1102 = vrot.slane %v1101, 4
    %v1103 = vmax.f32 %v1101, %v1102
    %v1104 = vrot.slane %v1103, 2
    %v1105 = vmax.f32 %v1103, %v1104
    %v1106 = vrot.slane %v1105, 1
    %v1107 = vmax.f32 %v1105, %v1106
    %v1108 = vsel %vm953, %v828, -inf
    %v1109 = vrot.slane %v1108, 4
    %v1110 = vmax.f32 %v1108, %v1109
    %v1111 = vrot.slane %v1110, 2
    %v1112 = vmax.f32 %v1110, %v1111
    %v1113 = vrot.slane %v1112, 1
    %v1114 = vmax.f32 %v1112, %v1113
    %v1115 = vsel %vm953, %v831, -inf
    %v1116 = vrot.slane %v1115, 4
    %v1117 = vmax.f32 %v1115, %v1116
    %v1118 = vrot.slane %v1117, 2
    %v1119 = vmax.f32 %v1117, %v1118
    %v1120 = vrot.slane %v1119, 1
    %v1121 = vmax.f32 %v1119, %v1120
    %v1122 = vsel %vm953, %v834, -inf
    %v1123 = vrot.slane %v1122, 4
    %v1124 = vmax.f32 %v1122, %v1123
    %v1125 = vrot.slane %v1124, 2
    %v1126 = vmax.f32 %v1124, %v1125
    %v1127 = vrot.slane %v1126, 1
    %v1128 = vmax.f32 %v1126, %v1127
    %v1129 = vsel %vm953, %v837, -inf
    %v1130 = vrot.slane %v1129, 4
    %v1131 = vmax.f32 %v1129, %v1130
    %v1132 = vrot.slane %v1131, 2
    %v1133 = vmax.f32 %v1131, %v1132
    %v1134 = vrot.slane %v1133, 1
    %v1135 = vmax.f32 %v1133, %v1134
    %v1136 = vsel %vm953, %v840, -inf
    %v1137 = vrot.slane %v1136, 4
    %v1138 = vmax.f32 %v1136, %v1137
    %v1139 = vrot.slane %v1138, 2
    %v1140 = vmax.f32 %v1138, %v1139
    %v1141 = vrot.slane %v1140, 1
    %v1142 = vmax.f32 %v1140, %v1141
    %v1143 = vsel %vm953, %v843, -inf
    %v1144 = vrot.slane %v1143, 4
    %v1145 = vmax.f32 %v1143, %v1144
    %v1146 = vrot.slane %v1145, 2
    %v1147 = vmax.f32 %v1145, %v1146
    %v1148 = vrot.slane %v1147, 1
    %v1149 = vmax.f32 %v1147, %v1148
    %v1150 = vsel %vm953, %v846, -inf
    %v1151 = vrot.slane %v1150, 4
    %v1152 = vmax.f32 %v1150, %v1151
    %v1153 = vrot.slane %v1152, 2
    %v1154 = vmax.f32 %v1152, %v1153
    %v1155 = vrot.slane %v1154, 1
    %v1156 = vmax.f32 %v1154, %v1155
    %v1157 = vsel %vm953, %v849, -inf
    %v1158 = vrot.slane %v1157, 4
    %v1159 = vmax.f32 %v1157, %v1158
    %v1160 = vrot.slane %v1159, 2
    %v1161 = vmax.f32 %v1159, %v1160
    %v1162 = vrot.slane %v1161, 1
    %v1163 = vmax.f32 %v1161, %v1162
    %v1164 = vsel %vm953, %v852, -inf
    %v1165 = vrot.slane %v1164, 4
    %v1166 = vmax.f32 %v1164, %v1165
    %v1167 = vrot.slane %v1166, 2
    %v1168 = vmax.f32 %v1166, %v1167
    %v1169 = vrot.slane %v1168, 1
    %v1170 = vmax.f32 %v1168, %v1169
    %v1171 = vsel %vm953, %v855, -inf
    %v1172 = vrot.slane %v1171, 4
    %v1173 = vmax.f32 %v1171, %v1172
    %v1174 = vrot.slane %v1173, 2
    %v1175 = vmax.f32 %v1173, %v1174
    %v1176 = vrot.slane %v1175, 1
    %v1177 = vmax.f32 %v1175, %v1176
    %v1178 = vsel %vm953, %v858, -inf
    %v1179 = vrot.slane %v1178, 4
    %v1180 = vmax.f32 %v1178, %v1179
    %v1181 = vrot.slane %v1180, 2
    %v1182 = vmax.f32 %v1180, %v1181
    %v1183 = vrot.slane %v1182, 1
    %v1184 = vmax.f32 %v1182, %v1183
    %v1185 = vsel %vm953, %v861, -inf
    %v1186 = vrot.slane %v1185, 4
    %v1187 = vmax.f32 %v1185, %v1186
    %v1188 = vrot.slane %v1187, 2
    %v1189 = vmax.f32 %v1187, %v1188
    %v1190 = vrot.slane %v1189, 1
    %v1191 = vmax.f32 %v1189, %v1190
    %v1192 = vsel %vm953, %v864, -inf
    %v1193 = vrot.slane %v1192, 4
    %v1194 = vmax.f32 %v1192, %v1193
    %v1195 = vrot.slane %v1194, 2
    %v1196 = vmax.f32 %v1194, %v1195
    %v1197 = vrot.slane %v1196, 1
    %v1198 = vmax.f32 %v1196, %v1197
    %v1199 = vsel %vm953, %v867, -inf
    %v1200 = vrot.slane %v1199, 4
    %v1201 = vmax.f32 %v1199, %v1200
    %v1202 = vrot.slane %v1201, 2
    %v1203 = vmax.f32 %v1201, %v1202
    %v1204 = vrot.slane %v1203, 1
    %v1205 = vmax.f32 %v1203, %v1204
    %v1206 = vsel %vm953, %v870, -inf
    %v1207 = vrot.slane %v1206, 4
    %v1208 = vmax.f32 %v1206, %v1207
    %v1209 = vrot.slane %v1208, 2
    %v1210 = vmax.f32 %v1208, %v1209
    %v1211 = vrot.slane %v1210, 1
    %v1212 = vmax.f32 %v1210, %v1211
    %v1213 = vsel %vm953, %v873, -inf
    %v1214 = vrot.slane %v1213, 4
    %v1215 = vmax.f32 %v1213, %v1214
    %v1216 = vrot.slane %v1215, 2
    %v1217 = vmax.f32 %v1215, %v1216
    %v1218 = vrot.slane %v1217, 1
    %v1219 = vmax.f32 %v1217, %v1218
    %v1220 = vsel %vm953, %v876, -inf
    %v1221 = vrot.slane %v1220, 4
    %v1222 = vmax.f32 %v1220, %v1221
    %v1223 = vrot.slane %v1222, 2
    %v1224 = vmax.f32 %v1222, %v1223
    %v1225 = vrot.slane %v1224, 1
    %v1226 = vmax.f32 %v1224, %v1225
    %v1227 = vsel %vm953, %v879, -inf
    %v1228 = vrot.slane %v1227, 4
    %v1229 = vmax.f32 %v1227, %v1228
    %v1230 = vrot.slane %v1229, 2
    %v1231 = vmax.f32 %v1229, %v1230
    %v1232 = vrot.slane %v1231, 1
    %v1233 = vmax.f32 %v1231, %v1232
    %v1234 = vsel %vm953, %v882, -inf
    %v1235 = vrot.slane %v1234, 4
    %v1236 = vmax.f32 %v1234, %v1235
    %v1237 = vrot.slane %v1236, 2
    %v1238 = vmax.f32 %v1236, %v1237
    %v1239 = vrot.slane %v1238, 1
    %v1240 = vmax.f32 %v1238, %v1239
    %v1241 = vsel %vm953, %v885, -inf
    %v1242 = vrot.slane %v1241, 4
    %v1243 = vmax.f32 %v1241, %v1242
    %v1244 = vrot.slane %v1243, 2
    %v1245 = vmax.f32 %v1243, %v1244
    %v1246 = vrot.slane %v1245, 1
    %v1247 = vmax.f32 %v1245, %v1246
    %v1248 = vsel %vm953, %v888, -inf
    %v1249 = vrot.slane %v1248, 4
    %v1250 = vmax.f32 %v1248, %v1249
    %v1251 = vrot.slane %v1250, 2
    %v1252 = vmax.f32 %v1250, %v1251
    %v1253 = vrot.slane %v1252, 1
    %v1254 = vmax.f32 %v1252, %v1253
    %v1255 = vsel %vm953, %v891, -inf
    %v1256 = vrot.slane %v1255, 4
    %v1257 = vmax.f32 %v1255, %v1256
    %v1258 = vrot.slane %v1257, 2
    %v1259 = vmax.f32 %v1257, %v1258
    %v1260 = vrot.slane %v1259, 1
    %v1261 = vmax.f32 %v1259, %v1260
    %v1262 = vsel %vm953, %v894, -inf
    %v1263 = vrot.slane %v1262, 4
    %v1264 = vmax.f32 %v1262, %v1263
    %v1265 = vrot.slane %v1264, 2
    %v1266 = vmax.f32 %v1264, %v1265
    %v1267 = vrot.slane %v1266, 1
    %v1268 = vmax.f32 %v1266, %v1267
    %v1269 = vsel %vm953, %v897, -inf
    %v1270 = vrot.slane %v1269, 4
    %v1271 = vmax.f32 %v1269, %v1270
    %v1272 = vrot.slane %v1271, 2
    %v1273 = vmax.f32 %v1271, %v1272
    %v1274 = vrot.slane %v1273, 1
    %v1275 = vmax.f32 %v1273, %v1274
    %v1276 = vsel %vm953, %v900, -inf
    %v1277 = vrot.slane %v1276, 4
    %v1278 = vmax.f32 %v1276, %v1277
    %v1279 = vrot.slane %v1278, 2
    %v1280 = vmax.f32 %v1278, %v1279
    %v1281 = vrot.slane %v1280, 1
    %v1282 = vmax.f32 %v1280, %v1281
    %v1283 = vsel %vm953, %v903, -inf
    %v1284 = vrot.slane %v1283, 4
    %v1285 = vmax.f32 %v1283, %v1284
    %v1286 = vrot.slane %v1285, 2
    %v1287 = vmax.f32 %v1285, %v1286
    %v1288 = vrot.slane %v1287, 1
    %v1289 = vmax.f32 %v1287, %v1288
    %v1290 = vsel %vm953, %v906, -inf
    %v1291 = vrot.slane %v1290, 4
    %v1292 = vmax.f32 %v1290, %v1291
    %v1293 = vrot.slane %v1292, 2
    %v1294 = vmax.f32 %v1292, %v1293
    %v1295 = vrot.slane %v1294, 1
    %v1296 = vmax.f32 %v1294, %v1295
    %v1297 = vsel %vm953, %v909, -inf
    %v1298 = vrot.slane %v1297, 4
    %v1299 = vmax.f32 %v1297, %v1298
    %v1300 = vrot.slane %v1299, 2
    %v1301 = vmax.f32 %v1299, %v1300
    %v1302 = vrot.slane %v1301, 1
    %v1303 = vmax.f32 %v1301, %v1302
    %v1304 = vsel %vm953, %v912, -inf
    %v1305 = vrot.slane %v1304, 4
    %v1306 = vmax.f32 %v1304, %v1305
    %v1307 = vrot.slane %v1306, 2
    %v1308 = vmax.f32 %v1306, %v1307
    %v1309 = vrot.slane %v1308, 1
    %v1310 = vmax.f32 %v1308, %v1309
    %v1311 = vsel %vm953, %v915, -inf
    %v1312 = vrot.slane %v1311, 4
    %v1313 = vmax.f32 %v1311, %v1312
    %v1314 = vrot.slane %v1313, 2
    %v1315 = vmax.f32 %v1313, %v1314
    %v1316 = vrot.slane %v1315, 1
    %v1317 = vmax.f32 %v1315, %v1316
    %v1318 = vsel %vm953, %v918, -inf
    %v1319 = vrot.slane %v1318, 4
    %v1320 = vmax.f32 %v1318, %v1319
    %v1321 = vrot.slane %v1320, 2
    %v1322 = vmax.f32 %v1320, %v1321
    %v1323 = vrot.slane %v1322, 1
    %v1324 = vmax.f32 %v1322, %v1323
    %v1325 = vsel %vm953, %v921, -inf
    %v1326 = vrot.slane %v1325, 4
    %v1327 = vmax.f32 %v1325, %v1326
    %v1328 = vrot.slane %v1327, 2
    %v1329 = vmax.f32 %v1327, %v1328
    %v1330 = vrot.slane %v1329, 1
    %v1331 = vmax.f32 %v1329, %v1330
    %v1332 = vsel %vm953, %v924, -inf
    %v1333 = vrot.slane %v1332, 4
    %v1334 = vmax.f32 %v1332, %v1333
    %v1335 = vrot.slane %v1334, 2
    %v1336 = vmax.f32 %v1334, %v1335
    %v1337 = vrot.slane %v1336, 1
    %v1338 = vmax.f32 %v1336, %v1337
    %v1339 = vsel %vm953, %v927, -inf
    %v1340 = vrot.slane %v1339, 4
    %v1341 = vmax.f32 %v1339, %v1340
    %v1342 = vrot.slane %v1341, 2
    %v1343 = vmax.f32 %v1341, %v1342
    %v1344 = vrot.slane %v1343, 1
    %v1345 = vmax.f32 %v1343, %v1344
    %v1346 = vsel %vm953, %v930, -inf
    %v1347 = vrot.slane %v1346, 4
    %v1348 = vmax.f32 %v1346, %v1347
    %v1349 = vrot.slane %v1348, 2
    %v1350 = vmax.f32 %v1348, %v1349
    %v1351 = vrot.slane %v1350, 1
    %v1352 = vmax.f32 %v1350, %v1351
    %v1353 = vsel %vm953, %v933, -inf
    %v1354 = vrot.slane %v1353, 4
    %v1355 = vmax.f32 %v1353, %v1354
    %v1356 = vrot.slane %v1355, 2
    %v1357 = vmax.f32 %v1355, %v1356
    %v1358 = vrot.slane %v1357, 1
    %v1359 = vmax.f32 %v1357, %v1358
    %v1360 = vsel %vm953, %v936, -inf
    %v1361 = vrot.slane %v1360, 4
    %v1362 = vmax.f32 %v1360, %v1361
    %v1363 = vrot.slane %v1362, 2
    %v1364 = vmax.f32 %v1362, %v1363
    %v1365 = vrot.slane %v1364, 1
    %v1366 = vmax.f32 %v1364, %v1365
    %v1367 = vsel %vm953, %v939, -inf
    %v1368 = vrot.slane %v1367, 4
    %v1369 = vmax.f32 %v1367, %v1368
    %v1370 = vrot.slane %v1369, 2
    %v1371 = vmax.f32 %v1369, %v1370
    %v1372 = vrot.slane %v1371, 1
    %v1373 = vmax.f32 %v1371, %v1372
    %v1374 = vsel %vm953, %v942, -inf
    %v1375 = vrot.slane %v1374, 4
    %v1376 = vmax.f32 %v1374, %v1375
    %v1377 = vrot.slane %v1376, 2
    %v1378 = vmax.f32 %v1376, %v1377
    %v1379 = vrot.slane %v1378, 1
    %v1380 = vmax.f32 %v1378, %v1379
    %v1381 = vsel %vm953, %v945, -inf
    %v1382 = vrot.slane %v1381, 4
    %v1383 = vmax.f32 %v1381, %v1382
    %v1384 = vrot.slane %v1383, 2
    %v1385 = vmax.f32 %v1383, %v1384
    %v1386 = vrot.slane %v1385, 1
    %v1387 = vmax.f32 %v1385, %v1386
    %v1388 = vsel %vm953, %v948, -inf
    %v1389 = vrot.slane %v1388, 4
    %v1390 = vmax.f32 %v1388, %v1389
    %v1391 = vrot.slane %v1390, 2
    %v1392 = vmax.f32 %v1390, %v1391
    %v1393 = vrot.slane %v1392, 1
    %v1394 = vmax.f32 %v1392, %v1393
    %v1395 = vsel %vm953, %v951, -inf
    %v1396 = vrot.slane %v1395, 4
    %v1397 = vmax.f32 %v1395, %v1396
    %v1398 = vrot.slane %v1397, 2
    %v1399 = vmax.f32 %v1397, %v1398
    %v1400 = vrot.slane %v1399, 1
    %v1401 = vmax.f32 %v1399, %v1400
    %v1402 = vsub.f32 %v762, %v960
    %v1403 = vsub.f32 %v765, %v967
    %v1404 = vsub.f32 %v768, %v974
    %v1405 = vsub.f32 %v771, %v981
    %v1406 = vsub.f32 %v774, %v988
    %v1407 = vsub.f32 %v777, %v995
    %v1408 = vsub.f32 %v780, %v1002
    %v1409 = vsub.f32 %v783, %v1009
    %v1410 = vsub.f32 %v786, %v1016
    %v1411 = vsub.f32 %v789, %v1023
    %v1412 = vsub.f32 %v792, %v1030
    %v1413 = vsub.f32 %v795, %v1037
    %v1414 = vsub.f32 %v798, %v1044
    %v1415 = vsub.f32 %v801, %v1051
    %v1416 = vsub.f32 %v804, %v1058
    %v1417 = vsub.f32 %v807, %v1065
    %v1418 = vsub.f32 %v810, %v1072
    %v1419 = vsub.f32 %v813, %v1079
    %v1420 = vsub.f32 %v816, %v1086
    %v1421 = vsub.f32 %v819, %v1093
    %v1422 = vsub.f32 %v822, %v1100
    %v1423 = vsub.f32 %v825, %v1107
    %v1424 = vsub.f32 %v828, %v1114
    %v1425 = vsub.f32 %v831, %v1121
    %v1426 = vsub.f32 %v834, %v1128
    %v1427 = vsub.f32 %v837, %v1135
    %v1428 = vsub.f32 %v840, %v1142
    %v1429 = vsub.f32 %v843, %v1149
    %v1430 = vsub.f32 %v846, %v1156
    %v1431 = vsub.f32 %v849, %v1163
    %v1432 = vsub.f32 %v852, %v1170
    %v1433 = vsub.f32 %v855, %v1177
    %v1434 = vsub.f32 %v858, %v1184
    %v1435 = vsub.f32 %v861, %v1191
    %v1436 = vsub.f32 %v864, %v1198
    %v1437 = vsub.f32 %v867, %v1205
    %v1438 = vsub.f32 %v870, %v1212
    %v1439 = vsub.f32 %v873, %v1219
    %v1440 = vsub.f32 %v876, %v1226
    %v1441 = vsub.f32 %v879, %v1233
    %v1442 = vsub.f32 %v882, %v1240
    %v1443 = vsub.f32 %v885, %v1247
    %v1444 = vsub.f32 %v888, %v1254
    %v1445 = vsub.f32 %v891, %v1261
    %v1446 = vsub.f32 %v894, %v1268
    %v1447 = vsub.f32 %v897, %v1275
    %v1448 = vsub.f32 %v900, %v1282
    %v1449 = vsub.f32 %v903, %v1289
    %v1450 = vsub.f32 %v906, %v1296
    %v1451 = vsub.f32 %v909, %v1303
    %v1452 = vsub.f32 %v912, %v1310
    %v1453 = vsub.f32 %v915, %v1317
    %v1454 = vsub.f32 %v918, %v1324
    %v1455 = vsub.f32 %v921, %v1331
    %v1456 = vsub.f32 %v924, %v1338
    %v1457 = vsub.f32 %v927, %v1345
    %v1458 = vsub.f32 %v930, %v1352
    %v1459 = vsub.f32 %v933, %v1359
    %v1460 = vsub.f32 %v936, %v1366
    %v1461 = vsub.f32 %v939, %v1373
    %v1462 = vsub.f32 %v942, %v1380
    %v1463 = vsub.f32 %v945, %v1387
    %v1464 = vsub.f32 %v948, %v1394
    %v1465 = vsub.f32 %v951, %v1401
    %v1466 = vmul.f32 %v1402, 1.442695
    %v1467 = vpow.pop %v1466
    %v1468 = vmul.f32 %v1403, 1.442695
    %v1469 = vpow.pop %v1468
    %v1470 = vmul.f32 %v1404, 1.442695
    %v1471 = vpow.pop %v1470
    %v1472 = vmul.f32 %v1405, 1.442695
    %v1473 = vpow.pop %v1472
    %v1474 = vmul.f32 %v1406, 1.442695
    %v1475 = vpow.pop %v1474
    %v1476 = vmul.f32 %v1407, 1.442695
    %v1477 = vpow.pop %v1476
    %v1478 = vmul.f32 %v1408, 1.442695
    %v1479 = vpow.pop %v1478
    %v1480 = vmul.f32 %v1409, 1.442695
    %v1481 = vpow.pop %v1480
    %v1482 = vmul.f32 %v1410, 1.442695
    %v1483 = vpow.pop %v1482
    %v1484 = vmul.f32 %v1411, 1.442695
    %v1485 = vpow.pop %v1484
    %v1486 = vmul.f32 %v1412, 1.442695
    %v1487 = vpow.pop %v1486
    %v1488 = vmul.f32 %v1413, 1.442695
    %v1489 = vpow.pop %v1488
    %v1490 = vmul.f32 %v1414, 1.442695
    %v1491 = vpow.pop %v1490
    %v1492 = vmul.f32 %v1415, 1.442695
    %v1493 = vpow.pop %v1492
    %v1494 = vmul.f32 %v1416, 1.442695
    %v1495 = vpow.pop %v1494
    %v1496 = vmul.f32 %v1417, 1.442695
    %v1497 = vpow.pop %v1496
    %v1498 = vmul.f32 %v1418, 1.442695
    %v1499 = vpow.pop %v1498
    %v1500 = vmul.f32 %v1419, 1.442695
    %v1501 = vpow.pop %v1500
    %v1502 = vmul.f32 %v1420, 1.442695
    %v1503 = vpow.pop %v1502
    %v1504 = vmul.f32 %v1421, 1.442695
    %v1505 = vpow.pop %v1504
    %v1506 = vmul.f32 %v1422, 1.442695
    %v1507 = vpow.pop %v1506
    %v1508 = vmul.f32 %v1423, 1.442695
    %v1509 = vpow.pop %v1508
    %v1510 = vmul.f32 %v1424, 1.442695
    %v1511 = vpow.pop %v1510
    %v1512 = vmul.f32 %v1425, 1.442695
    %v1513 = vpow.pop %v1512
    %v1514 = vmul.f32 %v1426, 1.442695
    %v1515 = vpow.pop %v1514
    %v1516 = vmul.f32 %v1427, 1.442695
    %v1517 = vpow.pop %v1516
    %v1518 = vmul.f32 %v1428, 1.442695
    %v1519 = vpow.pop %v1518
    %v1520 = vmul.f32 %v1429, 1.442695
    %v1521 = vpow.pop %v1520
    %v1522 = vmul.f32 %v1430, 1.442695
    %v1523 = vpow.pop %v1522
    %v1524 = vmul.f32 %v1431, 1.442695
    %v1525 = vpow.pop %v1524
    %v1526 = vmul.f32 %v1432, 1.442695
    %v1527 = vpow.pop %v1526
    %v1528 = vmul.f32 %v1433, 1.442695
    %v1529 = vpow.pop %v1528
    %v1530 = vmul.f32 %v1434, 1.442695
    %v1531 = vpow.pop %v1530
    %v1532 = vmul.f32 %v1435, 1.442695
    %v1533 = vpow.pop %v1532
    %v1534 = vmul.f32 %v1436, 1.442695
    %v1535 = vpow.pop %v1534
    %v1536 = vmul.f32 %v1437, 1.442695
    %v1537 = vpow.pop %v1536
    %v1538 = vmul.f32 %v1438, 1.442695
    %v1539 = vpow.pop %v1538
    %v1540 = vmul.f32 %v1439, 1.442695
    %v1541 = vpow.pop %v1540
    %v1542 = vmul.f32 %v1440, 1.442695
    %v1543 = vpow.pop %v1542
    %v1544 = vmul.f32 %v1441, 1.442695
    %v1545 = vpow.pop %v1544
    %v1546 = vmul.f32 %v1442, 1.442695
    %v1547 = vpow.pop %v1546
    %v1548 = vmul.f32 %v1443, 1.442695
    %v1549 = vpow.pop %v1548
    %v1550 = vmul.f32 %v1444, 1.442695
    %v1551 = vpow.pop %v1550
    %v1552 = vmul.f32 %v1445, 1.442695
    %v1553 = vpow.pop %v1552
    %v1554 = vmul.f32 %v1446, 1.442695
    %v1555 = vpow.pop %v1554
    %v1556 = vmul.f32 %v1447, 1.442695
    %v1557 = vpow.pop %v1556
    %v1558 = vmul.f32 %v1448, 1.442695
    %v1559 = vpow.pop %v1558
    %v1560 = vmul.f32 %v1449, 1.442695
    %v1561 = vpow.pop %v1560
    %v1562 = vmul.f32 %v1450, 1.442695
    %v1563 = vpow.pop %v1562
    %v1564 = vmul.f32 %v1451, 1.442695
    %v1565 = vpow.pop %v1564
    %v1566 = vmul.f32 %v1452, 1.442695
    %v1567 = vpow.pop %v1566
    %v1568 = vmul.f32 %v1453, 1.442695
    %v1569 = vpow.pop %v1568
    %v1570 = vmul.f32 %v1454, 1.442695
    %v1571 = vpow.pop %v1570
    %v1572 = vmul.f32 %v1455, 1.442695
    %v1573 = vpow.pop %v1572
    %v1574 = vmul.f32 %v1456, 1.442695
    %v1575 = vpow.pop %v1574
    %v1576 = vmul.f32 %v1457, 1.442695
    %v1577 = vpow.pop %v1576
    %v1578 = vmul.f32 %v1458, 1.442695
    %v1579 = vpow.pop %v1578
    %v1580 = vmul.f32 %v1459, 1.442695
    %v1581 = vpow.pop %v1580
    %v1582 = vmul.f32 %v1460, 1.442695
    %v1583 = vpow.pop %v1582
    %v1584 = vmul.f32 %v1461, 1.442695
    %v1585 = vpow.pop %v1584
    %v1586 = vmul.f32 %v1462, 1.442695
    %v1587 = vpow.pop %v1586
    %v1588 = vmul.f32 %v1463, 1.442695
    %v1589 = vpow.pop %v1588
    %v1590 = vmul.f32 %v1464, 1.442695
    %v1591 = vpow.pop %v1590
    %v1592 = vmul.f32 %v1465, 1.442695
    %v1593 = vpow.pop %v1592
    %v1594 = vsel %vm953, %v1467, 0.0
    %v1595 = vrot.slane %v1594, 4
    %v1596 = vadd.f32 %v1594, %v1595
    %v1597 = vrot.slane %v1596, 2
    %v1598 = vadd.f32 %v1596, %v1597
    %v1599 = vrot.slane %v1598, 1
    %v1600 = vadd.f32 %v1598, %v1599
    %v1601 = vsel %vm953, %v1469, 0.0
    %v1602 = vrot.slane %v1601, 4
    %v1603 = vadd.f32 %v1601, %v1602
    %v1604 = vrot.slane %v1603, 2
    %v1605 = vadd.f32 %v1603, %v1604
    %v1606 = vrot.slane %v1605, 1
    %v1607 = vadd.f32 %v1605, %v1606
    %v1608 = vsel %vm953, %v1471, 0.0
    %v1609 = vrot.slane %v1608, 4
    %v1610 = vadd.f32 %v1608, %v1609
    %v1611 = vrot.slane %v1610, 2
    %v1612 = vadd.f32 %v1610, %v1611
    %v1613 = vrot.slane %v1612, 1
    %v1614 = vadd.f32 %v1612, %v1613
    %v1615 = vsel %vm953, %v1473, 0.0
    %v1616 = vrot.slane %v1615, 4
    %v1617 = vadd.f32 %v1615, %v1616
    %v1618 = vrot.slane %v1617, 2
    %v1619 = vadd.f32 %v1617, %v1618
    %v1620 = vrot.slane %v1619, 1
    %v1621 = vadd.f32 %v1619, %v1620
    %v1622 = vsel %vm953, %v1475, 0.0
    %v1623 = vrot.slane %v1622, 4
    %v1624 = vadd.f32 %v1622, %v1623
    %v1625 = vrot.slane %v1624, 2
    %v1626 = vadd.f32 %v1624, %v1625
    %v1627 = vrot.slane %v1626, 1
    %v1628 = vadd.f32 %v1626, %v1627
    %v1629 = vsel %vm953, %v1477, 0.0
    %v1630 = vrot.slane %v1629, 4
    %v1631 = vadd.f32 %v1629, %v1630
    %v1632 = vrot.slane %v1631, 2
    %v1633 = vadd.f32 %v1631, %v1632
    %v1634 = vrot.slane %v1633, 1
    %v1635 = vadd.f32 %v1633, %v1634
    %v1636 = vsel %vm953, %v1479, 0.0
    %v1637 = vrot.slane %v1636, 4
    %v1638 = vadd.f32 %v1636, %v1637
    %v1639 = vrot.slane %v1638, 2
    %v1640 = vadd.f32 %v1638, %v1639
    %v1641 = vrot.slane %v1640, 1
    %v1642 = vadd.f32 %v1640, %v1641
    %v1643 = vsel %vm953, %v1481, 0.0
    %v1644 = vrot.slane %v1643, 4
    %v1645 = vadd.f32 %v1643, %v1644
    %v1646 = vrot.slane %v1645, 2
    %v1647 = vadd.f32 %v1645, %v1646
    %v1648 = vrot.slane %v1647, 1
    %v1649 = vadd.f32 %v1647, %v1648
    %v1650 = vsel %vm953, %v1483, 0.0
    %v1651 = vrot.slane %v1650, 4
    %v1652 = vadd.f32 %v1650, %v1651
    %v1653 = vrot.slane %v1652, 2
    %v1654 = vadd.f32 %v1652, %v1653
    %v1655 = vrot.slane %v1654, 1
    %v1656 = vadd.f32 %v1654, %v1655
    %v1657 = vsel %vm953, %v1485, 0.0
    %v1658 = vrot.slane %v1657, 4
    %v1659 = vadd.f32 %v1657, %v1658
    %v1660 = vrot.slane %v1659, 2
    %v1661 = vadd.f32 %v1659, %v1660
    %v1662 = vrot.slane %v1661, 1
    %v1663 = vadd.f32 %v1661, %v1662
    %v1664 = vsel %vm953, %v1487, 0.0
    %v1665 = vrot.slane %v1664, 4
    %v1666 = vadd.f32 %v1664, %v1665
    %v1667 = vrot.slane %v1666, 2
    %v1668 = vadd.f32 %v1666, %v1667
    %v1669 = vrot.slane %v1668, 1
    %v1670 = vadd.f32 %v1668, %v1669
    %v1671 = vsel %vm953, %v1489, 0.0
    %v1672 = vrot.slane %v1671, 4
    %v1673 = vadd.f32 %v1671, %v1672
    %v1674 = vrot.slane %v1673, 2
    %v1675 = vadd.f32 %v1673, %v1674
    %v1676 = vrot.slane %v1675, 1
    %v1677 = vadd.f32 %v1675, %v1676
    %v1678 = vsel %vm953, %v1491, 0.0
    %v1679 = vrot.slane %v1678, 4
    %v1680 = vadd.f32 %v1678, %v1679
    %v1681 = vrot.slane %v1680, 2
    %v1682 = vadd.f32 %v1680, %v1681
    %v1683 = vrot.slane %v1682, 1
    %v1684 = vadd.f32 %v1682, %v1683
    %v1685 = vsel %vm953, %v1493, 0.0
    %v1686 = vrot.slane %v1685, 4
    %v1687 = vadd.f32 %v1685, %v1686
    %v1688 = vrot.slane %v1687, 2
    %v1689 = vadd.f32 %v1687, %v1688
    %v1690 = vrot.slane %v1689, 1
    %v1691 = vadd.f32 %v1689, %v1690
    %v1692 = vsel %vm953, %v1495, 0.0
    %v1693 = vrot.slane %v1692, 4
    %v1694 = vadd.f32 %v1692, %v1693
    %v1695 = vrot.slane %v1694, 2
    %v1696 = vadd.f32 %v1694, %v1695
    %v1697 = vrot.slane %v1696, 1
    %v1698 = vadd.f32 %v1696, %v1697
    %v1699 = vsel %vm953, %v1497, 0.0
    %v1700 = vrot.slane %v1699, 4
    %v1701 = vadd.f32 %v1699, %v1700
    %v1702 = vrot.slane %v1701, 2
    %v1703 = vadd.f32 %v1701, %v1702
    %v1704 = vrot.slane %v1703, 1
    %v1705 = vadd.f32 %v1703, %v1704
    %v1706 = vsel %vm953, %v1499, 0.0
    %v1707 = vrot.slane %v1706, 4
    %v1708 = vadd.f32 %v1706, %v1707
    %v1709 = vrot.slane %v1708, 2
    %v1710 = vadd.f32 %v1708, %v1709
    %v1711 = vrot.slane %v1710, 1
    %v1712 = vadd.f32 %v1710, %v1711
    %v1713 = vsel %vm953, %v1501, 0.0
    %v1714 = vrot.slane %v1713, 4
    %v1715 = vadd.f32 %v1713, %v1714
    %v1716 = vrot.slane %v1715, 2
    %v1717 = vadd.f32 %v1715, %v1716
    %v1718 = vrot.slane %v1717, 1
    %v1719 = vadd.f32 %v1717, %v1718
    %v1720 = vsel %vm953, %v1503, 0.0
    %v1721 = vrot.slane %v1720, 4
    %v1722 = vadd.f32 %v1720, %v1721
    %v1723 = vrot.slane %v1722, 2
    %v1724 = vadd.f32 %v1722, %v1723
    %v1725 = vrot.slane %v1724, 1
    %v1726 = vadd.f32 %v1724, %v1725
    %v1727 = vsel %vm953, %v1505, 0.0
    %v1728 = vrot.slane %v1727, 4
    %v1729 = vadd.f32 %v1727, %v1728
    %v1730 = vrot.slane %v1729, 2
    %v1731 = vadd.f32 %v1729, %v1730
    %v1732 = vrot.slane %v1731, 1
    %v1733 = vadd.f32 %v1731, %v1732
    %v1734 = vsel %vm953, %v1507, 0.0
    %v1735 = vrot.slane %v1734, 4
    %v1736 = vadd.f32 %v1734, %v1735
    %v1737 = vrot.slane %v1736, 2
    %v1738 = vadd.f32 %v1736, %v1737
    %v1739 = vrot.slane %v1738, 1
    %v1740 = vadd.f32 %v1738, %v1739
    %v1741 = vsel %vm953, %v1509, 0.0
    %v1742 = vrot.slane %v1741, 4
    %v1743 = vadd.f32 %v1741, %v1742
    %v1744 = vrot.slane %v1743, 2
    %v1745 = vadd.f32 %v1743, %v1744
    %v1746 = vrot.slane %v1745, 1
    %v1747 = vadd.f32 %v1745, %v1746
    %v1748 = vsel %vm953, %v1511, 0.0
    %v1749 = vrot.slane %v1748, 4
    %v1750 = vadd.f32 %v1748, %v1749
    %v1751 = vrot.slane %v1750, 2
    %v1752 = vadd.f32 %v1750, %v1751
    %v1753 = vrot.slane %v1752, 1
    %v1754 = vadd.f32 %v1752, %v1753
    %v1755 = vsel %vm953, %v1513, 0.0
    %v1756 = vrot.slane %v1755, 4
    %v1757 = vadd.f32 %v1755, %v1756
    %v1758 = vrot.slane %v1757, 2
    %v1759 = vadd.f32 %v1757, %v1758
    %v1760 = vrot.slane %v1759, 1
    %v1761 = vadd.f32 %v1759, %v1760
    %v1762 = vsel %vm953, %v1515, 0.0
    %v1763 = vrot.slane %v1762, 4
    %v1764 = vadd.f32 %v1762, %v1763
    %v1765 = vrot.slane %v1764, 2
    %v1766 = vadd.f32 %v1764, %v1765
    %v1767 = vrot.slane %v1766, 1
    %v1768 = vadd.f32 %v1766, %v1767
    %v1769 = vsel %vm953, %v1517, 0.0
    %v1770 = vrot.slane %v1769, 4
    %v1771 = vadd.f32 %v1769, %v1770
    %v1772 = vrot.slane %v1771, 2
    %v1773 = vadd.f32 %v1771, %v1772
    %v1774 = vrot.slane %v1773, 1
    %v1775 = vadd.f32 %v1773, %v1774
    %v1776 = vsel %vm953, %v1519, 0.0
    %v1777 = vrot.slane %v1776, 4
    %v1778 = vadd.f32 %v1776, %v1777
    %v1779 = vrot.slane %v1778, 2
    %v1780 = vadd.f32 %v1778, %v1779
    %v1781 = vrot.slane %v1780, 1
    %v1782 = vadd.f32 %v1780, %v1781
    %v1783 = vsel %vm953, %v1521, 0.0
    %v1784 = vrot.slane %v1783, 4
    %v1785 = vadd.f32 %v1783, %v1784
    %v1786 = vrot.slane %v1785, 2
    %v1787 = vadd.f32 %v1785, %v1786
    %v1788 = vrot.slane %v1787, 1
    %v1789 = vadd.f32 %v1787, %v1788
    %v1790 = vsel %vm953, %v1523, 0.0
    %v1791 = vrot.slane %v1790, 4
    %v1792 = vadd.f32 %v1790, %v1791
    %v1793 = vrot.slane %v1792, 2
    %v1794 = vadd.f32 %v1792, %v1793
    %v1795 = vrot.slane %v1794, 1
    %v1796 = vadd.f32 %v1794, %v1795
    %v1797 = vsel %vm953, %v1525, 0.0
    %v1798 = vrot.slane %v1797, 4
    %v1799 = vadd.f32 %v1797, %v1798
    %v1800 = vrot.slane %v1799, 2
    %v1801 = vadd.f32 %v1799, %v1800
    %v1802 = vrot.slane %v1801, 1
    %v1803 = vadd.f32 %v1801, %v1802
    %v1804 = vsel %vm953, %v1527, 0.0
    %v1805 = vrot.slane %v1804, 4
    %v1806 = vadd.f32 %v1804, %v1805
    %v1807 = vrot.slane %v1806, 2
    %v1808 = vadd.f32 %v1806, %v1807
    %v1809 = vrot.slane %v1808, 1
    %v1810 = vadd.f32 %v1808, %v1809
    %v1811 = vsel %vm953, %v1529, 0.0
    %v1812 = vrot.slane %v1811, 4
    %v1813 = vadd.f32 %v1811, %v1812
    %v1814 = vrot.slane %v1813, 2
    %v1815 = vadd.f32 %v1813, %v1814
    %v1816 = vrot.slane %v1815, 1
    %v1817 = vadd.f32 %v1815, %v1816
    %v1818 = vsel %vm953, %v1531, 0.0
    %v1819 = vrot.slane %v1818, 4
    %v1820 = vadd.f32 %v1818, %v1819
    %v1821 = vrot.slane %v1820, 2
    %v1822 = vadd.f32 %v1820, %v1821
    %v1823 = vrot.slane %v1822, 1
    %v1824 = vadd.f32 %v1822, %v1823
    %v1825 = vsel %vm953, %v1533, 0.0
    %v1826 = vrot.slane %v1825, 4
    %v1827 = vadd.f32 %v1825, %v1826
    %v1828 = vrot.slane %v1827, 2
    %v1829 = vadd.f32 %v1827, %v1828
    %v1830 = vrot.slane %v1829, 1
    %v1831 = vadd.f32 %v1829, %v1830
    %v1832 = vsel %vm953, %v1535, 0.0
    %v1833 = vrot.slane %v1832, 4
    %v1834 = vadd.f32 %v1832, %v1833
    %v1835 = vrot.slane %v1834, 2
    %v1836 = vadd.f32 %v1834, %v1835
    %v1837 = vrot.slane %v1836, 1
    %v1838 = vadd.f32 %v1836, %v1837
    %v1839 = vsel %vm953, %v1537, 0.0
    %v1840 = vrot.slane %v1839, 4
    %v1841 = vadd.f32 %v1839, %v1840
    %v1842 = vrot.slane %v1841, 2
    %v1843 = vadd.f32 %v1841, %v1842
    %v1844 = vrot.slane %v1843, 1
    %v1845 = vadd.f32 %v1843, %v1844
    %v1846 = vsel %vm953, %v1539, 0.0
    %v1847 = vrot.slane %v1846, 4
    %v1848 = vadd.f32 %v1846, %v1847
    %v1849 = vrot.slane %v1848, 2
    %v1850 = vadd.f32 %v1848, %v1849
    %v1851 = vrot.slane %v1850, 1
    %v1852 = vadd.f32 %v1850, %v1851
    %v1853 = vsel %vm953, %v1541, 0.0
    %v1854 = vrot.slane %v1853, 4
    %v1855 = vadd.f32 %v1853, %v1854
    %v1856 = vrot.slane %v1855, 2
    %v1857 = vadd.f32 %v1855, %v1856
    %v1858 = vrot.slane %v1857, 1
    %v1859 = vadd.f32 %v1857, %v1858
    %v1860 = vsel %vm953, %v1543, 0.0
    %v1861 = vrot.slane %v1860, 4
    %v1862 = vadd.f32 %v1860, %v1861
    %v1863 = vrot.slane %v1862, 2
    %v1864 = vadd.f32 %v1862, %v1863
    %v1865 = vrot.slane %v1864, 1
    %v1866 = vadd.f32 %v1864, %v1865
    %v1867 = vsel %vm953, %v1545, 0.0
    %v1868 = vrot.slane %v1867, 4
    %v1869 = vadd.f32 %v1867, %v1868
    %v1870 = vrot.slane %v1869, 2
    %v1871 = vadd.f32 %v1869, %v1870
    %v1872 = vrot.slane %v1871, 1
    %v1873 = vadd.f32 %v1871, %v1872
    %v1874 = vsel %vm953, %v1547, 0.0
    %v1875 = vrot.slane %v1874, 4
    %v1876 = vadd.f32 %v1874, %v1875
    %v1877 = vrot.slane %v1876, 2
    %v1878 = vadd.f32 %v1876, %v1877
    %v1879 = vrot.slane %v1878, 1
    %v1880 = vadd.f32 %v1878, %v1879
    %v1881 = vsel %vm953, %v1549, 0.0
    %v1882 = vrot.slane %v1881, 4
    %v1883 = vadd.f32 %v1881, %v1882
    %v1884 = vrot.slane %v1883, 2
    %v1885 = vadd.f32 %v1883, %v1884
    %v1886 = vrot.slane %v1885, 1
    %v1887 = vadd.f32 %v1885, %v1886
    %v1888 = vsel %vm953, %v1551, 0.0
    %v1889 = vrot.slane %v1888, 4
    %v1890 = vadd.f32 %v1888, %v1889
    %v1891 = vrot.slane %v1890, 2
    %v1892 = vadd.f32 %v1890, %v1891
    %v1893 = vrot.slane %v1892, 1
    %v1894 = vadd.f32 %v1892, %v1893
    %v1895 = vsel %vm953, %v1553, 0.0
    %v1896 = vrot.slane %v1895, 4
    %v1897 = vadd.f32 %v1895, %v1896
    %v1898 = vrot.slane %v1897, 2
    %v1899 = vadd.f32 %v1897, %v1898
    %v1900 = vrot.slane %v1899, 1
    %v1901 = vadd.f32 %v1899, %v1900
    %v1902 = vsel %vm953, %v1555, 0.0
    %v1903 = vrot.slane %v1902, 4
    %v1904 = vadd.f32 %v1902, %v1903
    %v1905 = vrot.slane %v1904, 2
    %v1906 = vadd.f32 %v1904, %v1905
    %v1907 = vrot.slane %v1906, 1
    %v1908 = vadd.f32 %v1906, %v1907
    %v1909 = vsel %vm953, %v1557, 0.0
    %v1910 = vrot.slane %v1909, 4
    %v1911 = vadd.f32 %v1909, %v1910
    %v1912 = vrot.slane %v1911, 2
    %v1913 = vadd.f32 %v1911, %v1912
    %v1914 = vrot.slane %v1913, 1
    %v1915 = vadd.f32 %v1913, %v1914
    %v1916 = vsel %vm953, %v1559, 0.0
    %v1917 = vrot.slane %v1916, 4
    %v1918 = vadd.f32 %v1916, %v1917
    %v1919 = vrot.slane %v1918, 2
    %v1920 = vadd.f32 %v1918, %v1919
    %v1921 = vrot.slane %v1920, 1
    %v1922 = vadd.f32 %v1920, %v1921
    %v1923 = vsel %vm953, %v1561, 0.0
    %v1924 = vrot.slane %v1923, 4
    %v1925 = vadd.f32 %v1923, %v1924
    %v1926 = vrot.slane %v1925, 2
    %v1927 = vadd.f32 %v1925, %v1926
    %v1928 = vrot.slane %v1927, 1
    %v1929 = vadd.f32 %v1927, %v1928
    %v1930 = vsel %vm953, %v1563, 0.0
    %v1931 = vrot.slane %v1930, 4
    %v1932 = vadd.f32 %v1930, %v1931
    %v1933 = vrot.slane %v1932, 2
    %v1934 = vadd.f32 %v1932, %v1933
    %v1935 = vrot.slane %v1934, 1
    %v1936 = vadd.f32 %v1934, %v1935
    %v1937 = vsel %vm953, %v1565, 0.0
    %v1938 = vrot.slane %v1937, 4
    %v1939 = vadd.f32 %v1937, %v1938
    %v1940 = vrot.slane %v1939, 2
    %v1941 = vadd.f32 %v1939, %v1940
    %v1942 = vrot.slane %v1941, 1
    %v1943 = vadd.f32 %v1941, %v1942
    %v1944 = vsel %vm953, %v1567, 0.0
    %v1945 = vrot.slane %v1944, 4
    %v1946 = vadd.f32 %v1944, %v1945
    %v1947 = vrot.slane %v1946, 2
    %v1948 = vadd.f32 %v1946, %v1947
    %v1949 = vrot.slane %v1948, 1
    %v1950 = vadd.f32 %v1948, %v1949
    %v1951 = vsel %vm953, %v1569, 0.0
    %v1952 = vrot.slane %v1951, 4
    %v1953 = vadd.f32 %v1951, %v1952
    %v1954 = vrot.slane %v1953, 2
    %v1955 = vadd.f32 %v1953, %v1954
    %v1956 = vrot.slane %v1955, 1
    %v1957 = vadd.f32 %v1955, %v1956
    %v1958 = vsel %vm953, %v1571, 0.0
    %v1959 = vrot.slane %v1958, 4
    %v1960 = vadd.f32 %v1958, %v1959
    %v1961 = vrot.slane %v1960, 2
    %v1962 = vadd.f32 %v1960, %v1961
    %v1963 = vrot.slane %v1962, 1
    %v1964 = vadd.f32 %v1962, %v1963
    %v1965 = vsel %vm953, %v1573, 0.0
    %v1966 = vrot.slane %v1965, 4
    %v1967 = vadd.f32 %v1965, %v1966
    %v1968 = vrot.slane %v1967, 2
    %v1969 = vadd.f32 %v1967, %v1968
    %v1970 = vrot.slane %v1969, 1
    %v1971 = vadd.f32 %v1969, %v1970
    %v1972 = vsel %vm953, %v1575, 0.0
    %v1973 = vrot.slane %v1972, 4
    %v1974 = vadd.f32 %v1972, %v1973
    %v1975 = vrot.slane %v1974, 2
    %v1976 = vadd.f32 %v1974, %v1975
    %v1977 = vrot.slane %v1976, 1
    %v1978 = vadd.f32 %v1976, %v1977
    %v1979 = vsel %vm953, %v1577, 0.0
    %v1980 = vrot.slane %v1979, 4
    %v1981 = vadd.f32 %v1979, %v1980
    %v1982 = vrot.slane %v1981, 2
    %v1983 = vadd.f32 %v1981, %v1982
    %v1984 = vrot.slane %v1983, 1
    %v1985 = vadd.f32 %v1983, %v1984
    %v1986 = vsel %vm953, %v1579, 0.0
    %v1987 = vrot.slane %v1986, 4
    %v1988 = vadd.f32 %v1986, %v1987
    %v1989 = vrot.slane %v1988, 2
    %v1990 = vadd.f32 %v1988, %v1989
    %v1991 = vrot.slane %v1990, 1
    %v1992 = vadd.f32 %v1990, %v1991
    %v1993 = vsel %vm953, %v1581, 0.0
    %v1994 = vrot.slane %v1993, 4
    %v1995 = vadd.f32 %v1993, %v1994
    %v1996 = vrot.slane %v1995, 2
    %v1997 = vadd.f32 %v1995, %v1996
    %v1998 = vrot.slane %v1997, 1
    %v1999 = vadd.f32 %v1997, %v1998
    %v2000 = vsel %vm953, %v1583, 0.0
    %v2001 = vrot.slane %v2000, 4
    %v2002 = vadd.f32 %v2000, %v2001
    %v2003 = vrot.slane %v2002, 2
    %v2004 = vadd.f32 %v2002, %v2003
    %v2005 = vrot.slane %v2004, 1
    %v2006 = vadd.f32 %v2004, %v2005
    %v2007 = vsel %vm953, %v1585, 0.0
    %v2008 = vrot.slane %v2007, 4
    %v2009 = vadd.f32 %v2007, %v2008
    %v2010 = vrot.slane %v2009, 2
    %v2011 = vadd.f32 %v2009, %v2010
    %v2012 = vrot.slane %v2011, 1
    %v2013 = vadd.f32 %v2011, %v2012
    %v2014 = vsel %vm953, %v1587, 0.0
    %v2015 = vrot.slane %v2014, 4
    %v2016 = vadd.f32 %v2014, %v2015
    %v2017 = vrot.slane %v2016, 2
    %v2018 = vadd.f32 %v2016, %v2017
    %v2019 = vrot.slane %v2018, 1
    %v2020 = vadd.f32 %v2018, %v2019
    %v2021 = vsel %vm953, %v1589, 0.0
    %v2022 = vrot.slane %v2021, 4
    %v2023 = vadd.f32 %v2021, %v2022
    %v2024 = vrot.slane %v2023, 2
    %v2025 = vadd.f32 %v2023, %v2024
    %v2026 = vrot.slane %v2025, 1
    %v2027 = vadd.f32 %v2025, %v2026
    %v2028 = vsel %vm953, %v1591, 0.0
    %v2029 = vrot.slane %v2028, 4
    %v2030 = vadd.f32 %v2028, %v2029
    %v2031 = vrot.slane %v2030, 2
    %v2032 = vadd.f32 %v2030, %v2031
    %v2033 = vrot.slane %v2032, 1
    %v2034 = vadd.f32 %v2032, %v2033
    %v2035 = vsel %vm953, %v1593, 0.0
    %v2036 = vrot.slane %v2035, 4
    %v2037 = vadd.f32 %v2035, %v2036
    %v2038 = vrot.slane %v2037, 2
    %v2039 = vadd.f32 %v2037, %v2038
    %v2040 = vrot.slane %v2039, 1
    %v2041 = vadd.f32 %v2039, %v2040
    %v2042 = vrcp.pop %v1600
    %v2043 = vrcp.pop %v1607
    %v2044 = vrcp.pop %v1614
    %v2045 = vrcp.pop %v1621
    %v2046 = vrcp.pop %v1628
    %v2047 = vrcp.pop %v1635
    %v2048 = vrcp.pop %v1642
    %v2049 = vrcp.pop %v1649
    %v2050 = vrcp.pop %v1656
    %v2051 = vrcp.pop %v1663
    %v2052 = vrcp.pop %v1670
    %v2053 = vrcp.pop %v1677
    %v2054 = vrcp.pop %v1684
    %v2055 = vrcp.pop %v1691
    %v2056 = vrcp.pop %v1698
    %v2057 = vrcp.pop %v1705
    %v2058 = vrcp.pop %v1712
    %v2059 = vrcp.pop %v1719
    %v2060 = vrcp.pop %v1726
    %v2061 = vrcp.pop %v1733
    %v2062 = vrcp.pop %v1740
    %v2063 = vrcp.pop %v1747
    %v2064 = vrcp.pop %v1754
    %v2065 = vrcp.pop %v1761
    %v2066 = vrcp.pop %v1768
    %v2067 = vrcp.pop %v1775
    %v2068 = vrcp.pop %v1782
    %v2069 = vrcp.pop %v1789
    %v2070 = vrcp.pop %v1796
    %v2071 = vrcp.pop %v1803
    %v2072 = vrcp.pop %v1810
    %v2073 = vrcp.pop %v1817
    %v2074 = vrcp.pop %v1824
    %v2075 = vrcp.pop %v1831
    %v2076 = vrcp.pop %v1838
    %v2077 = vrcp.pop %v1845
    %v2078 = vrcp.pop %v1852
    %v2079 = vrcp.pop %v1859
    %v2080 = vrcp.pop %v1866
    %v2081 = vrcp.pop %v1873
    %v2082 = vrcp.pop %v1880
    %v2083 = vrcp.pop %v1887
    %v2084 = vrcp.pop %v1894
    %v2085 = vrcp.pop %v1901
    %v2086 = vrcp.pop %v1908
    %v2087 = vrcp.pop %v1915
    %v2088 = vrcp.pop %v1922
    %v2089 = vrcp.pop %v1929
    %v2090 = vrcp.pop %v1936
    %v2091 = vrcp.pop %v1943
    %v2092 = vrcp.pop %v1950
    %v2093 = vrcp.pop %v1957
    %v2094 = vrcp.pop %v1964
    %v2095 = vrcp.pop %v1971
    %v2096 = vrcp.pop %v1978
    %v2097 = vrcp.pop %v1985
    %v2098 = vrcp.pop %v1992
    %v2099 = vrcp.pop %v1999
    %v2100 = vrcp.pop %v2006
    %v2101 = vrcp.pop %v2013
    %v2102 = vrcp.pop %v2020
    %v2103 = vrcp.pop %v2027
    %v2104 = vrcp.pop %v2034
    %v2105 = vrcp.pop %v2041
    %v2106 = vmul.f32 %v1467, %v2042
    %v2107 = vmul.f32 %v1469, %v2043
    %v2108 = vmul.f32 %v1471, %v2044
    %v2109 = vmul.f32 %v1473, %v2045
    %v2110 = vmul.f32 %v1475, %v2046
    %v2111 = vmul.f32 %v1477, %v2047
    %v2112 = vmul.f32 %v1479, %v2048
    %v2113 = vmul.f32 %v1481, %v2049
    %v2114 = vmul.f32 %v1483, %v2050
    %v2115 = vmul.f32 %v1485, %v2051
    %v2116 = vmul.f32 %v1487, %v2052
    %v2117 = vmul.f32 %v1489, %v2053
    %v2118 = vmul.f32 %v1491, %v2054
    %v2119 = vmul.f32 %v1493, %v2055
    %v2120 = vmul.f32 %v1495, %v2056
    %v2121 = vmul.f32 %v1497, %v2057
    %v2122 = vmul.f32 %v1499, %v2058
    %v2123 = vmul.f32 %v1501, %v2059
    %v2124 = vmul.f32 %v1503, %v2060
    %v2125 = vmul.f32 %v1505, %v2061
    %v2126 = vmul.f32 %v1507, %v2062
    %v2127 = vmul.f32 %v1509, %v2063
    %v2128 = vmul.f32 %v1511, %v2064
    %v2129 = vmul.f32 %v1513, %v2065
    %v2130 = vmul.f32 %v1515, %v2066
    %v2131 = vmul.f32 %v1517, %v2067
    %v2132 = vmul.f32 %v1519, %v2068
    %v2133 = vmul.f32 %v1521, %v2069
    %v2134 = vmul.f32 %v1523, %v2070
    %v2135 = vmul.f32 %v1525, %v2071
    %v2136 = vmul.f32 %v1527, %v2072
    %v2137 = vmul.f32 %v1529, %v2073
    %v2138 = vmul.f32 %v1531, %v2074
    %v2139 = vmul.f32 %v1533, %v2075
    %v2140 = vmul.f32 %v1535, %v2076
    %v2141 = vmul.f32 %v1537, %v2077
    %v2142 = vmul.f32 %v1539, %v2078
    %v2143 = vmul.f32 %v1541, %v2079
    %v2144 = vmul.f32 %v1543, %v2080
    %v2145 = vmul.f32 %v1545, %v2081
    %v2146 = vmul.f32 %v1547, %v2082
    %v2147 = vmul.f32 %v1549, %v2083
    %v2148 = vmul.f32 %v1551, %v2084
    %v2149 = vmul.f32 %v1553, %v2085
    %v2150 = vmul.f32 %v1555, %v2086
    %v2151 = vmul.f32 %v1557, %v2087
    %v2152 = vmul.f32 %v1559, %v2088
    %v2153 = vmul.f32 %v1561, %v2089
    %v2154 = vmul.f32 %v1563, %v2090
    %v2155 = vmul.f32 %v1565, %v2091
    %v2156 = vmul.f32 %v1567, %v2092
    %v2157 = vmul.f32 %v1569, %v2093
    %v2158 = vmul.f32 %v1571, %v2094
    %v2159 = vmul.f32 %v1573, %v2095
    %v2160 = vmul.f32 %v1575, %v2096
    %v2161 = vmul.f32 %v1577, %v2097
    %v2162 = vmul.f32 %v1579, %v2098
    %v2163 = vmul.f32 %v1581, %v2099
    %v2164 = vmul.f32 %v1583, %v2100
    %v2165 = vmul.f32 %v1585, %v2101
    %v2166 = vmul.f32 %v1587, %v2102
    %v2167 = vmul.f32 %v1589, %v2103
    %v2168 = vmul.f32 %v1591, %v2104
    %v2169 = vmul.f32 %v1593, %v2105
    %v2170 = vld [vmem:[%s18] sm:$0xff]
    %v2172 = vsel %vm953, %v2106, 0
    %v2175 = vsel %vm953, %v2107, 0
    %v2178 = vsel %vm953, %v2108, 0
    %v2181 = vsel %vm953, %v2109, 0
    %v2184 = vsel %vm953, %v2110, 0
    %v2187 = vsel %vm953, %v2111, 0
    %v2190 = vsel %vm953, %v2112, 0
    %v2193 = vsel %vm953, %v2113, 0
    %v2196 = vsel %vm953, %v2114, 0
    %v2199 = vsel %vm953, %v2115, 0
    %v2202 = vsel %vm953, %v2116, 0
    %v2205 = vsel %vm953, %v2117, 0
    %v2208 = vsel %vm953, %v2118, 0
    %v2211 = vsel %vm953, %v2119, 0
    %v2214 = vsel %vm953, %v2120, 0
    %v2217 = vsel %vm953, %v2121, 0
    %v2220 = vsel %vm953, %v2122, 0
    %v2223 = vsel %vm953, %v2123, 0
    %v2226 = vsel %vm953, %v2124, 0
    %v2229 = vsel %vm953, %v2125, 0
    %v2232 = vsel %vm953, %v2126, 0
    %v2235 = vsel %vm953, %v2127, 0
    %v2238 = vsel %vm953, %v2128, 0
    %v2241 = vsel %vm953, %v2129, 0
    %v2244 = vsel %vm953, %v2130, 0
    %v2247 = vsel %vm953, %v2131, 0
    %v2250 = vsel %vm953, %v2132, 0
    %v2253 = vsel %vm953, %v2133, 0
    %v2256 = vsel %vm953, %v2134, 0
    %v2259 = vsel %vm953, %v2135, 0
    %v2262 = vsel %vm953, %v2136, 0
    %v2265 = vsel %vm953, %v2137, 0
    %v2268 = vsel %vm953, %v2138, 0
    %v2271 = vsel %vm953, %v2139, 0
    %v2274 = vsel %vm953, %v2140, 0
    %v2277 = vsel %vm953, %v2141, 0
    %v2280 = vsel %vm953, %v2142, 0
    %v2283 = vsel %vm953, %v2143, 0
    %v2286 = vsel %vm953, %v2144, 0
    %v2289 = vsel %vm953, %v2145, 0
    %v2292 = vsel %vm953, %v2146, 0
    %v2295 = vsel %vm953, %v2147, 0
    %v2298 = vsel %vm953, %v2148, 0
    %v2301 = vsel %vm953, %v2149, 0
    %v2304 = vsel %vm953, %v2150, 0
    %v2307 = vsel %vm953, %v2151, 0
    %v2310 = vsel %vm953, %v2152, 0
    %v2313 = vsel %vm953, %v2153, 0
    %v2316 = vsel %vm953, %v2154, 0
    %v2319 = vsel %vm953, %v2155, 0
    %v2322 = vsel %vm953, %v2156, 0
    %v2325 = vsel %vm953, %v2157, 0
    %v2328 = vsel %vm953, %v2158, 0
    %v2331 = vsel %vm953, %v2159, 0
    %v2334 = vsel %vm953, %v2160, 0
    %v2337 = vsel %vm953, %v2161, 0
    %v2340 = vsel %vm953, %v2162, 0
    %v2343 = vsel %vm953, %v2163, 0
    %v2346 = vsel %vm953, %v2164, 0
    %v2349 = vsel %vm953, %v2165, 0
    %v2352 = vsel %vm953, %v2166, 0
    %v2355 = vsel %vm953, %v2167, 0
    %v2358 = vsel %vm953, %v2168, 0
    %v2361 = vsel %vm953, %v2169, 0
    %2363 = vmatpush.msra.mxu0 0.0
    %2364 = vmatpush.msra.mxu0 0.0
    %2365 = vmatpush.msra.mxu0 0.0
    %2366 = vmatpush.msra.mxu0 0.0
    %2367 = vmatpush.msra.mxu0 0.0
    %2368 = vmatpush.msra.mxu0 0.0
    %2369 = vmatpush.msra.mxu0 0.0
    %2370 = vmatpush.msra.mxu0 0.0
    %2371 = vmatpush.msra.mxu0 0.0
    %2372 = vmatpush.msra.mxu0 0.0
    %2373 = vmatpush.msra.mxu0 0.0
    %2374 = vmatpush.msra.mxu0 0.0
    %2375 = vmatpush.msra.mxu0 0.0
    %2376 = vmatpush.msra.mxu0 0.0
    %2377 = vmatpush.msra.mxu0 0.0
    %2378 = vmatpush.msra.mxu0 %v2170
    %2379 = vmatmul.f32.gmra.mxu0 %v2172
    %v2380 = vpop.f32.mrf.mxu0
    %v2381 = vadd.f32 0.0, %v2380
    %2382 = vmatmul.f32.gmra.mxu0 %v2175
    %v2383 = vpop.f32.mrf.mxu0
    %v2384 = vadd.f32 0.0, %v2383
    %2385 = vmatmul.f32.gmra.mxu0 %v2178
    %v2386 = vpop.f32.mrf.mxu0
    %v2387 = vadd.f32 0.0, %v2386
    %2388 = vmatmul.f32.gmra.mxu0 %v2181
    %v2389 = vpop.f32.mrf.mxu0
    %v2390 = vadd.f32 0.0, %v2389
    %2391 = vmatmul.f32.gmra.mxu0 %v2184
    %v2392 = vpop.f32.mrf.mxu0
    %v2393 = vadd.f32 0.0, %v2392
    %2394 = vmatmul.f32.gmra.mxu0 %v2187
    %v2395 = vpop.f32.mrf.mxu0
    %v2396 = vadd.f32 0.0, %v2395
    %2397 = vmatmul.f32.gmra.mxu0 %v2190
    %v2398 = vpop.f32.mrf.mxu0
    %v2399 = vadd.f32 0.0, %v2398
    %2400 = vmatmul.f32.gmra.mxu0 %v2193
    %v2401 = vpop.f32.mrf.mxu0
    %v2402 = vadd.f32 0.0, %v2401
    %2403 = vmatmul.f32.gmra.mxu0 %v2196
    %v2404 = vpop.f32.mrf.mxu0
    %v2405 = vadd.f32 0.0, %v2404
    %2406 = vmatmul.f32.gmra.mxu0 %v2199
    %v2407 = vpop.f32.mrf.mxu0
    %v2408 = vadd.f32 0.0, %v2407
    %2409 = vmatmul.f32.gmra.mxu0 %v2202
    %v2410 = vpop.f32.mrf.mxu0
    %v2411 = vadd.f32 0.0, %v2410
    %2412 = vmatmul.f32.gmra.mxu0 %v2205
    %v2413 = vpop.f32.mrf.mxu0
    %v2414 = vadd.f32 0.0, %v2413
    %2415 = vmatmul.f32.gmra.mxu0 %v2208
    %v2416 = vpop.f32.mrf.mxu0
    %v2417 = vadd.f32 0.0, %v2416
    %2418 = vmatmul.f32.gmra.mxu0 %v2211
    %v2419 = vpop.f32.mrf.mxu0
    %v2420 = vadd.f32 0.0, %v2419
    %2421 = vmatmul.f32.gmra.mxu0 %v2214
    %v2422 = vpop.f32.mrf.mxu0
    %v2423 = vadd.f32 0.0, %v2422
    %2424 = vmatmul.f32.gmra.mxu0 %v2217
    %v2425 = vpop.f32.mrf.mxu0
    %v2426 = vadd.f32 0.0, %v2425
    %2427 = vmatmul.f32.gmra.mxu0 %v2220
    %v2428 = vpop.f32.mrf.mxu0
    %v2429 = vadd.f32 0.0, %v2428
    %2430 = vmatmul.f32.gmra.mxu0 %v2223
    %v2431 = vpop.f32.mrf.mxu0
    %v2432 = vadd.f32 0.0, %v2431
    %2433 = vmatmul.f32.gmra.mxu0 %v2226
    %v2434 = vpop.f32.mrf.mxu0
    %v2435 = vadd.f32 0.0, %v2434
    %2436 = vmatmul.f32.gmra.mxu0 %v2229
    %v2437 = vpop.f32.mrf.mxu0
    %v2438 = vadd.f32 0.0, %v2437
    %2439 = vmatmul.f32.gmra.mxu0 %v2232
    %v2440 = vpop.f32.mrf.mxu0
    %v2441 = vadd.f32 0.0, %v2440
    %2442 = vmatmul.f32.gmra.mxu0 %v2235
    %v2443 = vpop.f32.mrf.mxu0
    %v2444 = vadd.f32 0.0, %v2443
    %2445 = vmatmul.f32.gmra.mxu0 %v2238
    %v2446 = vpop.f32.mrf.mxu0
    %v2447 = vadd.f32 0.0, %v2446
    %2448 = vmatmul.f32.gmra.mxu0 %v2241
    %v2449 = vpop.f32.mrf.mxu0
    %v2450 = vadd.f32 0.0, %v2449
    %2451 = vmatmul.f32.gmra.mxu0 %v2244
    %v2452 = vpop.f32.mrf.mxu0
    %v2453 = vadd.f32 0.0, %v2452
    %2454 = vmatmul.f32.gmra.mxu0 %v2247
    %v2455 = vpop.f32.mrf.mxu0
    %v2456 = vadd.f32 0.0, %v2455
    %2457 = vmatmul.f32.gmra.mxu0 %v2250
    %v2458 = vpop.f32.mrf.mxu0
    %v2459 = vadd.f32 0.0, %v2458
    %2460 = vmatmul.f32.gmra.mxu0 %v2253
    %v2461 = vpop.f32.mrf.mxu0
    %v2462 = vadd.f32 0.0, %v2461
    %2463 = vmatmul.f32.gmra.mxu0 %v2256
    %v2464 = vpop.f32.mrf.mxu0
    %v2465 = vadd.f32 0.0, %v2464
    %2466 = vmatmul.f32.gmra.mxu0 %v2259
    %v2467 = vpop.f32.mrf.mxu0
    %v2468 = vadd.f32 0.0, %v2467
    %2469 = vmatmul.f32.gmra.mxu0 %v2262
    %v2470 = vpop.f32.mrf.mxu0
    %v2471 = vadd.f32 0.0, %v2470
    %2472 = vmatmul.f32.gmra.mxu0 %v2265
    %v2473 = vpop.f32.mrf.mxu0
    %v2474 = vadd.f32 0.0, %v2473
    %2475 = vmatmul.f32.gmra.mxu0 %v2268
    %v2476 = vpop.f32.mrf.mxu0
    %v2477 = vadd.f32 0.0, %v2476
    %2478 = vmatmul.f32.gmra.mxu0 %v2271
    %v2479 = vpop.f32.mrf.mxu0
    %v2480 = vadd.f32 0.0, %v2479
    %2481 = vmatmul.f32.gmra.mxu0 %v2274
    %v2482 = vpop.f32.mrf.mxu0
    %v2483 = vadd.f32 0.0, %v2482
    %2484 = vmatmul.f32.gmra.mxu0 %v2277
    %v2485 = vpop.f32.mrf.mxu0
    %v2486 = vadd.f32 0.0, %v2485
    %2487 = vmatmul.f32.gmra.mxu0 %v2280
    %v2488 = vpop.f32.mrf.mxu0
    %v2489 = vadd.f32 0.0, %v2488
    %2490 = vmatmul.f32.gmra.mxu0 %v2283
    %v2491 = vpop.f32.mrf.mxu0
    %v2492 = vadd.f32 0.0, %v2491
    %2493 = vmatmul.f32.gmra.mxu0 %v2286
    %v2494 = vpop.f32.mrf.mxu0
    %v2495 = vadd.f32 0.0, %v2494
    %2496 = vmatmul.f32.gmra.mxu0 %v2289
    %v2497 = vpop.f32.mrf.mxu0
    %v2498 = vadd.f32 0.0, %v2497
    %2499 = vmatmul.f32.gmra.mxu0 %v2292
    %v2500 = vpop.f32.mrf.mxu0
    %v2501 = vadd.f32 0.0, %v2500
    %2502 = vmatmul.f32.gmra.mxu0 %v2295
    %v2503 = vpop.f32.mrf.mxu0
    %v2504 = vadd.f32 0.0, %v2503
    %2505 = vmatmul.f32.gmra.mxu0 %v2298
    %v2506 = vpop.f32.mrf.mxu0
    %v2507 = vadd.f32 0.0, %v2506
    %2508 = vmatmul.f32.gmra.mxu0 %v2301
    %v2509 = vpop.f32.mrf.mxu0
    %v2510 = vadd.f32 0.0, %v2509
    %2511 = vmatmul.f32.gmra.mxu0 %v2304
    %v2512 = vpop.f32.mrf.mxu0
    %v2513 = vadd.f32 0.0, %v2512
    %2514 = vmatmul.f32.gmra.mxu0 %v2307
    %v2515 = vpop.f32.mrf.mxu0
    %v2516 = vadd.f32 0.0, %v2515
    %2517 = vmatmul.f32.gmra.mxu0 %v2310
    %v2518 = vpop.f32.mrf.mxu0
    %v2519 = vadd.f32 0.0, %v2518
    %2520 = vmatmul.f32.gmra.mxu0 %v2313
    %v2521 = vpop.f32.mrf.mxu0
    %v2522 = vadd.f32 0.0, %v2521
    %2523 = vmatmul.f32.gmra.mxu0 %v2316
    %v2524 = vpop.f32.mrf.mxu0
    %v2525 = vadd.f32 0.0, %v2524
    %2526 = vmatmul.f32.gmra.mxu0 %v2319
    %v2527 = vpop.f32.mrf.mxu0
    %v2528 = vadd.f32 0.0, %v2527
    %2529 = vmatmul.f32.gmra.mxu0 %v2322
    %v2530 = vpop.f32.mrf.mxu0
    %v2531 = vadd.f32 0.0, %v2530
    %2532 = vmatmul.f32.gmra.mxu0 %v2325
    %v2533 = vpop.f32.mrf.mxu0
    %v2534 = vadd.f32 0.0, %v2533
    %2535 = vmatmul.f32.gmra.mxu0 %v2328
    %v2536 = vpop.f32.mrf.mxu0
    %v2537 = vadd.f32 0.0, %v2536
    %2538 = vmatmul.f32.gmra.mxu0 %v2331
    %v2539 = vpop.f32.mrf.mxu0
    %v2540 = vadd.f32 0.0, %v2539
    %2541 = vmatmul.f32.gmra.mxu0 %v2334
    %v2542 = vpop.f32.mrf.mxu0
    %v2543 = vadd.f32 0.0, %v2542
    %2544 = vmatmul.f32.gmra.mxu0 %v2337
    %v2545 = vpop.f32.mrf.mxu0
    %v2546 = vadd.f32 0.0, %v2545
    %2547 = vmatmul.f32.gmra.mxu0 %v2340
    %v2548 = vpop.f32.mrf.mxu0
    %v2549 = vadd.f32 0.0, %v2548
    %2550 = vmatmul.f32.gmra.mxu0 %v2343
    %v2551 = vpop.f32.mrf.mxu0
    %v2552 = vadd.f32 0.0, %v2551
    %2553 = vmatmul.f32.gmra.mxu0 %v2346
    %v2554 = vpop.f32.mrf.mxu0
    %v2555 = vadd.f32 0.0, %v2554
    %2556 = vmatmul.f32.gmra.mxu0 %v2349
    %v2557 = vpop.f32.mrf.mxu0
    %v2558 = vadd.f32 0.0, %v2557
    %2559 = vmatmul.f32.gmra.mxu0 %v2352
    %v2560 = vpop.f32.mrf.mxu0
    %v2561 = vadd.f32 0.0, %v2560
    %2562 = vmatmul.f32.gmra.mxu0 %v2355
    %v2563 = vpop.f32.mrf.mxu0
    %v2564 = vadd.f32 0.0, %v2563
    %2565 = vmatmul.f32.gmra.mxu0 %v2358
    %v2566 = vpop.f32.mrf.mxu0
    %v2567 = vadd.f32 0.0, %v2566
    %2568 = vmatmul.f32.gmra.mxu0 %v2361
    %v2569 = vpop.f32.mrf.mxu0
    %v2570 = vadd.f32 0.0, %v2569
    %2571 = vdwg.mxu0
    %v2572 = vmul.f32 %v2381, %v245
    %v2573 = vmul.f32 %v2384, %v245
    %v2574 = vmul.f32 %v2387, %v245
    %v2575 = vmul.f32 %v2390, %v245
    %v2576 = vmul.f32 %v2393, %v245
    %v2577 = vmul.f32 %v2396, %v245
    %v2578 = vmul.f32 %v2399, %v245
    %v2579 = vmul.f32 %v2402, %v245
    %v2580 = vmul.f32 %v2405, %v247
    %v2581 = vmul.f32 %v2408, %v247
    %v2582 = vmul.f32 %v2411, %v247
    %v2583 = vmul.f32 %v2414, %v247
    %v2584 = vmul.f32 %v2417, %v247
    %v2585 = vmul.f32 %v2420, %v247
    %v2586 = vmul.f32 %v2423, %v247
    %v2587 = vmul.f32 %v2426, %v247
    %v2588 = vmul.f32 %v2429, %v250
    %v2589 = vmul.f32 %v2432, %v250
    %v2590 = vmul.f32 %v2435, %v250
    %v2591 = vmul.f32 %v2438, %v250
    %v2592 = vmul.f32 %v2441, %v250
    %v2593 = vmul.f32 %v2444, %v250
    %v2594 = vmul.f32 %v2447, %v250
    %v2595 = vmul.f32 %v2450, %v250
    %v2596 = vmul.f32 %v2453, %v252
    %v2597 = vmul.f32 %v2456, %v252
    %v2598 = vmul.f32 %v2459, %v252
    %v2599 = vmul.f32 %v2462, %v252
    %v2600 = vmul.f32 %v2465, %v252
    %v2601 = vmul.f32 %v2468, %v252
    %v2602 = vmul.f32 %v2471, %v252
    %v2603 = vmul.f32 %v2474, %v252
    %v2604 = vmul.f32 %v2477, %v255
    %v2605 = vmul.f32 %v2480, %v255
    %v2606 = vmul.f32 %v2483, %v255
    %v2607 = vmul.f32 %v2486, %v255
    %v2608 = vmul.f32 %v2489, %v255
    %v2609 = vmul.f32 %v2492, %v255
    %v2610 = vmul.f32 %v2495, %v255
    %v2611 = vmul.f32 %v2498, %v255
    %v2612 = vmul.f32 %v2501, %v257
    %v2613 = vmul.f32 %v2504, %v257
    %v2614 = vmul.f32 %v2507, %v257
    %v2615 = vmul.f32 %v2510, %v257
    %v2616 = vmul.f32 %v2513, %v257
    %v2617 = vmul.f32 %v2516, %v257
    %v2618 = vmul.f32 %v2519, %v257
    %v2619 = vmul.f32 %v2522, %v257
    %v2620 = vmul.f32 %v2525, %v260
    %v2621 = vmul.f32 %v2528, %v260
    %v2622 = vmul.f32 %v2531, %v260
    %v2623 = vmul.f32 %v2534, %v260
    %v2624 = vmul.f32 %v2537, %v260
    %v2625 = vmul.f32 %v2540, %v260
    %v2626 = vmul.f32 %v2543, %v260
    %v2627 = vmul.f32 %v2546, %v260
    %v2628 = vmul.f32 %v2549, %v262
    %v2629 = vmul.f32 %v2552, %v262
    %v2630 = vmul.f32 %v2555, %v262
    %v2631 = vmul.f32 %v2558, %v262
    %v2632 = vmul.f32 %v2561, %v262
    %v2633 = vmul.f32 %v2564, %v262
    %v2634 = vmul.f32 %v2567, %v262
    %v2635 = vmul.f32 %v2570, %v262
    %v2636 = vsel %vm193, %v2572, 0.0
    %v2637 = vrot.slane %v2636, 4
    %v2638 = vadd.f32 %v2636, %v2637
    %v2639 = vrot.slane %v2638, 2
    %v2640 = vadd.f32 %v2638, %v2639
    %v2641 = vrot.slane %v2640, 1
    %v2642 = vadd.f32 %v2640, %v2641
    %v2643 = vsel %vm193, %v2573, 0.0
    %v2644 = vrot.slane %v2643, 4
    %v2645 = vadd.f32 %v2643, %v2644
    %v2646 = vrot.slane %v2645, 2
    %v2647 = vadd.f32 %v2645, %v2646
    %v2648 = vrot.slane %v2647, 1
    %v2649 = vadd.f32 %v2647, %v2648
    %v2650 = vsel %vm193, %v2574, 0.0
    %v2651 = vrot.slane %v2650, 4
    %v2652 = vadd.f32 %v2650, %v2651
    %v2653 = vrot.slane %v2652, 2
    %v2654 = vadd.f32 %v2652, %v2653
    %v2655 = vrot.slane %v2654, 1
    %v2656 = vadd.f32 %v2654, %v2655
    %v2657 = vsel %vm193, %v2575, 0.0
    %v2658 = vrot.slane %v2657, 4
    %v2659 = vadd.f32 %v2657, %v2658
    %v2660 = vrot.slane %v2659, 2
    %v2661 = vadd.f32 %v2659, %v2660
    %v2662 = vrot.slane %v2661, 1
    %v2663 = vadd.f32 %v2661, %v2662
    %v2664 = vsel %vm193, %v2576, 0.0
    %v2665 = vrot.slane %v2664, 4
    %v2666 = vadd.f32 %v2664, %v2665
    %v2667 = vrot.slane %v2666, 2
    %v2668 = vadd.f32 %v2666, %v2667
    %v2669 = vrot.slane %v2668, 1
    %v2670 = vadd.f32 %v2668, %v2669
    %v2671 = vsel %vm193, %v2577, 0.0
    %v2672 = vrot.slane %v2671, 4
    %v2673 = vadd.f32 %v2671, %v2672
    %v2674 = vrot.slane %v2673, 2
    %v2675 = vadd.f32 %v2673, %v2674
    %v2676 = vrot.slane %v2675, 1
    %v2677 = vadd.f32 %v2675, %v2676
    %v2678 = vsel %vm193, %v2578, 0.0
    %v2679 = vrot.slane %v2678, 4
    %v2680 = vadd.f32 %v2678, %v2679
    %v2681 = vrot.slane %v2680, 2
    %v2682 = vadd.f32 %v2680, %v2681
    %v2683 = vrot.slane %v2682, 1
    %v2684 = vadd.f32 %v2682, %v2683
    %v2685 = vsel %vm193, %v2579, 0.0
    %v2686 = vrot.slane %v2685, 4
    %v2687 = vadd.f32 %v2685, %v2686
    %v2688 = vrot.slane %v2687, 2
    %v2689 = vadd.f32 %v2687, %v2688
    %v2690 = vrot.slane %v2689, 1
    %v2691 = vadd.f32 %v2689, %v2690
    %v2692 = vsel %vm193, %v2580, 0.0
    %v2693 = vrot.slane %v2692, 4
    %v2694 = vadd.f32 %v2692, %v2693
    %v2695 = vrot.slane %v2694, 2
    %v2696 = vadd.f32 %v2694, %v2695
    %v2697 = vrot.slane %v2696, 1
    %v2698 = vadd.f32 %v2696, %v2697
    %v2699 = vsel %vm193, %v2581, 0.0
    %v2700 = vrot.slane %v2699, 4
    %v2701 = vadd.f32 %v2699, %v2700
    %v2702 = vrot.slane %v2701, 2
    %v2703 = vadd.f32 %v2701, %v2702
    %v2704 = vrot.slane %v2703, 1
    %v2705 = vadd.f32 %v2703, %v2704
    %v2706 = vsel %vm193, %v2582, 0.0
    %v2707 = vrot.slane %v2706, 4
    %v2708 = vadd.f32 %v2706, %v2707
    %v2709 = vrot.slane %v2708, 2
    %v2710 = vadd.f32 %v2708, %v2709
    %v2711 = vrot.slane %v2710, 1
    %v2712 = vadd.f32 %v2710, %v2711
    %v2713 = vsel %vm193, %v2583, 0.0
    %v2714 = vrot.slane %v2713, 4
    %v2715 = vadd.f32 %v2713, %v2714
    %v2716 = vrot.slane %v2715, 2
    %v2717 = vadd.f32 %v2715, %v2716
    %v2718 = vrot.slane %v2717, 1
    %v2719 = vadd.f32 %v2717, %v2718
    %v2720 = vsel %vm193, %v2584, 0.0
    %v2721 = vrot.slane %v2720, 4
    %v2722 = vadd.f32 %v2720, %v2721
    %v2723 = vrot.slane %v2722, 2
    %v2724 = vadd.f32 %v2722, %v2723
    %v2725 = vrot.slane %v2724, 1
    %v2726 = vadd.f32 %v2724, %v2725
    %v2727 = vsel %vm193, %v2585, 0.0
    %v2728 = vrot.slane %v2727, 4
    %v2729 = vadd.f32 %v2727, %v2728
    %v2730 = vrot.slane %v2729, 2
    %v2731 = vadd.f32 %v2729, %v2730
    %v2732 = vrot.slane %v2731, 1
    %v2733 = vadd.f32 %v2731, %v2732
    %v2734 = vsel %vm193, %v2586, 0.0
    %v2735 = vrot.slane %v2734, 4
    %v2736 = vadd.f32 %v2734, %v2735
    %v2737 = vrot.slane %v2736, 2
    %v2738 = vadd.f32 %v2736, %v2737
    %v2739 = vrot.slane %v2738, 1
    %v2740 = vadd.f32 %v2738, %v2739
    %v2741 = vsel %vm193, %v2587, 0.0
    %v2742 = vrot.slane %v2741, 4
    %v2743 = vadd.f32 %v2741, %v2742
    %v2744 = vrot.slane %v2743, 2
    %v2745 = vadd.f32 %v2743, %v2744
    %v2746 = vrot.slane %v2745, 1
    %v2747 = vadd.f32 %v2745, %v2746
    %v2748 = vsel %vm193, %v2588, 0.0
    %v2749 = vrot.slane %v2748, 4
    %v2750 = vadd.f32 %v2748, %v2749
    %v2751 = vrot.slane %v2750, 2
    %v2752 = vadd.f32 %v2750, %v2751
    %v2753 = vrot.slane %v2752, 1
    %v2754 = vadd.f32 %v2752, %v2753
    %v2755 = vsel %vm193, %v2589, 0.0
    %v2756 = vrot.slane %v2755, 4
    %v2757 = vadd.f32 %v2755, %v2756
    %v2758 = vrot.slane %v2757, 2
    %v2759 = vadd.f32 %v2757, %v2758
    %v2760 = vrot.slane %v2759, 1
    %v2761 = vadd.f32 %v2759, %v2760
    %v2762 = vsel %vm193, %v2590, 0.0
    %v2763 = vrot.slane %v2762, 4
    %v2764 = vadd.f32 %v2762, %v2763
    %v2765 = vrot.slane %v2764, 2
    %v2766 = vadd.f32 %v2764, %v2765
    %v2767 = vrot.slane %v2766, 1
    %v2768 = vadd.f32 %v2766, %v2767
    %v2769 = vsel %vm193, %v2591, 0.0
    %v2770 = vrot.slane %v2769, 4
    %v2771 = vadd.f32 %v2769, %v2770
    %v2772 = vrot.slane %v2771, 2
    %v2773 = vadd.f32 %v2771, %v2772
    %v2774 = vrot.slane %v2773, 1
    %v2775 = vadd.f32 %v2773, %v2774
    %v2776 = vsel %vm193, %v2592, 0.0
    %v2777 = vrot.slane %v2776, 4
    %v2778 = vadd.f32 %v2776, %v2777
    %v2779 = vrot.slane %v2778, 2
    %v2780 = vadd.f32 %v2778, %v2779
    %v2781 = vrot.slane %v2780, 1
    %v2782 = vadd.f32 %v2780, %v2781
    %v2783 = vsel %vm193, %v2593, 0.0
    %v2784 = vrot.slane %v2783, 4
    %v2785 = vadd.f32 %v2783, %v2784
    %v2786 = vrot.slane %v2785, 2
    %v2787 = vadd.f32 %v2785, %v2786
    %v2788 = vrot.slane %v2787, 1
    %v2789 = vadd.f32 %v2787, %v2788
    %v2790 = vsel %vm193, %v2594, 0.0
    %v2791 = vrot.slane %v2790, 4
    %v2792 = vadd.f32 %v2790, %v2791
    %v2793 = vrot.slane %v2792, 2
    %v2794 = vadd.f32 %v2792, %v2793
    %v2795 = vrot.slane %v2794, 1
    %v2796 = vadd.f32 %v2794, %v2795
    %v2797 = vsel %vm193, %v2595, 0.0
    %v2798 = vrot.slane %v2797, 4
    %v2799 = vadd.f32 %v2797, %v2798
    %v2800 = vrot.slane %v2799, 2
    %v2801 = vadd.f32 %v2799, %v2800
    %v2802 = vrot.slane %v2801, 1
    %v2803 = vadd.f32 %v2801, %v2802
    %v2804 = vsel %vm193, %v2596, 0.0
    %v2805 = vrot.slane %v2804, 4
    %v2806 = vadd.f32 %v2804, %v2805
    %v2807 = vrot.slane %v2806, 2
    %v2808 = vadd.f32 %v2806, %v2807
    %v2809 = vrot.slane %v2808, 1
    %v2810 = vadd.f32 %v2808, %v2809
    %v2811 = vsel %vm193, %v2597, 0.0
    %v2812 = vrot.slane %v2811, 4
    %v2813 = vadd.f32 %v2811, %v2812
    %v2814 = vrot.slane %v2813, 2
    %v2815 = vadd.f32 %v2813, %v2814
    %v2816 = vrot.slane %v2815, 1
    %v2817 = vadd.f32 %v2815, %v2816
    %v2818 = vsel %vm193, %v2598, 0.0
    %v2819 = vrot.slane %v2818, 4
    %v2820 = vadd.f32 %v2818, %v2819
    %v2821 = vrot.slane %v2820, 2
    %v2822 = vadd.f32 %v2820, %v2821
    %v2823 = vrot.slane %v2822, 1
    %v2824 = vadd.f32 %v2822, %v2823
    %v2825 = vsel %vm193, %v2599, 0.0
    %v2826 = vrot.slane %v2825, 4
    %v2827 = vadd.f32 %v2825, %v2826
    %v2828 = vrot.slane %v2827, 2
    %v2829 = vadd.f32 %v2827, %v2828
    %v2830 = vrot.slane %v2829, 1
    %v2831 = vadd.f32 %v2829, %v2830
    %v2832 = vsel %vm193, %v2600, 0.0
    %v2833 = vrot.slane %v2832, 4
    %v2834 = vadd.f32 %v2832, %v2833
    %v2835 = vrot.slane %v2834, 2
    %v2836 = vadd.f32 %v2834, %v2835
    %v2837 = vrot.slane %v2836, 1
    %v2838 = vadd.f32 %v2836, %v2837
    %v2839 = vsel %vm193, %v2601, 0.0
    %v2840 = vrot.slane %v2839, 4
    %v2841 = vadd.f32 %v2839, %v2840
    %v2842 = vrot.slane %v2841, 2
    %v2843 = vadd.f32 %v2841, %v2842
    %v2844 = vrot.slane %v2843, 1
    %v2845 = vadd.f32 %v2843, %v2844
    %v2846 = vsel %vm193, %v2602, 0.0
    %v2847 = vrot.slane %v2846, 4
    %v2848 = vadd.f32 %v2846, %v2847
    %v2849 = vrot.slane %v2848, 2
    %v2850 = vadd.f32 %v2848, %v2849
    %v2851 = vrot.slane %v2850, 1
    %v2852 = vadd.f32 %v2850, %v2851
    %v2853 = vsel %vm193, %v2603, 0.0
    %v2854 = vrot.slane %v2853, 4
    %v2855 = vadd.f32 %v2853, %v2854
    %v2856 = vrot.slane %v2855, 2
    %v2857 = vadd.f32 %v2855, %v2856
    %v2858 = vrot.slane %v2857, 1
    %v2859 = vadd.f32 %v2857, %v2858
    %v2860 = vsel %vm193, %v2604, 0.0
    %v2861 = vrot.slane %v2860, 4
    %v2862 = vadd.f32 %v2860, %v2861
    %v2863 = vrot.slane %v2862, 2
    %v2864 = vadd.f32 %v2862, %v2863
    %v2865 = vrot.slane %v2864, 1
    %v2866 = vadd.f32 %v2864, %v2865
    %v2867 = vsel %vm193, %v2605, 0.0
    %v2868 = vrot.slane %v2867, 4
    %v2869 = vadd.f32 %v2867, %v2868
    %v2870 = vrot.slane %v2869, 2
    %v2871 = vadd.f32 %v2869, %v2870
    %v2872 = vrot.slane %v2871, 1
    %v2873 = vadd.f32 %v2871, %v2872
    %v2874 = vsel %vm193, %v2606, 0.0
    %v2875 = vrot.slane %v2874, 4
    %v2876 = vadd.f32 %v2874, %v2875
    %v2877 = vrot.slane %v2876, 2
    %v2878 = vadd.f32 %v2876, %v2877
    %v2879 = vrot.slane %v2878, 1
    %v2880 = vadd.f32 %v2878, %v2879
    %v2881 = vsel %vm193, %v2607, 0.0
    %v2882 = vrot.slane %v2881, 4
    %v2883 = vadd.f32 %v2881, %v2882
    %v2884 = vrot.slane %v2883, 2
    %v2885 = vadd.f32 %v2883, %v2884
    %v2886 = vrot.slane %v2885, 1
    %v2887 = vadd.f32 %v2885, %v2886
    %v2888 = vsel %vm193, %v2608, 0.0
    %v2889 = vrot.slane %v2888, 4
    %v2890 = vadd.f32 %v2888, %v2889
    %v2891 = vrot.slane %v2890, 2
    %v2892 = vadd.f32 %v2890, %v2891
    %v2893 = vrot.slane %v2892, 1
    %v2894 = vadd.f32 %v2892, %v2893
    %v2895 = vsel %vm193, %v2609, 0.0
    %v2896 = vrot.slane %v2895, 4
    %v2897 = vadd.f32 %v2895, %v2896
    %v2898 = vrot.slane %v2897, 2
    %v2899 = vadd.f32 %v2897, %v2898
    %v2900 = vrot.slane %v2899, 1
    %v2901 = vadd.f32 %v2899, %v2900
    %v2902 = vsel %vm193, %v2610, 0.0
    %v2903 = vrot.slane %v2902, 4
    %v2904 = vadd.f32 %v2902, %v2903
    %v2905 = vrot.slane %v2904, 2
    %v2906 = vadd.f32 %v2904, %v2905
    %v2907 = vrot.slane %v2906, 1
    %v2908 = vadd.f32 %v2906, %v2907
    %v2909 = vsel %vm193, %v2611, 0.0
    %v2910 = vrot.slane %v2909, 4
    %v2911 = vadd.f32 %v2909, %v2910
    %v2912 = vrot.slane %v2911, 2
    %v2913 = vadd.f32 %v2911, %v2912
    %v2914 = vrot.slane %v2913, 1
    %v2915 = vadd.f32 %v2913, %v2914
    %v2916 = vsel %vm193, %v2612, 0.0
    %v2917 = vrot.slane %v2916, 4
    %v2918 = vadd.f32 %v2916, %v2917
    %v2919 = vrot.slane %v2918, 2
    %v2920 = vadd.f32 %v2918, %v2919
    %v2921 = vrot.slane %v2920, 1
    %v2922 = vadd.f32 %v2920, %v2921
    %v2923 = vsel %vm193, %v2613, 0.0
    %v2924 = vrot.slane %v2923, 4
    %v2925 = vadd.f32 %v2923, %v2924
    %v2926 = vrot.slane %v2925, 2
    %v2927 = vadd.f32 %v2925, %v2926
    %v2928 = vrot.slane %v2927, 1
    %v2929 = vadd.f32 %v2927, %v2928
    %v2930 = vsel %vm193, %v2614, 0.0
    %v2931 = vrot.slane %v2930, 4
    %v2932 = vadd.f32 %v2930, %v2931
    %v2933 = vrot.slane %v2932, 2
    %v2934 = vadd.f32 %v2932, %v2933
    %v2935 = vrot.slane %v2934, 1
    %v2936 = vadd.f32 %v2934, %v2935
    %v2937 = vsel %vm193, %v2615, 0.0
    %v2938 = vrot.slane %v2937, 4
    %v2939 = vadd.f32 %v2937, %v2938
    %v2940 = vrot.slane %v2939, 2
    %v2941 = vadd.f32 %v2939, %v2940
    %v2942 = vrot.slane %v2941, 1
    %v2943 = vadd.f32 %v2941, %v2942
    %v2944 = vsel %vm193, %v2616, 0.0
    %v2945 = vrot.slane %v2944, 4
    %v2946 = vadd.f32 %v2944, %v2945
    %v2947 = vrot.slane %v2946, 2
    %v2948 = vadd.f32 %v2946, %v2947
    %v2949 = vrot.slane %v2948, 1
    %v2950 = vadd.f32 %v2948, %v2949
    %v2951 = vsel %vm193, %v2617, 0.0
    %v2952 = vrot.slane %v2951, 4
    %v2953 = vadd.f32 %v2951, %v2952
    %v2954 = vrot.slane %v2953, 2
    %v2955 = vadd.f32 %v2953, %v2954
    %v2956 = vrot.slane %v2955, 1
    %v2957 = vadd.f32 %v2955, %v2956
    %v2958 = vsel %vm193, %v2618, 0.0
    %v2959 = vrot.slane %v2958, 4
    %v2960 = vadd.f32 %v2958, %v2959
    %v2961 = vrot.slane %v2960, 2
    %v2962 = vadd.f32 %v2960, %v2961
    %v2963 = vrot.slane %v2962, 1
    %v2964 = vadd.f32 %v2962, %v2963
    %v2965 = vsel %vm193, %v2619, 0.0
    %v2966 = vrot.slane %v2965, 4
    %v2967 = vadd.f32 %v2965, %v2966
    %v2968 = vrot.slane %v2967, 2
    %v2969 = vadd.f32 %v2967, %v2968
    %v2970 = vrot.slane %v2969, 1
    %v2971 = vadd.f32 %v2969, %v2970
    %v2972 = vsel %vm193, %v2620, 0.0
    %v2973 = vrot.slane %v2972, 4
    %v2974 = vadd.f32 %v2972, %v2973
    %v2975 = vrot.slane %v2974, 2
    %v2976 = vadd.f32 %v2974, %v2975
    %v2977 = vrot.slane %v2976, 1
    %v2978 = vadd.f32 %v2976, %v2977
    %v2979 = vsel %vm193, %v2621, 0.0
    %v2980 = vrot.slane %v2979, 4
    %v2981 = vadd.f32 %v2979, %v2980
    %v2982 = vrot.slane %v2981, 2
    %v2983 = vadd.f32 %v2981, %v2982
    %v2984 = vrot.slane %v2983, 1
    %v2985 = vadd.f32 %v2983, %v2984
    %v2986 = vsel %vm193, %v2622, 0.0
    %v2987 = vrot.slane %v2986, 4
    %v2988 = vadd.f32 %v2986, %v2987
    %v2989 = vrot.slane %v2988, 2
    %v2990 = vadd.f32 %v2988, %v2989
    %v2991 = vrot.slane %v2990, 1
    %v2992 = vadd.f32 %v2990, %v2991
    %v2993 = vsel %vm193, %v2623, 0.0
    %v2994 = vrot.slane %v2993, 4
    %v2995 = vadd.f32 %v2993, %v2994
    %v2996 = vrot.slane %v2995, 2
    %v2997 = vadd.f32 %v2995, %v2996
    %v2998 = vrot.slane %v2997, 1
    %v2999 = vadd.f32 %v2997, %v2998
    %v3000 = vsel %vm193, %v2624, 0.0
    %v3001 = vrot.slane %v3000, 4
    %v3002 = vadd.f32 %v3000, %v3001
    %v3003 = vrot.slane %v3002, 2
    %v3004 = vadd.f32 %v3002, %v3003
    %v3005 = vrot.slane %v3004, 1
    %v3006 = vadd.f32 %v3004, %v3005
    %v3007 = vsel %vm193, %v2625, 0.0
    %v3008 = vrot.slane %v3007, 4
    %v3009 = vadd.f32 %v3007, %v3008
    %v3010 = vrot.slane %v3009, 2
    %v3011 = vadd.f32 %v3009, %v3010
    %v3012 = vrot.slane %v3011, 1
    %v3013 = vadd.f32 %v3011, %v3012
    %v3014 = vsel %vm193, %v2626, 0.0
    %v3015 = vrot.slane %v3014, 4
    %v3016 = vadd.f32 %v3014, %v3015
    %v3017 = vrot.slane %v3016, 2
    %v3018 = vadd.f32 %v3016, %v3017
    %v3019 = vrot.slane %v3018, 1
    %v3020 = vadd.f32 %v3018, %v3019
    %v3021 = vsel %vm193, %v2627, 0.0
    %v3022 = vrot.slane %v3021, 4
    %v3023 = vadd.f32 %v3021, %v3022
    %v3024 = vrot.slane %v3023, 2
    %v3025 = vadd.f32 %v3023, %v3024
    %v3026 = vrot.slane %v3025, 1
    %v3027 = vadd.f32 %v3025, %v3026
    %v3028 = vsel %vm193, %v2628, 0.0
    %v3029 = vrot.slane %v3028, 4
    %v3030 = vadd.f32 %v3028, %v3029
    %v3031 = vrot.slane %v3030, 2
    %v3032 = vadd.f32 %v3030, %v3031
    %v3033 = vrot.slane %v3032, 1
    %v3034 = vadd.f32 %v3032, %v3033
    %v3035 = vsel %vm193, %v2629, 0.0
    %v3036 = vrot.slane %v3035, 4
    %v3037 = vadd.f32 %v3035, %v3036
    %v3038 = vrot.slane %v3037, 2
    %v3039 = vadd.f32 %v3037, %v3038
    %v3040 = vrot.slane %v3039, 1
    %v3041 = vadd.f32 %v3039, %v3040
    %v3042 = vsel %vm193, %v2630, 0.0
    %v3043 = vrot.slane %v3042, 4
    %v3044 = vadd.f32 %v3042, %v3043
    %v3045 = vrot.slane %v3044, 2
    %v3046 = vadd.f32 %v3044, %v3045
    %v3047 = vrot.slane %v3046, 1
    %v3048 = vadd.f32 %v3046, %v3047
    %v3049 = vsel %vm193, %v2631, 0.0
    %v3050 = vrot.slane %v3049, 4
    %v3051 = vadd.f32 %v3049, %v3050
    %v3052 = vrot.slane %v3051, 2
    %v3053 = vadd.f32 %v3051, %v3052
    %v3054 = vrot.slane %v3053, 1
    %v3055 = vadd.f32 %v3053, %v3054
    %v3056 = vsel %vm193, %v2632, 0.0
    %v3057 = vrot.slane %v3056, 4
    %v3058 = vadd.f32 %v3056, %v3057
    %v3059 = vrot.slane %v3058, 2
    %v3060 = vadd.f32 %v3058, %v3059
    %v3061 = vrot.slane %v3060, 1
    %v3062 = vadd.f32 %v3060, %v3061
    %v3063 = vsel %vm193, %v2633, 0.0
    %v3064 = vrot.slane %v3063, 4
    %v3065 = vadd.f32 %v3063, %v3064
    %v3066 = vrot.slane %v3065, 2
    %v3067 = vadd.f32 %v3065, %v3066
    %v3068 = vrot.slane %v3067, 1
    %v3069 = vadd.f32 %v3067, %v3068
    %v3070 = vsel %vm193, %v2634, 0.0
    %v3071 = vrot.slane %v3070, 4
    %v3072 = vadd.f32 %v3070, %v3071
    %v3073 = vrot.slane %v3072, 2
    %v3074 = vadd.f32 %v3072, %v3073
    %v3075 = vrot.slane %v3074, 1
    %v3076 = vadd.f32 %v3074, %v3075
    %v3077 = vsel %vm193, %v2635, 0.0
    %v3078 = vrot.slane %v3077, 4
    %v3079 = vadd.f32 %v3077, %v3078
    %v3080 = vrot.slane %v3079, 2
    %v3081 = vadd.f32 %v3079, %v3080
    %v3082 = vrot.slane %v3081, 1
    %v3083 = vadd.f32 %v3081, %v3082
    %v3084 = vpack.c.bf16 %v2642, %v2642
    %v3085 = vpack.c.bf16 %v2649, %v2649
    %v3086 = vpack.c.bf16 %v2656, %v2656
    %v3087 = vpack.c.bf16 %v2663, %v2663
    %v3088 = vpack.c.bf16 %v2670, %v2670
    %v3089 = vpack.c.bf16 %v2677, %v2677
    %v3090 = vpack.c.bf16 %v2684, %v2684
    %v3091 = vpack.c.bf16 %v2691, %v2691
    %v3092 = vpack.c.bf16 %v2698, %v2698
    %v3093 = vpack.c.bf16 %v2705, %v2705
    %v3094 = vpack.c.bf16 %v2712, %v2712
    %v3095 = vpack.c.bf16 %v2719, %v2719
    %v3096 = vpack.c.bf16 %v2726, %v2726
    %v3097 = vpack.c.bf16 %v2733, %v2733
    %v3098 = vpack.c.bf16 %v2740, %v2740
    %v3099 = vpack.c.bf16 %v2747, %v2747
    %v3100 = vpack.c.bf16 %v2754, %v2754
    %v3101 = vpack.c.bf16 %v2761, %v2761
    %v3102 = vpack.c.bf16 %v2768, %v2768
    %v3103 = vpack.c.bf16 %v2775, %v2775
    %v3104 = vpack.c.bf16 %v2782, %v2782
    %v3105 = vpack.c.bf16 %v2789, %v2789
    %v3106 = vpack.c.bf16 %v2796, %v2796
    %v3107 = vpack.c.bf16 %v2803, %v2803
    %v3108 = vpack.c.bf16 %v2810, %v2810
    %v3109 = vpack.c.bf16 %v2817, %v2817
    %v3110 = vpack.c.bf16 %v2824, %v2824
    %v3111 = vpack.c.bf16 %v2831, %v2831
    %v3112 = vpack.c.bf16 %v2838, %v2838
    %v3113 = vpack.c.bf16 %v2845, %v2845
    %v3114 = vpack.c.bf16 %v2852, %v2852
    %v3115 = vpack.c.bf16 %v2859, %v2859
    %v3116 = vpack.c.bf16 %v2866, %v2866
    %v3117 = vpack.c.bf16 %v2873, %v2873
    %v3118 = vpack.c.bf16 %v2880, %v2880
    %v3119 = vpack.c.bf16 %v2887, %v2887
    %v3120 = vpack.c.bf16 %v2894, %v2894
    %v3121 = vpack.c.bf16 %v2901, %v2901
    %v3122 = vpack.c.bf16 %v2908, %v2908
    %v3123 = vpack.c.bf16 %v2915, %v2915
    %v3124 = vpack.c.bf16 %v2922, %v2922
    %v3125 = vpack.c.bf16 %v2929, %v2929
    %v3126 = vpack.c.bf16 %v2936, %v2936
    %v3127 = vpack.c.bf16 %v2943, %v2943
    %v3128 = vpack.c.bf16 %v2950, %v2950
    %v3129 = vpack.c.bf16 %v2957, %v2957
    %v3130 = vpack.c.bf16 %v2964, %v2964
    %v3131 = vpack.c.bf16 %v2971, %v2971
    %v3132 = vpack.c.bf16 %v2978, %v2978
    %v3133 = vpack.c.bf16 %v2985, %v2985
    %v3134 = vpack.c.bf16 %v2992, %v2992
    %v3135 = vpack.c.bf16 %v2999, %v2999
    %v3136 = vpack.c.bf16 %v3006, %v3006
    %v3137 = vpack.c.bf16 %v3013, %v3013
    %v3138 = vpack.c.bf16 %v3020, %v3020
    %v3139 = vpack.c.bf16 %v3027, %v3027
    %v3140 = vpack.c.bf16 %v3034, %v3034
    %v3141 = vpack.c.bf16 %v3041, %v3041
    %v3142 = vpack.c.bf16 %v3048, %v3048
    %v3143 = vpack.c.bf16 %v3055, %v3055
    %v3144 = vpack.c.bf16 %v3062, %v3062
    %v3145 = vpack.c.bf16 %v3069, %v3069
    %v3146 = vpack.c.bf16 %v3076, %v3076
    %v3147 = vpack.c.bf16 %v3083, %v3083
    %v3148 = vld [vmem:[%s5] sm:$0xf]
    %v3149 = vld [vmem:[%s5 + $0x4] sm:$0xf]
    %v3150 = vld [vmem:[%s5 + $0x8] sm:$0xf]
    %v3151 = vld [vmem:[%s5 + $0xc] sm:$0xf]
    %v3152 = vld [vmem:[%s5 + $0x10] sm:$0xf]
    %v3153 = vld [vmem:[%s5 + $0x14] sm:$0xf]
    %v3154 = vld [vmem:[%s5 + $0x18] sm:$0xf]
    %v3155 = vld [vmem:[%s5 + $0x1c] sm:$0xf]
    %v3156 = vld [vmem:[%s6] sm:$0x1]
    %v3158 = vperm.slane %v3156, 0
    %v3224 = vunpack.c.l.b16 %v3084
    %v3225 = vunpack.c.l.b16 %v3085
    %v3226 = vunpack.c.l.b16 %v3086
    %v3227 = vunpack.c.l.b16 %v3087
    %v3228 = vunpack.c.l.b16 %v3088
    %v3229 = vunpack.c.l.b16 %v3089
    %v3230 = vunpack.c.l.b16 %v3090
    %v3231 = vunpack.c.l.b16 %v3091
    %v3232 = vunpack.c.l.b16 %v3092
    %v3233 = vunpack.c.l.b16 %v3093
    %v3234 = vunpack.c.l.b16 %v3094
    %v3235 = vunpack.c.l.b16 %v3095
    %v3236 = vunpack.c.l.b16 %v3096
    %v3237 = vunpack.c.l.b16 %v3097
    %v3238 = vunpack.c.l.b16 %v3098
    %v3239 = vunpack.c.l.b16 %v3099
    %v3240 = vunpack.c.l.b16 %v3100
    %v3241 = vunpack.c.l.b16 %v3101
    %v3242 = vunpack.c.l.b16 %v3102
    %v3243 = vunpack.c.l.b16 %v3103
    %v3244 = vunpack.c.l.b16 %v3104
    %v3245 = vunpack.c.l.b16 %v3105
    %v3246 = vunpack.c.l.b16 %v3106
    %v3247 = vunpack.c.l.b16 %v3107
    %v3248 = vunpack.c.l.b16 %v3108
    %v3249 = vunpack.c.l.b16 %v3109
    %v3250 = vunpack.c.l.b16 %v3110
    %v3251 = vunpack.c.l.b16 %v3111
    %v3252 = vunpack.c.l.b16 %v3112
    %v3253 = vunpack.c.l.b16 %v3113
    %v3254 = vunpack.c.l.b16 %v3114
    %v3255 = vunpack.c.l.b16 %v3115
    %v3256 = vunpack.c.l.b16 %v3116
    %v3257 = vunpack.c.l.b16 %v3117
    %v3258 = vunpack.c.l.b16 %v3118
    %v3259 = vunpack.c.l.b16 %v3119
    %v3260 = vunpack.c.l.b16 %v3120
    %v3261 = vunpack.c.l.b16 %v3121
    %v3262 = vunpack.c.l.b16 %v3122
    %v3263 = vunpack.c.l.b16 %v3123
    %v3264 = vunpack.c.l.b16 %v3124
    %v3265 = vunpack.c.l.b16 %v3125
    %v3266 = vunpack.c.l.b16 %v3126
    %v3267 = vunpack.c.l.b16 %v3127
    %v3268 = vunpack.c.l.b16 %v3128
    %v3269 = vunpack.c.l.b16 %v3129
    %v3270 = vunpack.c.l.b16 %v3130
    %v3271 = vunpack.c.l.b16 %v3131
    %v3272 = vunpack.c.l.b16 %v3132
    %v3273 = vunpack.c.l.b16 %v3133
    %v3274 = vunpack.c.l.b16 %v3134
    %v3275 = vunpack.c.l.b16 %v3135
    %v3276 = vunpack.c.l.b16 %v3136
    %v3277 = vunpack.c.l.b16 %v3137
    %v3278 = vunpack.c.l.b16 %v3138
    %v3279 = vunpack.c.l.b16 %v3139
    %v3280 = vunpack.c.l.b16 %v3140
    %v3281 = vunpack.c.l.b16 %v3141
    %v3282 = vunpack.c.l.b16 %v3142
    %v3283 = vunpack.c.l.b16 %v3143
    %v3284 = vunpack.c.l.b16 %v3144
    %v3285 = vunpack.c.l.b16 %v3145
    %v3286 = vunpack.c.l.b16 %v3146
    %v3287 = vunpack.c.l.b16 %v3147
    %vm3288 = vcmask 1041409
    %v3289 = vsel %vm3288, %v3225, %v3224
    %vm3290 = vcmask 1042434
    %v3291 = vsel %vm3290, %v3226, %v3289
    %vm3292 = vcmask 1043459
    %v3293 = vsel %vm3292, %v3227, %v3291
    %vm3294 = vcmask 1044484
    %v3295 = vsel %vm3294, %v3228, %v3293
    %vm3296 = vcmask 1045509
    %v3297 = vsel %vm3296, %v3229, %v3295
    %vm3298 = vcmask 1046534
    %v3299 = vsel %vm3298, %v3230, %v3297
    %vm3300 = vcmask 1047559
    %v3301 = vsel %vm3300, %v3231, %v3299
    %v3302 = vsel %vm3288, %v3233, %v3232
    %v3303 = vsel %vm3290, %v3234, %v3302
    %v3304 = vsel %vm3292, %v3235, %v3303
    %v3305 = vsel %vm3294, %v3236, %v3304
    %v3306 = vsel %vm3296, %v3237, %v3305
    %v3307 = vsel %vm3298, %v3238, %v3306
    %v3308 = vsel %vm3300, %v3239, %v3307
    %v3309 = vsel %vm3288, %v3241, %v3240
    %v3310 = vsel %vm3290, %v3242, %v3309
    %v3311 = vsel %vm3292, %v3243, %v3310
    %v3312 = vsel %vm3294, %v3244, %v3311
    %v3313 = vsel %vm3296, %v3245, %v3312
    %v3314 = vsel %vm3298, %v3246, %v3313
    %v3315 = vsel %vm3300, %v3247, %v3314
    %v3316 = vsel %vm3288, %v3249, %v3248
    %v3317 = vsel %vm3290, %v3250, %v3316
    %v3318 = vsel %vm3292, %v3251, %v3317
    %v3319 = vsel %vm3294, %v3252, %v3318
    %v3320 = vsel %vm3296, %v3253, %v3319
    %v3321 = vsel %vm3298, %v3254, %v3320
    %v3322 = vsel %vm3300, %v3255, %v3321
    %v3323 = vsel %vm3288, %v3257, %v3256
    %v3324 = vsel %vm3290, %v3258, %v3323
    %v3325 = vsel %vm3292, %v3259, %v3324
    %v3326 = vsel %vm3294, %v3260, %v3325
    %v3327 = vsel %vm3296, %v3261, %v3326
    %v3328 = vsel %vm3298, %v3262, %v3327
    %v3329 = vsel %vm3300, %v3263, %v3328
    %v3330 = vsel %vm3288, %v3265, %v3264
    %v3331 = vsel %vm3290, %v3266, %v3330
    %v3332 = vsel %vm3292, %v3267, %v3331
    %v3333 = vsel %vm3294, %v3268, %v3332
    %v3334 = vsel %vm3296, %v3269, %v3333
    %v3335 = vsel %vm3298, %v3270, %v3334
    %v3336 = vsel %vm3300, %v3271, %v3335
    %v3337 = vsel %vm3288, %v3273, %v3272
    %v3338 = vsel %vm3290, %v3274, %v3337
    %v3339 = vsel %vm3292, %v3275, %v3338
    %v3340 = vsel %vm3294, %v3276, %v3339
    %v3341 = vsel %vm3296, %v3277, %v3340
    %v3342 = vsel %vm3298, %v3278, %v3341
    %v3343 = vsel %vm3300, %v3279, %v3342
    %v3344 = vsel %vm3288, %v3281, %v3280
    %v3345 = vsel %vm3290, %v3282, %v3344
    %v3346 = vsel %vm3292, %v3283, %v3345
    %v3347 = vsel %vm3294, %v3284, %v3346
    %v3348 = vsel %vm3296, %v3285, %v3347
    %v3349 = vsel %vm3298, %v3286, %v3348
    %v3350 = vsel %vm3300, %v3287, %v3349
    %v3351 = vpack.c.b16 %v3308, %v3301
    %v3352 = vpack.c.b16 %v3322, %v3315
    %v3353 = vpack.c.b16 %v3336, %v3329
    %v3354 = vpack.c.b16 %v3350, %v3343
    %v3363 = vunpack.c.l.b16 %v3148
    %v3364 = vunpack.c.l.b16 %v3149
    %v3365 = vunpack.c.l.b16 %v3150
    %v3366 = vunpack.c.l.b16 %v3151
    %v3367 = vunpack.c.l.b16 %v3152
    %v3368 = vunpack.c.l.b16 %v3153
    %v3369 = vunpack.c.l.b16 %v3154
    %v3370 = vunpack.c.l.b16 %v3155
    %v3371 = vpack.c.b16 %v3364, %v3363
    %v3372 = vpack.c.b16 %v3366, %v3365
    %v3373 = vpack.c.b16 %v3368, %v3367
    %v3374 = vpack.c.b16 %v3370, %v3369
    %v3380 = vsel %vm193, %v3351, 0
    %v3383 = vsel %vm193, %v3352, 0
    %v3386 = vsel %vm193, %v3353, 0
    %v3389 = vsel %vm193, %v3354, 0
    %3391 = vmatpush.bf16.msra.mxu0 0
    %3392 = vmatpush.bf16.msra.mxu0 0
    %3393 = vmatpush.bf16.msra.mxu0 0
    %3394 = vmatpush.bf16.msra.mxu0 0
    %3395 = vmatpush.bf16.msra.mxu0 %v3374
    %3396 = vmatpush.bf16.msra.mxu0 %v3373
    %3397 = vmatpush.bf16.msra.mxu0 %v3372
    %3398 = vmatpush.bf16.msra.mxu0 %v3371
    %3399 = vmatmul.bf16.gmra.mxu0 %v3380
    %v3400 = vpop.f32.mrf.mxu0
    %v3401 = vadd.f32 %v3158, %v3400
    %v3402 = vpop.f32.mrf.mxu0
    %v3403 = vadd.f32 %v3158, %v3402
    %3404 = vmatmul.bf16.gmra.mxu0 %v3383
    %v3405 = vpop.f32.mrf.mxu0
    %v3406 = vadd.f32 %v3158, %v3405
    %v3407 = vpop.f32.mrf.mxu0
    %v3408 = vadd.f32 %v3158, %v3407
    %3409 = vmatmul.bf16.gmra.mxu0 %v3386
    %v3410 = vpop.f32.mrf.mxu0
    %v3411 = vadd.f32 %v3158, %v3410
    %v3412 = vpop.f32.mrf.mxu0
    %v3413 = vadd.f32 %v3158, %v3412
    %3414 = vmatmul.bf16.gmra.mxu0 %v3389
    %v3415 = vpop.f32.mrf.mxu0
    %v3416 = vadd.f32 %v3158, %v3415
    %v3417 = vpop.f32.mrf.mxu0
    %v3418 = vadd.f32 %v3158, %v3417
    %3419 = vdwg.mxu0
    %v3420 = vadd.f32 %v127, %v3401
    %v3421 = vadd.f32 %v128, %v3403
    %v3422 = vadd.f32 %v129, %v3406
    %v3423 = vadd.f32 %v130, %v3408
    %v3424 = vadd.f32 %v131, %v3411
    %v3425 = vadd.f32 %v132, %v3413
    %v3426 = vadd.f32 %v133, %v3416
    %v3427 = vadd.f32 %v134, %v3418
    %v3428 = vld [vmem:[%s7] sm:$0x1]
    %v3429 = vld [vmem:[%s8] sm:$0x1]
    %v3430 = vsel %vm193, %v3420, 0.0
    %3431 = vadd.xlane.f32.xlu0 %v3430
    %v3432 = vpop.xlane.xlu0 %3431
    %v3433 = vsel %vm193, %v3421, 0.0
    %3434 = vadd.xlane.f32.xlu0 %v3433
    %v3435 = vpop.xlane.xlu0 %3434
    %v3436 = vsel %vm193, %v3422, 0.0
    %3437 = vadd.xlane.f32.xlu0 %v3436
    %v3438 = vpop.xlane.xlu0 %3437
    %v3439 = vsel %vm193, %v3423, 0.0
    %3440 = vadd.xlane.f32.xlu0 %v3439
    %v3441 = vpop.xlane.xlu0 %3440
    %v3442 = vsel %vm193, %v3424, 0.0
    %3443 = vadd.xlane.f32.xlu0 %v3442
    %v3444 = vpop.xlane.xlu0 %3443
    %v3445 = vsel %vm193, %v3425, 0.0
    %3446 = vadd.xlane.f32.xlu0 %v3445
    %v3447 = vpop.xlane.xlu0 %3446
    %v3448 = vsel %vm193, %v3426, 0.0
    %3449 = vadd.xlane.f32.xlu0 %v3448
    %v3450 = vpop.xlane.xlu0 %3449
    %v3451 = vsel %vm193, %v3427, 0.0
    %3452 = vadd.xlane.f32.xlu0 %v3451
    %v3453 = vpop.xlane.xlu0 %3452
    %v3454 = vrcp.pop 64.0
    %v3455 = vmul.f32 64.0, %v3454
    %v3456 = vsub.f32 1.0, %v3455
    %v3457 = vmul.f32 %v3454, %v3456
    %v3458 = vadd.f32 %v3454, %v3457
    %vm3459 = vweird.f32 %v3454
    %v3460 = vsel %vm3459, %v3454, %v3458
    %v3461 = vmul.f32 %v3432, %v3460
    %v3462 = vmul.f32 %v3435, %v3460
    %v3463 = vmul.f32 %v3438, %v3460
    %v3464 = vmul.f32 %v3441, %v3460
    %v3465 = vmul.f32 %v3444, %v3460
    %v3466 = vmul.f32 %v3447, %v3460
    %v3467 = vmul.f32 %v3450, %v3460
    %v3468 = vmul.f32 %v3453, %v3460
    %v3469 = vsub.f32 %v3420, %v3461
    %v3470 = vsub.f32 %v3421, %v3462
    %v3471 = vsub.f32 %v3422, %v3463
    %v3472 = vsub.f32 %v3423, %v3464
    %v3473 = vsub.f32 %v3424, %v3465
    %v3474 = vsub.f32 %v3425, %v3466
    %v3475 = vsub.f32 %v3426, %v3467
    %v3476 = vsub.f32 %v3427, %v3468
    %v3477 = vmul.f32 %v3469, %v3469
    %v3478 = vmul.f32 %v3470, %v3470
    %v3479 = vmul.f32 %v3471, %v3471
    %v3480 = vmul.f32 %v3472, %v3472
    %v3481 = vmul.f32 %v3473, %v3473
    %v3482 = vmul.f32 %v3474, %v3474
    %v3483 = vmul.f32 %v3475, %v3475
    %v3484 = vmul.f32 %v3476, %v3476
    %v3485 = vsel %vm193, %v3477, 0.0
    %3486 = vadd.xlane.f32.xlu0 %v3485
    %v3487 = vpop.xlane.xlu0 %3486
    %v3488 = vsel %vm193, %v3478, 0.0
    %3489 = vadd.xlane.f32.xlu0 %v3488
    %v3490 = vpop.xlane.xlu0 %3489
    %v3491 = vsel %vm193, %v3479, 0.0
    %3492 = vadd.xlane.f32.xlu0 %v3491
    %v3493 = vpop.xlane.xlu0 %3492
    %v3494 = vsel %vm193, %v3480, 0.0
    %3495 = vadd.xlane.f32.xlu0 %v3494
    %v3496 = vpop.xlane.xlu0 %3495
    %v3497 = vsel %vm193, %v3481, 0.0
    %3498 = vadd.xlane.f32.xlu0 %v3497
    %v3499 = vpop.xlane.xlu0 %3498
    %v3500 = vsel %vm193, %v3482, 0.0
    %3501 = vadd.xlane.f32.xlu0 %v3500
    %v3502 = vpop.xlane.xlu0 %3501
    %v3503 = vsel %vm193, %v3483, 0.0
    %3504 = vadd.xlane.f32.xlu0 %v3503
    %v3505 = vpop.xlane.xlu0 %3504
    %v3506 = vsel %vm193, %v3484, 0.0
    %3507 = vadd.xlane.f32.xlu0 %v3506
    %v3508 = vpop.xlane.xlu0 %3507
    %v3509 = vmul.f32 %v3487, %v3460
    %v3510 = vmul.f32 %v3490, %v3460
    %v3511 = vmul.f32 %v3493, %v3460
    %v3512 = vmul.f32 %v3496, %v3460
    %v3513 = vmul.f32 %v3499, %v3460
    %v3514 = vmul.f32 %v3502, %v3460
    %v3515 = vmul.f32 %v3505, %v3460
    %v3516 = vmul.f32 %v3508, %v3460
    %v3517 = vadd.f32 %v3509, 1e-05
    %v3518 = vadd.f32 %v3510, 1e-05
    %v3519 = vadd.f32 %v3511, 1e-05
    %v3520 = vadd.f32 %v3512, 1e-05
    %v3521 = vadd.f32 %v3513, 1e-05
    %v3522 = vadd.f32 %v3514, 1e-05
    %v3523 = vadd.f32 %v3515, 1e-05
    %v3524 = vadd.f32 %v3516, 1e-05
    %v3525 = vrsqrt.pop %v3517
    %v3526 = vmul.f32 %v3525, %v3517
    %v3527 = vmul.f32 %v3526, %v3525
    %v3528 = vmul.f32 0.5, %v3527
    %v3529 = vsub.f32 1.5, %v3528
    %v3530 = vmul.f32 %v3525, %v3529
    %vm3531 = vweird.f32 %v3517
    %vm3532 = vweird.f32 %v3525
    %vm3533 = vmor %vm3531, %vm3532
    %v3534 = vsel %vm3533, %v3525, %v3530
    %v3535 = vrsqrt.pop %v3518
    %v3536 = vmul.f32 %v3535, %v3518
    %v3537 = vmul.f32 %v3536, %v3535
    %v3538 = vmul.f32 0.5, %v3537
    %v3539 = vsub.f32 1.5, %v3538
    %v3540 = vmul.f32 %v3535, %v3539
    %vm3541 = vweird.f32 %v3518
    %vm3542 = vweird.f32 %v3535
    %vm3543 = vmor %vm3541, %vm3542
    %v3544 = vsel %vm3543, %v3535, %v3540
    %v3545 = vrsqrt.pop %v3519
    %v3546 = vmul.f32 %v3545, %v3519
    %v3547 = vmul.f32 %v3546, %v3545
    %v3548 = vmul.f32 0.5, %v3547
    %v3549 = vsub.f32 1.5, %v3548
    %v3550 = vmul.f32 %v3545, %v3549
    %vm3551 = vweird.f32 %v3519
    %vm3552 = vweird.f32 %v3545
    %vm3553 = vmor %vm3551, %vm3552
    %v3554 = vsel %vm3553, %v3545, %v3550
    %v3555 = vrsqrt.pop %v3520
    %v3556 = vmul.f32 %v3555, %v3520
    %v3557 = vmul.f32 %v3556, %v3555
    %v3558 = vmul.f32 0.5, %v3557
    %v3559 = vsub.f32 1.5, %v3558
    %v3560 = vmul.f32 %v3555, %v3559
    %vm3561 = vweird.f32 %v3520
    %vm3562 = vweird.f32 %v3555
    %vm3563 = vmor %vm3561, %vm3562
    %v3564 = vsel %vm3563, %v3555, %v3560
    %v3565 = vrsqrt.pop %v3521
    %v3566 = vmul.f32 %v3565, %v3521
    %v3567 = vmul.f32 %v3566, %v3565
    %v3568 = vmul.f32 0.5, %v3567
    %v3569 = vsub.f32 1.5, %v3568
    %v3570 = vmul.f32 %v3565, %v3569
    %vm3571 = vweird.f32 %v3521
    %vm3572 = vweird.f32 %v3565
    %vm3573 = vmor %vm3571, %vm3572
    %v3574 = vsel %vm3573, %v3565, %v3570
    %v3575 = vrsqrt.pop %v3522
    %v3576 = vmul.f32 %v3575, %v3522
    %v3577 = vmul.f32 %v3576, %v3575
    %v3578 = vmul.f32 0.5, %v3577
    %v3579 = vsub.f32 1.5, %v3578
    %v3580 = vmul.f32 %v3575, %v3579
    %vm3581 = vweird.f32 %v3522
    %vm3582 = vweird.f32 %v3575
    %vm3583 = vmor %vm3581, %vm3582
    %v3584 = vsel %vm3583, %v3575, %v3580
    %v3585 = vrsqrt.pop %v3523
    %v3586 = vmul.f32 %v3585, %v3523
    %v3587 = vmul.f32 %v3586, %v3585
    %v3588 = vmul.f32 0.5, %v3587
    %v3589 = vsub.f32 1.5, %v3588
    %v3590 = vmul.f32 %v3585, %v3589
    %vm3591 = vweird.f32 %v3523
    %vm3592 = vweird.f32 %v3585
    %vm3593 = vmor %vm3591, %vm3592
    %v3594 = vsel %vm3593, %v3585, %v3590
    %v3595 = vrsqrt.pop %v3524
    %v3596 = vmul.f32 %v3595, %v3524
    %v3597 = vmul.f32 %v3596, %v3595
    %v3598 = vmul.f32 0.5, %v3597
    %v3599 = vsub.f32 1.5, %v3598
    %v3600 = vmul.f32 %v3595, %v3599
    %vm3601 = vweird.f32 %v3524
    %vm3602 = vweird.f32 %v3595
    %vm3603 = vmor %vm3601, %vm3602
    %v3604 = vsel %vm3603, %v3595, %v3600
    %v3605 = vmul.f32 %v3469, %v3534
    %v3606 = vmul.f32 %v3470, %v3544
    %v3607 = vmul.f32 %v3471, %v3554
    %v3608 = vmul.f32 %v3472, %v3564
    %v3609 = vmul.f32 %v3473, %v3574
    %v3610 = vmul.f32 %v3474, %v3584
    %v3611 = vmul.f32 %v3475, %v3594
    %v3612 = vmul.f32 %v3476, %v3604
    %v3614 = vperm.slane %v3428, 0
    %v3616 = vmul.f32 %v3605, %v3614
    %v3617 = vmul.f32 %v3606, %v3614
    %v3618 = vmul.f32 %v3607, %v3614
    %v3619 = vmul.f32 %v3608, %v3614
    %v3620 = vmul.f32 %v3609, %v3614
    %v3621 = vmul.f32 %v3610, %v3614
    %v3622 = vmul.f32 %v3611, %v3614
    %v3623 = vmul.f32 %v3612, %v3614
    %v3625 = vperm.slane %v3429, 0
    %v3627 = vadd.f32 %v3616, %v3625
    %v3628 = vadd.f32 %v3617, %v3625
    %v3629 = vadd.f32 %v3618, %v3625
    %v3630 = vadd.f32 %v3619, %v3625
    %v3631 = vadd.f32 %v3620, %v3625
    %v3632 = vadd.f32 %v3621, %v3625
    %v3633 = vadd.f32 %v3622, %v3625
    %v3634 = vadd.f32 %v3623, %v3625
    %v3635 = vpack.c.bf16 %v3628, %v3627
    %v3636 = vpack.c.bf16 %v3630, %v3629
    %v3637 = vpack.c.bf16 %v3632, %v3631
    %v3638 = vpack.c.bf16 %v3634, %v3633
    %v3639 = vld [vmem:[%s9] sm:$0xff]
    %v3640 = vld [vmem:[%s9 + $0x8] sm:$0xff]
    %v3641 = vld [vmem:[%s9 + $0x10] sm:$0xff]
    %v3642 = vld [vmem:[%s9 + $0x18] sm:$0xff]
    %v3643 = vld [vmem:[%s9 + $0x20] sm:$0xff]
    %v3644 = vld [vmem:[%s9 + $0x28] sm:$0xff]
    %v3645 = vld [vmem:[%s9 + $0x30] sm:$0xff]
    %v3646 = vld [vmem:[%s9 + $0x38] sm:$0xff]
    %v3647 = vld [vmem:[%s9 + $0x40] sm:$0xff]
    %v3648 = vld [vmem:[%s9 + $0x48] sm:$0xff]
    %v3649 = vld [vmem:[%s9 + $0x50] sm:$0xff]
    %v3650 = vld [vmem:[%s9 + $0x58] sm:$0xff]
    %v3651 = vld [vmem:[%s9 + $0x60] sm:$0xff]
    %v3652 = vld [vmem:[%s9 + $0x68] sm:$0xff]
    %v3653 = vld [vmem:[%s9 + $0x70] sm:$0xff]
    %v3654 = vld [vmem:[%s9 + $0x78] sm:$0xff]
    %v3655 = vld [vmem:[%s9 + $0x80] sm:$0xff]
    %v3656 = vld [vmem:[%s9 + $0x88] sm:$0xff]
    %v3657 = vld [vmem:[%s9 + $0x90] sm:$0xff]
    %v3658 = vld [vmem:[%s9 + $0x98] sm:$0xff]
    %v3659 = vld [vmem:[%s9 + $0xa0] sm:$0xff]
    %v3660 = vld [vmem:[%s9 + $0xa8] sm:$0xff]
    %v3661 = vld [vmem:[%s9 + $0xb0] sm:$0xff]
    %v3662 = vld [vmem:[%s9 + $0xb8] sm:$0xff]
    %v3663 = vld [vmem:[%s9 + $0xc0] sm:$0xff]
    %v3664 = vld [vmem:[%s9 + $0xc8] sm:$0xff]
    %v3665 = vld [vmem:[%s9 + $0xd0] sm:$0xff]
    %v3666 = vld [vmem:[%s9 + $0xd8] sm:$0xff]
    %v3667 = vld [vmem:[%s9 + $0xe0] sm:$0xff]
    %v3668 = vld [vmem:[%s9 + $0xe8] sm:$0xff]
    %v3669 = vld [vmem:[%s9 + $0xf0] sm:$0xff]
    %v3670 = vld [vmem:[%s9 + $0xf8] sm:$0xff]
    %v3671 = vld [vmem:[%s9 + $0x100] sm:$0xff]
    %v3672 = vld [vmem:[%s9 + $0x108] sm:$0xff]
    %v3673 = vld [vmem:[%s9 + $0x110] sm:$0xff]
    %v3674 = vld [vmem:[%s9 + $0x118] sm:$0xff]
    %v3675 = vld [vmem:[%s9 + $0x120] sm:$0xff]
    %v3676 = vld [vmem:[%s9 + $0x128] sm:$0xff]
    %v3677 = vld [vmem:[%s9 + $0x130] sm:$0xff]
    %v3678 = vld [vmem:[%s9 + $0x138] sm:$0xff]
    %v3679 = vld [vmem:[%s9 + $0x140] sm:$0xff]
    %v3680 = vld [vmem:[%s9 + $0x148] sm:$0xff]
    %v3681 = vld [vmem:[%s9 + $0x150] sm:$0xff]
    %v3682 = vld [vmem:[%s9 + $0x158] sm:$0xff]
    %v3683 = vld [vmem:[%s9 + $0x160] sm:$0xff]
    %v3684 = vld [vmem:[%s9 + $0x168] sm:$0xff]
    %v3685 = vld [vmem:[%s9 + $0x170] sm:$0xff]
    %v3686 = vld [vmem:[%s9 + $0x178] sm:$0xff]
    %v3687 = vld [vmem:[%s9 + $0x180] sm:$0xff]
    %v3688 = vld [vmem:[%s9 + $0x188] sm:$0xff]
    %v3689 = vld [vmem:[%s9 + $0x190] sm:$0xff]
    %v3690 = vld [vmem:[%s9 + $0x198] sm:$0xff]
    %v3691 = vld [vmem:[%s9 + $0x1a0] sm:$0xff]
    %v3692 = vld [vmem:[%s9 + $0x1a8] sm:$0xff]
    %v3693 = vld [vmem:[%s9 + $0x1b0] sm:$0xff]
    %v3694 = vld [vmem:[%s9 + $0x1b8] sm:$0xff]
    %v3695 = vld [vmem:[%s9 + $0x1c0] sm:$0xff]
    %v3696 = vld [vmem:[%s9 + $0x1c8] sm:$0xff]
    %v3697 = vld [vmem:[%s9 + $0x1d0] sm:$0xff]
    %v3698 = vld [vmem:[%s9 + $0x1d8] sm:$0xff]
    %v3699 = vld [vmem:[%s9 + $0x1e0] sm:$0xff]
    %v3700 = vld [vmem:[%s9 + $0x1e8] sm:$0xff]
    %v3701 = vld [vmem:[%s9 + $0x1f0] sm:$0xff]
    %v3702 = vld [vmem:[%s9 + $0x1f8] sm:$0xff]
    %v3703 = vld [vmem:[%s10] sm:$0xff]
    %v3704 = vld [vmem:[%s10 + $0x8] sm:$0xff]
    %v3707 = vperm.slane %v3703, 0
    %v3708 = vperm.slane %v3703, 1
    %v3709 = vperm.slane %v3703, 2
    %v3710 = vperm.slane %v3703, 3
    %v3711 = vperm.slane %v3703, 4
    %v3712 = vperm.slane %v3703, 5
    %v3713 = vperm.slane %v3703, 6
    %v3714 = vperm.slane %v3703, 7
    %v3715 = vperm.slane %v3704, 0
    %v3716 = vperm.slane %v3704, 1
    %v3717 = vperm.slane %v3704, 2
    %v3718 = vperm.slane %v3704, 3
    %v3719 = vperm.slane %v3704, 4
    %v3720 = vperm.slane %v3704, 5
    %v3721 = vperm.slane %v3704, 6
    %v3722 = vperm.slane %v3704, 7
    %v3803 = vunpack.c.l.b16 %v3639
    %v3804 = vunpack.c.h.b16 %v3639
    %v3805 = vunpack.c.l.b16 %v3640
    %v3806 = vunpack.c.h.b16 %v3640
    %v3807 = vunpack.c.l.b16 %v3641
    %v3808 = vunpack.c.h.b16 %v3641
    %v3809 = vunpack.c.l.b16 %v3642
    %v3810 = vunpack.c.h.b16 %v3642
    %v3811 = vunpack.c.l.b16 %v3643
    %v3812 = vunpack.c.h.b16 %v3643
    %v3813 = vunpack.c.l.b16 %v3644
    %v3814 = vunpack.c.h.b16 %v3644
    %v3815 = vunpack.c.l.b16 %v3645
    %v3816 = vunpack.c.h.b16 %v3645
    %v3817 = vunpack.c.l.b16 %v3646
    %v3818 = vunpack.c.h.b16 %v3646
    %v3819 = vunpack.c.l.b16 %v3647
    %v3820 = vunpack.c.h.b16 %v3647
    %v3821 = vunpack.c.l.b16 %v3648
    %v3822 = vunpack.c.h.b16 %v3648
    %v3823 = vunpack.c.l.b16 %v3649
    %v3824 = vunpack.c.h.b16 %v3649
    %v3825 = vunpack.c.l.b16 %v3650
    %v3826 = vunpack.c.h.b16 %v3650
    %v3827 = vunpack.c.l.b16 %v3651
    %v3828 = vunpack.c.h.b16 %v3651
    %v3829 = vunpack.c.l.b16 %v3652
    %v3830 = vunpack.c.h.b16 %v3652
    %v3831 = vunpack.c.l.b16 %v3653
    %v3832 = vunpack.c.h.b16 %v3653
    %v3833 = vunpack.c.l.b16 %v3654
    %v3834 = vunpack.c.h.b16 %v3654
    %v3835 = vunpack.c.l.b16 %v3655
    %v3836 = vunpack.c.h.b16 %v3655
    %v3837 = vunpack.c.l.b16 %v3656
    %v3838 = vunpack.c.h.b16 %v3656
    %v3839 = vunpack.c.l.b16 %v3657
    %v3840 = vunpack.c.h.b16 %v3657
    %v3841 = vunpack.c.l.b16 %v3658
    %v3842 = vunpack.c.h.b16 %v3658
    %v3843 = vunpack.c.l.b16 %v3659
    %v3844 = vunpack.c.h.b16 %v3659
    %v3845 = vunpack.c.l.b16 %v3660
    %v3846 = vunpack.c.h.b16 %v3660
    %v3847 = vunpack.c.l.b16 %v3661
    %v3848 = vunpack.c.h.b16 %v3661
    %v3849 = vunpack.c.l.b16 %v3662
    %v3850 = vunpack.c.h.b16 %v3662
    %v3851 = vunpack.c.l.b16 %v3663
    %v3852 = vunpack.c.h.b16 %v3663
    %v3853 = vunpack.c.l.b16 %v3664
    %v3854 = vunpack.c.h.b16 %v3664
    %v3855 = vunpack.c.l.b16 %v3665
    %v3856 = vunpack.c.h.b16 %v3665
    %v3857 = vunpack.c.l.b16 %v3666
    %v3858 = vunpack.c.h.b16 %v3666
    %v3859 = vunpack.c.l.b16 %v3667
    %v3860 = vunpack.c.h.b16 %v3667
    %v3861 = vunpack.c.l.b16 %v3668
    %v3862 = vunpack.c.h.b16 %v3668
    %v3863 = vunpack.c.l.b16 %v3669
    %v3864 = vunpack.c.h.b16 %v3669
    %v3865 = vunpack.c.l.b16 %v3670
    %v3866 = vunpack.c.h.b16 %v3670
    %v3867 = vunpack.c.l.b16 %v3671
    %v3868 = vunpack.c.h.b16 %v3671
    %v3869 = vunpack.c.l.b16 %v3672
    %v3870 = vunpack.c.h.b16 %v3672
    %v3871 = vunpack.c.l.b16 %v3673
    %v3872 = vunpack.c.h.b16 %v3673
    %v3873 = vunpack.c.l.b16 %v3674
    %v3874 = vunpack.c.h.b16 %v3674
    %v3875 = vunpack.c.l.b16 %v3675
    %v3876 = vunpack.c.h.b16 %v3675
    %v3877 = vunpack.c.l.b16 %v3676
    %v3878 = vunpack.c.h.b16 %v3676
    %v3879 = vunpack.c.l.b16 %v3677
    %v3880 = vunpack.c.h.b16 %v3677
    %v3881 = vunpack.c.l.b16 %v3678
    %v3882 = vunpack.c.h.b16 %v3678
    %v3883 = vunpack.c.l.b16 %v3679
    %v3884 = vunpack.c.h.b16 %v3679
    %v3885 = vunpack.c.l.b16 %v3680
    %v3886 = vunpack.c.h.b16 %v3680
    %v3887 = vunpack.c.l.b16 %v3681
    %v3888 = vunpack.c.h.b16 %v3681
    %v3889 = vunpack.c.l.b16 %v3682
    %v3890 = vunpack.c.h.b16 %v3682
    %v3891 = vunpack.c.l.b16 %v3683
    %v3892 = vunpack.c.h.b16 %v3683
    %v3893 = vunpack.c.l.b16 %v3684
    %v3894 = vunpack.c.h.b16 %v3684
    %v3895 = vunpack.c.l.b16 %v3685
    %v3896 = vunpack.c.h.b16 %v3685
    %v3897 = vunpack.c.l.b16 %v3686
    %v3898 = vunpack.c.h.b16 %v3686
    %v3899 = vunpack.c.l.b16 %v3687
    %v3900 = vunpack.c.h.b16 %v3687
    %v3901 = vunpack.c.l.b16 %v3688
    %v3902 = vunpack.c.h.b16 %v3688
    %v3903 = vunpack.c.l.b16 %v3689
    %v3904 = vunpack.c.h.b16 %v3689
    %v3905 = vunpack.c.l.b16 %v3690
    %v3906 = vunpack.c.h.b16 %v3690
    %v3907 = vunpack.c.l.b16 %v3691
    %v3908 = vunpack.c.h.b16 %v3691
    %v3909 = vunpack.c.l.b16 %v3692
    %v3910 = vunpack.c.h.b16 %v3692
    %v3911 = vunpack.c.l.b16 %v3693
    %v3912 = vunpack.c.h.b16 %v3693
    %v3913 = vunpack.c.l.b16 %v3694
    %v3914 = vunpack.c.h.b16 %v3694
    %v3915 = vunpack.c.l.b16 %v3695
    %v3916 = vunpack.c.h.b16 %v3695
    %v3917 = vunpack.c.l.b16 %v3696
    %v3918 = vunpack.c.h.b16 %v3696
    %v3919 = vunpack.c.l.b16 %v3697
    %v3920 = vunpack.c.h.b16 %v3697
    %v3921 = vunpack.c.l.b16 %v3698
    %v3922 = vunpack.c.h.b16 %v3698
    %v3923 = vunpack.c.l.b16 %v3699
    %v3924 = vunpack.c.h.b16 %v3699
    %v3925 = vunpack.c.l.b16 %v3700
    %v3926 = vunpack.c.h.b16 %v3700
    %v3927 = vunpack.c.l.b16 %v3701
    %v3928 = vunpack.c.h.b16 %v3701
    %v3929 = vunpack.c.l.b16 %v3702
    %v3930 = vunpack.c.h.b16 %v3702
    %v3931 = vpack.c.b16 %v3819, %v3803
    %v3932 = vpack.c.b16 %v3820, %v3804
    %v3933 = vpack.c.b16 %v3821, %v3805
    %v3934 = vpack.c.b16 %v3822, %v3806
    %v3935 = vpack.c.b16 %v3823, %v3807
    %v3936 = vpack.c.b16 %v3824, %v3808
    %v3937 = vpack.c.b16 %v3825, %v3809
    %v3938 = vpack.c.b16 %v3826, %v3810
    %v3939 = vpack.c.b16 %v3827, %v3811
    %v3940 = vpack.c.b16 %v3828, %v3812
    %v3941 = vpack.c.b16 %v3829, %v3813
    %v3942 = vpack.c.b16 %v3830, %v3814
    %v3943 = vpack.c.b16 %v3831, %v3815
    %v3944 = vpack.c.b16 %v3832, %v3816
    %v3945 = vpack.c.b16 %v3833, %v3817
    %v3946 = vpack.c.b16 %v3834, %v3818
    %v3947 = vpack.c.b16 %v3851, %v3835
    %v3948 = vpack.c.b16 %v3852, %v3836
    %v3949 = vpack.c.b16 %v3853, %v3837
    %v3950 = vpack.c.b16 %v3854, %v3838
    %v3951 = vpack.c.b16 %v3855, %v3839
    %v3952 = vpack.c.b16 %v3856, %v3840
    %v3953 = vpack.c.b16 %v3857, %v3841
    %v3954 = vpack.c.b16 %v3858, %v3842
    %v3955 = vpack.c.b16 %v3859, %v3843
    %v3956 = vpack.c.b16 %v3860, %v3844
    %v3957 = vpack.c.b16 %v3861, %v3845
    %v3958 = vpack.c.b16 %v3862, %v3846
    %v3959 = vpack.c.b16 %v3863, %v3847
    %v3960 = vpack.c.b16 %v3864, %v3848
    %v3961 = vpack.c.b16 %v3865, %v3849
    %v3962 = vpack.c.b16 %v3866, %v3850
    %v3963 = vpack.c.b16 %v3883, %v3867
    %v3964 = vpack.c.b16 %v3884, %v3868
    %v3965 = vpack.c.b16 %v3885, %v3869
    %v3966 = vpack.c.b16 %v3886, %v3870
    %v3967 = vpack.c.b16 %v3887, %v3871
    %v3968 = vpack.c.b16 %v3888, %v3872
    %v3969 = vpack.c.b16 %v3889, %v3873
    %v3970 = vpack.c.b16 %v3890, %v3874
    %v3971 = vpack.c.b16 %v3891, %v3875
    %v3972 = vpack.c.b16 %v3892, %v3876
    %v3973 = vpack.c.b16 %v3893, %v3877
    %v3974 = vpack.c.b16 %v3894, %v3878
    %v3975 = vpack.c.b16 %v3895, %v3879
    %v3976 = vpack.c.b16 %v3896, %v3880
    %v3977 = vpack.c.b16 %v3897, %v3881
    %v3978 = vpack.c.b16 %v3898, %v3882
    %v3979 = vpack.c.b16 %v3915, %v3899
    %v3980 = vpack.c.b16 %v3916, %v3900
    %v3981 = vpack.c.b16 %v3917, %v3901
    %v3982 = vpack.c.b16 %v3918, %v3902
    %v3983 = vpack.c.b16 %v3919, %v3903
    %v3984 = vpack.c.b16 %v3920, %v3904
    %v3985 = vpack.c.b16 %v3921, %v3905
    %v3986 = vpack.c.b16 %v3922, %v3906
    %v3987 = vpack.c.b16 %v3923, %v3907
    %v3988 = vpack.c.b16 %v3924, %v3908
    %v3989 = vpack.c.b16 %v3925, %v3909
    %v3990 = vpack.c.b16 %v3926, %v3910
    %v3991 = vpack.c.b16 %v3927, %v3911
    %v3992 = vpack.c.b16 %v3928, %v3912
    %v3993 = vpack.c.b16 %v3929, %v3913
    %v3994 = vpack.c.b16 %v3930, %v3914
    %v4060 = vsel %vm193, %v3635, 0
    %v4063 = vsel %vm193, %v3636, 0
    %v4066 = vsel %vm193, %v3637, 0
    %v4069 = vsel %vm193, %v3638, 0
    %4071 = vmatpush.bf16.msra.mxu0 0
    %4072 = vmatpush.bf16.msra.mxu0 0
    %4073 = vmatpush.bf16.msra.mxu0 0
    %4074 = vmatpush.bf16.msra.mxu0 0
    %4075 = vmatpush.bf16.msra.mxu0 %v3979
    %4076 = vmatpush.bf16.msra.mxu0 %v3963
    %4077 = vmatpush.bf16.msra.mxu0 %v3947
    %4078 = vmatpush.bf16.msra.mxu0 %v3931
    %4079 = vmatmul.bf16.gmra.mxu0 %v4060
    %v4080 = vpop.f32.mrf.mxu0
    %v4081 = vadd.f32 %v3707, %v4080
    %v4082 = vpop.f32.mrf.mxu0
    %v4083 = vadd.f32 %v3707, %v4082
    %4084 = vmatmul.bf16.gmra.mxu0 %v4063
    %v4085 = vpop.f32.mrf.mxu0
    %v4086 = vadd.f32 %v3707, %v4085
    %v4087 = vpop.f32.mrf.mxu0
    %v4088 = vadd.f32 %v3707, %v4087
    %4089 = vmatmul.bf16.gmra.mxu0 %v4066
    %v4090 = vpop.f32.mrf.mxu0
    %v4091 = vadd.f32 %v3707, %v4090
    %v4092 = vpop.f32.mrf.mxu0
    %v4093 = vadd.f32 %v3707, %v4092
    %4094 = vmatmul.bf16.gmra.mxu0 %v4069
    %v4095 = vpop.f32.mrf.mxu0
    %v4096 = vadd.f32 %v3707, %v4095
    %v4097 = vpop.f32.mrf.mxu0
    %v4098 = vadd.f32 %v3707, %v4097
    %4099 = vdwg.mxu0
    %4100 = vmatpush.bf16.msra.mxu0 0
    %4101 = vmatpush.bf16.msra.mxu0 0
    %4102 = vmatpush.bf16.msra.mxu0 0
    %4103 = vmatpush.bf16.msra.mxu0 0
    %4104 = vmatpush.bf16.msra.mxu0 %v3980
    %4105 = vmatpush.bf16.msra.mxu0 %v3964
    %4106 = vmatpush.bf16.msra.mxu0 %v3948
    %4107 = vmatpush.bf16.msra.mxu0 %v3932
    %4108 = vmatmul.bf16.gmra.mxu0 %v4060
    %v4109 = vpop.f32.mrf.mxu0
    %v4110 = vadd.f32 %v3708, %v4109
    %v4111 = vpop.f32.mrf.mxu0
    %v4112 = vadd.f32 %v3708, %v4111
    %4113 = vmatmul.bf16.gmra.mxu0 %v4063
    %v4114 = vpop.f32.mrf.mxu0
    %v4115 = vadd.f32 %v3708, %v4114
    %v4116 = vpop.f32.mrf.mxu0
    %v4117 = vadd.f32 %v3708, %v4116
    %4118 = vmatmul.bf16.gmra.mxu0 %v4066
    %v4119 = vpop.f32.mrf.mxu0
    %v4120 = vadd.f32 %v3708, %v4119
    %v4121 = vpop.f32.mrf.mxu0
    %v4122 = vadd.f32 %v3708, %v4121
    %4123 = vmatmul.bf16.gmra.mxu0 %v4069
    %v4124 = vpop.f32.mrf.mxu0
    %v4125 = vadd.f32 %v3708, %v4124
    %v4126 = vpop.f32.mrf.mxu0
    %v4127 = vadd.f32 %v3708, %v4126
    %4128 = vdwg.mxu0
    %4129 = vmatpush.bf16.msra.mxu0 0
    %4130 = vmatpush.bf16.msra.mxu0 0
    %4131 = vmatpush.bf16.msra.mxu0 0
    %4132 = vmatpush.bf16.msra.mxu0 0
    %4133 = vmatpush.bf16.msra.mxu0 %v3981
    %4134 = vmatpush.bf16.msra.mxu0 %v3965
    %4135 = vmatpush.bf16.msra.mxu0 %v3949
    %4136 = vmatpush.bf16.msra.mxu0 %v3933
    %4137 = vmatmul.bf16.gmra.mxu0 %v4060
    %v4138 = vpop.f32.mrf.mxu0
    %v4139 = vadd.f32 %v3709, %v4138
    %v4140 = vpop.f32.mrf.mxu0
    %v4141 = vadd.f32 %v3709, %v4140
    %4142 = vmatmul.bf16.gmra.mxu0 %v4063
    %v4143 = vpop.f32.mrf.mxu0
    %v4144 = vadd.f32 %v3709, %v4143
    %v4145 = vpop.f32.mrf.mxu0
    %v4146 = vadd.f32 %v3709, %v4145
    %4147 = vmatmul.bf16.gmra.mxu0 %v4066
    %v4148 = vpop.f32.mrf.mxu0
    %v4149 = vadd.f32 %v3709, %v4148
    %v4150 = vpop.f32.mrf.mxu0
    %v4151 = vadd.f32 %v3709, %v4150
    %4152 = vmatmul.bf16.gmra.mxu0 %v4069
    %v4153 = vpop.f32.mrf.mxu0
    %v4154 = vadd.f32 %v3709, %v4153
    %v4155 = vpop.f32.mrf.mxu0
    %v4156 = vadd.f32 %v3709, %v4155
    %4157 = vdwg.mxu0
    %4158 = vmatpush.bf16.msra.mxu0 0
    %4159 = vmatpush.bf16.msra.mxu0 0
    %4160 = vmatpush.bf16.msra.mxu0 0
    %4161 = vmatpush.bf16.msra.mxu0 0
    %4162 = vmatpush.bf16.msra.mxu0 %v3982
    %4163 = vmatpush.bf16.msra.mxu0 %v3966
    %4164 = vmatpush.bf16.msra.mxu0 %v3950
    %4165 = vmatpush.bf16.msra.mxu0 %v3934
    %4166 = vmatmul.bf16.gmra.mxu0 %v4060
    %v4167 = vpop.f32.mrf.mxu0
    %v4168 = vadd.f32 %v3710, %v4167
    %v4169 = vpop.f32.mrf.mxu0
    %v4170 = vadd.f32 %v3710, %v4169
    %4171 = vmatmul.bf16.gmra.mxu0 %v4063
    %v4172 = vpop.f32.mrf.mxu0
    %v4173 = vadd.f32 %v3710, %v4172
    %v4174 = vpop.f32.mrf.mxu0
    %v4175 = vadd.f32 %v3710, %v4174
    %4176 = vmatmul.bf16.gmra.mxu0 %v4066
    %v4177 = vpop.f32.mrf.mxu0
    %v4178 = vadd.f32 %v3710, %v4177
    %v4179 = vpop.f32.mrf.mxu0
    %v4180 = vadd.f32 %v3710, %v4179
    %4181 = vmatmul.bf16.gmra.mxu0 %v4069
    %v4182 = vpop.f32.mrf.mxu0
    %v4183 = vadd.f32 %v3710, %v4182
    %v4184 = vpop.f32.mrf.mxu0
    %v4185 = vadd.f32 %v3710, %v4184
    %4186 = vdwg.mxu0
    %4187 = vmatpush.bf16.msra.mxu0 0
    %4188 = vmatpush.bf16.msra.mxu0 0
    %4189 = vmatpush.bf16.msra.mxu0 0
    %4190 = vmatpush.bf16.msra.mxu0 0
    %4191 = vmatpush.bf16.msra.mxu0 %v3983
    %4192 = vmatpush.bf16.msra.mxu0 %v3967
    %4193 = vmatpush.bf16.msra.mxu0 %v3951
    %4194 = vmatpush.bf16.msra.mxu0 %v3935
    %4195 = vmatmul.bf16.gmra.mxu0 %v4060
    %v4196 = vpop.f32.mrf.mxu0
    %v4197 = vadd.f32 %v3711, %v4196
    %v4198 = vpop.f32.mrf.mxu0
    %v4199 = vadd.f32 %v3711, %v4198
    %4200 = vmatmul.bf16.gmra.mxu0 %v4063
    %v4201 = vpop.f32.mrf.mxu0
    %v4202 = vadd.f32 %v3711, %v4201
    %v4203 = vpop.f32.mrf.mxu0
    %v4204 = vadd.f32 %v3711, %v4203
    %4205 = vmatmul.bf16.gmra.mxu0 %v4066
    %v4206 = vpop.f32.mrf.mxu0
    %v4207 = vadd.f32 %v3711, %v4206
    %v4208 = vpop.f32.mrf.mxu0
    %v4209 = vadd.f32 %v3711, %v4208
    %4210 = vmatmul.bf16.gmra.mxu0 %v4069
    %v4211 = vpop.f32.mrf.mxu0
    %v4212 = vadd.f32 %v3711, %v4211
    %v4213 = vpop.f32.mrf.mxu0
    %v4214 = vadd.f32 %v3711, %v4213
    %4215 = vdwg.mxu0
    %4216 = vmatpush.bf16.msra.mxu0 0
    %4217 = vmatpush.bf16.msra.mxu0 0
    %4218 = vmatpush.bf16.msra.mxu0 0
    %4219 = vmatpush.bf16.msra.mxu0 0
    %4220 = vmatpush.bf16.msra.mxu0 %v3984
    %4221 = vmatpush.bf16.msra.mxu0 %v3968
    %4222 = vmatpush.bf16.msra.mxu0 %v3952
    %4223 = vmatpush.bf16.msra.mxu0 %v3936
    %4224 = vmatmul.bf16.gmra.mxu0 %v4060
    %v4225 = vpop.f32.mrf.mxu0
    %v4226 = vadd.f32 %v3712, %v4225
    %v4227 = vpop.f32.mrf.mxu0
    %v4228 = vadd.f32 %v3712, %v4227
    %4229 = vmatmul.bf16.gmra.mxu0 %v4063
    %v4230 = vpop.f32.mrf.mxu0
    %v4231 = vadd.f32 %v3712, %v4230
    %v4232 = vpop.f32.mrf.mxu0
    %v4233 = vadd.f32 %v3712, %v4232
    %4234 = vmatmul.bf16.gmra.mxu0 %v4066
    %v4235 = vpop.f32.mrf.mxu0
    %v4236 = vadd.f32 %v3712, %v4235
    %v4237 = vpop.f32.mrf.mxu0
    %v4238 = vadd.f32 %v3712, %v4237
    %4239 = vmatmul.bf16.gmra.mxu0 %v4069
    %v4240 = vpop.f32.mrf.mxu0
    %v4241 = vadd.f32 %v3712, %v4240
    %v4242 = vpop.f32.mrf.mxu0
    %v4243 = vadd.f32 %v3712, %v4242
    %4244 = vdwg.mxu0
    %4245 = vmatpush.bf16.msra.mxu0 0
    %4246 = vmatpush.bf16.msra.mxu0 0
    %4247 = vmatpush.bf16.msra.mxu0 0
    %4248 = vmatpush.bf16.msra.mxu0 0
    %4249 = vmatpush.bf16.msra.mxu0 %v3985
    %4250 = vmatpush.bf16.msra.mxu0 %v3969
    %4251 = vmatpush.bf16.msra.mxu0 %v3953
    %4252 = vmatpush.bf16.msra.mxu0 %v3937
    %4253 = vmatmul.bf16.gmra.mxu0 %v4060
    %v4254 = vpop.f32.mrf.mxu0
    %v4255 = vadd.f32 %v3713, %v4254
    %v4256 = vpop.f32.mrf.mxu0
    %v4257 = vadd.f32 %v3713, %v4256
    %4258 = vmatmul.bf16.gmra.mxu0 %v4063
    %v4259 = vpop.f32.mrf.mxu0
    %v4260 = vadd.f32 %v3713, %v4259
    %v4261 = vpop.f32.mrf.mxu0
    %v4262 = vadd.f32 %v3713, %v4261
    %4263 = vmatmul.bf16.gmra.mxu0 %v4066
    %v4264 = vpop.f32.mrf.mxu0
    %v4265 = vadd.f32 %v3713, %v4264
    %v4266 = vpop.f32.mrf.mxu0
    %v4267 = vadd.f32 %v3713, %v4266
    %4268 = vmatmul.bf16.gmra.mxu0 %v4069
    %v4269 = vpop.f32.mrf.mxu0
    %v4270 = vadd.f32 %v3713, %v4269
    %v4271 = vpop.f32.mrf.mxu0
    %v4272 = vadd.f32 %v3713, %v4271
    %4273 = vdwg.mxu0
    %4274 = vmatpush.bf16.msra.mxu0 0
    %4275 = vmatpush.bf16.msra.mxu0 0
    %4276 = vmatpush.bf16.msra.mxu0 0
    %4277 = vmatpush.bf16.msra.mxu0 0
    %4278 = vmatpush.bf16.msra.mxu0 %v3986
    %4279 = vmatpush.bf16.msra.mxu0 %v3970
    %4280 = vmatpush.bf16.msra.mxu0 %v3954
    %4281 = vmatpush.bf16.msra.mxu0 %v3938
    %4282 = vmatmul.bf16.gmra.mxu0 %v4060
    %v4283 = vpop.f32.mrf.mxu0
    %v4284 = vadd.f32 %v3714, %v4283
    %v4285 = vpop.f32.mrf.mxu0
    %v4286 = vadd.f32 %v3714, %v4285
    %4287 = vmatmul.bf16.gmra.mxu0 %v4063
    %v4288 = vpop.f32.mrf.mxu0
    %v4289 = vadd.f32 %v3714, %v4288
    %v4290 = vpop.f32.mrf.mxu0
    %v4291 = vadd.f32 %v3714, %v4290
    %4292 = vmatmul.bf16.gmra.mxu0 %v4066
    %v4293 = vpop.f32.mrf.mxu0
    %v4294 = vadd.f32 %v3714, %v4293
    %v4295 = vpop.f32.mrf.mxu0
    %v4296 = vadd.f32 %v3714, %v4295
    %4297 = vmatmul.bf16.gmra.mxu0 %v4069
    %v4298 = vpop.f32.mrf.mxu0
    %v4299 = vadd.f32 %v3714, %v4298
    %v4300 = vpop.f32.mrf.mxu0
    %v4301 = vadd.f32 %v3714, %v4300
    %4302 = vdwg.mxu0
    %4303 = vmatpush.bf16.msra.mxu0 0
    %4304 = vmatpush.bf16.msra.mxu0 0
    %4305 = vmatpush.bf16.msra.mxu0 0
    %4306 = vmatpush.bf16.msra.mxu0 0
    %4307 = vmatpush.bf16.msra.mxu0 %v3987
    %4308 = vmatpush.bf16.msra.mxu0 %v3971
    %4309 = vmatpush.bf16.msra.mxu0 %v3955
    %4310 = vmatpush.bf16.msra.mxu0 %v3939
    %4311 = vmatmul.bf16.gmra.mxu0 %v4060
    %v4312 = vpop.f32.mrf.mxu0
    %v4313 = vadd.f32 %v3715, %v4312
    %v4314 = vpop.f32.mrf.mxu0
    %v4315 = vadd.f32 %v3715, %v4314
    %4316 = vmatmul.bf16.gmra.mxu0 %v4063
    %v4317 = vpop.f32.mrf.mxu0
    %v4318 = vadd.f32 %v3715, %v4317
    %v4319 = vpop.f32.mrf.mxu0
    %v4320 = vadd.f32 %v3715, %v4319
    %4321 = vmatmul.bf16.gmra.mxu0 %v4066
    %v4322 = vpop.f32.mrf.mxu0
    %v4323 = vadd.f32 %v3715, %v4322
    %v4324 = vpop.f32.mrf.mxu0
    %v4325 = vadd.f32 %v3715, %v4324
    %4326 = vmatmul.bf16.gmra.mxu0 %v4069
    %v4327 = vpop.f32.mrf.mxu0
    %v4328 = vadd.f32 %v3715, %v4327
    %v4329 = vpop.f32.mrf.mxu0
    %v4330 = vadd.f32 %v3715, %v4329
    %4331 = vdwg.mxu0
    %4332 = vmatpush.bf16.msra.mxu0 0
    %4333 = vmatpush.bf16.msra.mxu0 0
    %4334 = vmatpush.bf16.msra.mxu0 0
    %4335 = vmatpush.bf16.msra.mxu0 0
    %4336 = vmatpush.bf16.msra.mxu0 %v3988
    %4337 = vmatpush.bf16.msra.mxu0 %v3972
    %4338 = vmatpush.bf16.msra.mxu0 %v3956
    %4339 = vmatpush.bf16.msra.mxu0 %v3940
    %4340 = vmatmul.bf16.gmra.mxu0 %v4060
    %v4341 = vpop.f32.mrf.mxu0
    %v4342 = vadd.f32 %v3716, %v4341
    %v4343 = vpop.f32.mrf.mxu0
    %v4344 = vadd.f32 %v3716, %v4343
    %4345 = vmatmul.bf16.gmra.mxu0 %v4063
    %v4346 = vpop.f32.mrf.mxu0
    %v4347 = vadd.f32 %v3716, %v4346
    %v4348 = vpop.f32.mrf.mxu0
    %v4349 = vadd.f32 %v3716, %v4348
    %4350 = vmatmul.bf16.gmra.mxu0 %v4066
    %v4351 = vpop.f32.mrf.mxu0
    %v4352 = vadd.f32 %v3716, %v4351
    %v4353 = vpop.f32.mrf.mxu0
    %v4354 = vadd.f32 %v3716, %v4353
    %4355 = vmatmul.bf16.gmra.mxu0 %v4069
    %v4356 = vpop.f32.mrf.mxu0
    %v4357 = vadd.f32 %v3716, %v4356
    %v4358 = vpop.f32.mrf.mxu0
    %v4359 = vadd.f32 %v3716, %v4358
    %4360 = vdwg.mxu0
    %4361 = vmatpush.bf16.msra.mxu0 0
    %4362 = vmatpush.bf16.msra.mxu0 0
    %4363 = vmatpush.bf16.msra.mxu0 0
    %4364 = vmatpush.bf16.msra.mxu0 0
    %4365 = vmatpush.bf16.msra.mxu0 %v3989
    %4366 = vmatpush.bf16.msra.mxu0 %v3973
    %4367 = vmatpush.bf16.msra.mxu0 %v3957
    %4368 = vmatpush.bf16.msra.mxu0 %v3941
    %4369 = vmatmul.bf16.gmra.mxu0 %v4060
    %v4370 = vpop.f32.mrf.mxu0
    %v4371 = vadd.f32 %v3717, %v4370
    %v4372 = vpop.f32.mrf.mxu0
    %v4373 = vadd.f32 %v3717, %v4372
    %4374 = vmatmul.bf16.gmra.mxu0 %v4063
    %v4375 = vpop.f32.mrf.mxu0
    %v4376 = vadd.f32 %v3717, %v4375
    %v4377 = vpop.f32.mrf.mxu0
    %v4378 = vadd.f32 %v3717, %v4377
    %4379 = vmatmul.bf16.gmra.mxu0 %v4066
    %v4380 = vpop.f32.mrf.mxu0
    %v4381 = vadd.f32 %v3717, %v4380
    %v4382 = vpop.f32.mrf.mxu0
    %v4383 = vadd.f32 %v3717, %v4382
    %4384 = vmatmul.bf16.gmra.mxu0 %v4069
    %v4385 = vpop.f32.mrf.mxu0
    %v4386 = vadd.f32 %v3717, %v4385
    %v4387 = vpop.f32.mrf.mxu0
    %v4388 = vadd.f32 %v3717, %v4387
    %4389 = vdwg.mxu0
    %4390 = vmatpush.bf16.msra.mxu0 0
    %4391 = vmatpush.bf16.msra.mxu0 0
    %4392 = vmatpush.bf16.msra.mxu0 0
    %4393 = vmatpush.bf16.msra.mxu0 0
    %4394 = vmatpush.bf16.msra.mxu0 %v3990
    %4395 = vmatpush.bf16.msra.mxu0 %v3974
    %4396 = vmatpush.bf16.msra.mxu0 %v3958
    %4397 = vmatpush.bf16.msra.mxu0 %v3942
    %4398 = vmatmul.bf16.gmra.mxu0 %v4060
    %v4399 = vpop.f32.mrf.mxu0
    %v4400 = vadd.f32 %v3718, %v4399
    %v4401 = vpop.f32.mrf.mxu0
    %v4402 = vadd.f32 %v3718, %v4401
    %4403 = vmatmul.bf16.gmra.mxu0 %v4063
    %v4404 = vpop.f32.mrf.mxu0
    %v4405 = vadd.f32 %v3718, %v4404
    %v4406 = vpop.f32.mrf.mxu0
    %v4407 = vadd.f32 %v3718, %v4406
    %4408 = vmatmul.bf16.gmra.mxu0 %v4066
    %v4409 = vpop.f32.mrf.mxu0
    %v4410 = vadd.f32 %v3718, %v4409
    %v4411 = vpop.f32.mrf.mxu0
    %v4412 = vadd.f32 %v3718, %v4411
    %4413 = vmatmul.bf16.gmra.mxu0 %v4069
    %v4414 = vpop.f32.mrf.mxu0
    %v4415 = vadd.f32 %v3718, %v4414
    %v4416 = vpop.f32.mrf.mxu0
    %v4417 = vadd.f32 %v3718, %v4416
    %4418 = vdwg.mxu0
    %4419 = vmatpush.bf16.msra.mxu0 0
    %4420 = vmatpush.bf16.msra.mxu0 0
    %4421 = vmatpush.bf16.msra.mxu0 0
    %4422 = vmatpush.bf16.msra.mxu0 0
    %4423 = vmatpush.bf16.msra.mxu0 %v3991
    %4424 = vmatpush.bf16.msra.mxu0 %v3975
    %4425 = vmatpush.bf16.msra.mxu0 %v3959
    %4426 = vmatpush.bf16.msra.mxu0 %v3943
    %4427 = vmatmul.bf16.gmra.mxu0 %v4060
    %v4428 = vpop.f32.mrf.mxu0
    %v4429 = vadd.f32 %v3719, %v4428
    %v4430 = vpop.f32.mrf.mxu0
    %v4431 = vadd.f32 %v3719, %v4430
    %4432 = vmatmul.bf16.gmra.mxu0 %v4063
    %v4433 = vpop.f32.mrf.mxu0
    %v4434 = vadd.f32 %v3719, %v4433
    %v4435 = vpop.f32.mrf.mxu0
    %v4436 = vadd.f32 %v3719, %v4435
    %4437 = vmatmul.bf16.gmra.mxu0 %v4066
    %v4438 = vpop.f32.mrf.mxu0
    %v4439 = vadd.f32 %v3719, %v4438
    %v4440 = vpop.f32.mrf.mxu0
    %v4441 = vadd.f32 %v3719, %v4440
    %4442 = vmatmul.bf16.gmra.mxu0 %v4069
    %v4443 = vpop.f32.mrf.mxu0
    %v4444 = vadd.f32 %v3719, %v4443
    %v4445 = vpop.f32.mrf.mxu0
    %v4446 = vadd.f32 %v3719, %v4445
    %4447 = vdwg.mxu0
    %4448 = vmatpush.bf16.msra.mxu0 0
    %4449 = vmatpush.bf16.msra.mxu0 0
    %4450 = vmatpush.bf16.msra.mxu0 0
    %4451 = vmatpush.bf16.msra.mxu0 0
    %4452 = vmatpush.bf16.msra.mxu0 %v3992
    %4453 = vmatpush.bf16.msra.mxu0 %v3976
    %4454 = vmatpush.bf16.msra.mxu0 %v3960
    %4455 = vmatpush.bf16.msra.mxu0 %v3944
    %4456 = vmatmul.bf16.gmra.mxu0 %v4060
    %v4457 = vpop.f32.mrf.mxu0
    %v4458 = vadd.f32 %v3720, %v4457
    %v4459 = vpop.f32.mrf.mxu0
    %v4460 = vadd.f32 %v3720, %v4459
    %4461 = vmatmul.bf16.gmra.mxu0 %v4063
    %v4462 = vpop.f32.mrf.mxu0
    %v4463 = vadd.f32 %v3720, %v4462
    %v4464 = vpop.f32.mrf.mxu0
    %v4465 = vadd.f32 %v3720, %v4464
    %4466 = vmatmul.bf16.gmra.mxu0 %v4066
    %v4467 = vpop.f32.mrf.mxu0
    %v4468 = vadd.f32 %v3720, %v4467
    %v4469 = vpop.f32.mrf.mxu0
    %v4470 = vadd.f32 %v3720, %v4469
    %4471 = vmatmul.bf16.gmra.mxu0 %v4069
    %v4472 = vpop.f32.mrf.mxu0
    %v4473 = vadd.f32 %v3720, %v4472
    %v4474 = vpop.f32.mrf.mxu0
    %v4475 = vadd.f32 %v3720, %v4474
    %4476 = vdwg.mxu0
    %4477 = vmatpush.bf16.msra.mxu0 0
    %4478 = vmatpush.bf16.msra.mxu0 0
    %4479 = vmatpush.bf16.msra.mxu0 0
    %4480 = vmatpush.bf16.msra.mxu0 0
    %4481 = vmatpush.bf16.msra.mxu0 %v3993
    %4482 = vmatpush.bf16.msra.mxu0 %v3977
    %4483 = vmatpush.bf16.msra.mxu0 %v3961
    %4484 = vmatpush.bf16.msra.mxu0 %v3945
    %4485 = vmatmul.bf16.gmra.mxu0 %v4060
    %v4486 = vpop.f32.mrf.mxu0
    %v4487 = vadd.f32 %v3721, %v4486
    %v4488 = vpop.f32.mrf.mxu0
    %v4489 = vadd.f32 %v3721, %v4488
    %4490 = vmatmul.bf16.gmra.mxu0 %v4063
    %v4491 = vpop.f32.mrf.mxu0
    %v4492 = vadd.f32 %v3721, %v4491
    %v4493 = vpop.f32.mrf.mxu0
    %v4494 = vadd.f32 %v3721, %v4493
    %4495 = vmatmul.bf16.gmra.mxu0 %v4066
    %v4496 = vpop.f32.mrf.mxu0
    %v4497 = vadd.f32 %v3721, %v4496
    %v4498 = vpop.f32.mrf.mxu0
    %v4499 = vadd.f32 %v3721, %v4498
    %4500 = vmatmul.bf16.gmra.mxu0 %v4069
    %v4501 = vpop.f32.mrf.mxu0
    %v4502 = vadd.f32 %v3721, %v4501
    %v4503 = vpop.f32.mrf.mxu0
    %v4504 = vadd.f32 %v3721, %v4503
    %4505 = vdwg.mxu0
    %4506 = vmatpush.bf16.msra.mxu0 0
    %4507 = vmatpush.bf16.msra.mxu0 0
    %4508 = vmatpush.bf16.msra.mxu0 0
    %4509 = vmatpush.bf16.msra.mxu0 0
    %4510 = vmatpush.bf16.msra.mxu0 %v3994
    %4511 = vmatpush.bf16.msra.mxu0 %v3978
    %4512 = vmatpush.bf16.msra.mxu0 %v3962
    %4513 = vmatpush.bf16.msra.mxu0 %v3946
    %4514 = vmatmul.bf16.gmra.mxu0 %v4060
    %v4515 = vpop.f32.mrf.mxu0
    %v4516 = vadd.f32 %v3722, %v4515
    %v4517 = vpop.f32.mrf.mxu0
    %v4518 = vadd.f32 %v3722, %v4517
    %4519 = vmatmul.bf16.gmra.mxu0 %v4063
    %v4520 = vpop.f32.mrf.mxu0
    %v4521 = vadd.f32 %v3722, %v4520
    %v4522 = vpop.f32.mrf.mxu0
    %v4523 = vadd.f32 %v3722, %v4522
    %4524 = vmatmul.bf16.gmra.mxu0 %v4066
    %v4525 = vpop.f32.mrf.mxu0
    %v4526 = vadd.f32 %v3722, %v4525
    %v4527 = vpop.f32.mrf.mxu0
    %v4528 = vadd.f32 %v3722, %v4527
    %4529 = vmatmul.bf16.gmra.mxu0 %v4069
    %v4530 = vpop.f32.mrf.mxu0
    %v4531 = vadd.f32 %v3722, %v4530
    %v4532 = vpop.f32.mrf.mxu0
    %v4533 = vadd.f32 %v3722, %v4532
    %4534 = vdwg.mxu0
    %v4535 = vmax.f32 %v4081, 0.0
    %v4536 = vmax.f32 %v4110, 0.0
    %v4537 = vmax.f32 %v4139, 0.0
    %v4538 = vmax.f32 %v4168, 0.0
    %v4539 = vmax.f32 %v4197, 0.0
    %v4540 = vmax.f32 %v4226, 0.0
    %v4541 = vmax.f32 %v4255, 0.0
    %v4542 = vmax.f32 %v4284, 0.0
    %v4543 = vmax.f32 %v4313, 0.0
    %v4544 = vmax.f32 %v4342, 0.0
    %v4545 = vmax.f32 %v4371, 0.0
    %v4546 = vmax.f32 %v4400, 0.0
    %v4547 = vmax.f32 %v4429, 0.0
    %v4548 = vmax.f32 %v4458, 0.0
    %v4549 = vmax.f32 %v4487, 0.0
    %v4550 = vmax.f32 %v4516, 0.0
    %v4551 = vmax.f32 %v4083, 0.0
    %v4552 = vmax.f32 %v4112, 0.0
    %v4553 = vmax.f32 %v4141, 0.0
    %v4554 = vmax.f32 %v4170, 0.0
    %v4555 = vmax.f32 %v4199, 0.0
    %v4556 = vmax.f32 %v4228, 0.0
    %v4557 = vmax.f32 %v4257, 0.0
    %v4558 = vmax.f32 %v4286, 0.0
    %v4559 = vmax.f32 %v4315, 0.0
    %v4560 = vmax.f32 %v4344, 0.0
    %v4561 = vmax.f32 %v4373, 0.0
    %v4562 = vmax.f32 %v4402, 0.0
    %v4563 = vmax.f32 %v4431, 0.0
    %v4564 = vmax.f32 %v4460, 0.0
    %v4565 = vmax.f32 %v4489, 0.0
    %v4566 = vmax.f32 %v4518, 0.0
    %v4567 = vmax.f32 %v4086, 0.0
    %v4568 = vmax.f32 %v4115, 0.0
    %v4569 = vmax.f32 %v4144, 0.0
    %v4570 = vmax.f32 %v4173, 0.0
    %v4571 = vmax.f32 %v4202, 0.0
    %v4572 = vmax.f32 %v4231, 0.0
    %v4573 = vmax.f32 %v4260, 0.0
    %v4574 = vmax.f32 %v4289, 0.0
    %v4575 = vmax.f32 %v4318, 0.0
    %v4576 = vmax.f32 %v4347, 0.0
    %v4577 = vmax.f32 %v4376, 0.0
    %v4578 = vmax.f32 %v4405, 0.0
    %v4579 = vmax.f32 %v4434, 0.0
    %v4580 = vmax.f32 %v4463, 0.0
    %v4581 = vmax.f32 %v4492, 0.0
    %v4582 = vmax.f32 %v4521, 0.0
    %v4583 = vmax.f32 %v4088, 0.0
    %v4584 = vmax.f32 %v4117, 0.0
    %v4585 = vmax.f32 %v4146, 0.0
    %v4586 = vmax.f32 %v4175, 0.0
    %v4587 = vmax.f32 %v4204, 0.0
    %v4588 = vmax.f32 %v4233, 0.0
    %v4589 = vmax.f32 %v4262, 0.0
    %v4590 = vmax.f32 %v4291, 0.0
    %v4591 = vmax.f32 %v4320, 0.0
    %v4592 = vmax.f32 %v4349, 0.0
    %v4593 = vmax.f32 %v4378, 0.0
    %v4594 = vmax.f32 %v4407, 0.0
    %v4595 = vmax.f32 %v4436, 0.0
    %v4596 = vmax.f32 %v4465, 0.0
    %v4597 = vmax.f32 %v4494, 0.0
    %v4598 = vmax.f32 %v4523, 0.0
    %v4599 = vmax.f32 %v4091, 0.0
    %v4600 = vmax.f32 %v4120, 0.0
    %v4601 = vmax.f32 %v4149, 0.0
    %v4602 = vmax.f32 %v4178, 0.0
    %v4603 = vmax.f32 %v4207, 0.0
    %v4604 = vmax.f32 %v4236, 0.0
    %v4605 = vmax.f32 %v4265, 0.0
    %v4606 = vmax.f32 %v4294, 0.0
    %v4607 = vmax.f32 %v4323, 0.0
    %v4608 = vmax.f32 %v4352, 0.0
    %v4609 = vmax.f32 %v4381, 0.0
    %v4610 = vmax.f32 %v4410, 0.0
    %v4611 = vmax.f32 %v4439, 0.0
    %v4612 = vmax.f32 %v4468, 0.0
    %v4613 = vmax.f32 %v4497, 0.0
    %v4614 = vmax.f32 %v4526, 0.0
    %v4615 = vmax.f32 %v4093, 0.0
    %v4616 = vmax.f32 %v4122, 0.0
    %v4617 = vmax.f32 %v4151, 0.0
    %v4618 = vmax.f32 %v4180, 0.0
    %v4619 = vmax.f32 %v4209, 0.0
    %v4620 = vmax.f32 %v4238, 0.0
    %v4621 = vmax.f32 %v4267, 0.0
    %v4622 = vmax.f32 %v4296, 0.0
    %v4623 = vmax.f32 %v4325, 0.0
    %v4624 = vmax.f32 %v4354, 0.0
    %v4625 = vmax.f32 %v4383, 0.0
    %v4626 = vmax.f32 %v4412, 0.0
    %v4627 = vmax.f32 %v4441, 0.0
    %v4628 = vmax.f32 %v4470, 0.0
    %v4629 = vmax.f32 %v4499, 0.0
    %v4630 = vmax.f32 %v4528, 0.0
    %v4631 = vmax.f32 %v4096, 0.0
    %v4632 = vmax.f32 %v4125, 0.0
    %v4633 = vmax.f32 %v4154, 0.0
    %v4634 = vmax.f32 %v4183, 0.0
    %v4635 = vmax.f32 %v4212, 0.0
    %v4636 = vmax.f32 %v4241, 0.0
    %v4637 = vmax.f32 %v4270, 0.0
    %v4638 = vmax.f32 %v4299, 0.0
    %v4639 = vmax.f32 %v4328, 0.0
    %v4640 = vmax.f32 %v4357, 0.0
    %v4641 = vmax.f32 %v4386, 0.0
    %v4642 = vmax.f32 %v4415, 0.0
    %v4643 = vmax.f32 %v4444, 0.0
    %v4644 = vmax.f32 %v4473, 0.0
    %v4645 = vmax.f32 %v4502, 0.0
    %v4646 = vmax.f32 %v4531, 0.0
    %v4647 = vmax.f32 %v4098, 0.0
    %v4648 = vmax.f32 %v4127, 0.0
    %v4649 = vmax.f32 %v4156, 0.0
    %v4650 = vmax.f32 %v4185, 0.0
    %v4651 = vmax.f32 %v4214, 0.0
    %v4652 = vmax.f32 %v4243, 0.0
    %v4653 = vmax.f32 %v4272, 0.0
    %v4654 = vmax.f32 %v4301, 0.0
    %v4655 = vmax.f32 %v4330, 0.0
    %v4656 = vmax.f32 %v4359, 0.0
    %v4657 = vmax.f32 %v4388, 0.0
    %v4658 = vmax.f32 %v4417, 0.0
    %v4659 = vmax.f32 %v4446, 0.0
    %v4660 = vmax.f32 %v4475, 0.0
    %v4661 = vmax.f32 %v4504, 0.0
    %v4662 = vmax.f32 %v4533, 0.0
    %v4663 = vpack.c.bf16 %v4551, %v4535
    %v4664 = vpack.c.bf16 %v4552, %v4536
    %v4665 = vpack.c.bf16 %v4553, %v4537
    %v4666 = vpack.c.bf16 %v4554, %v4538
    %v4667 = vpack.c.bf16 %v4555, %v4539
    %v4668 = vpack.c.bf16 %v4556, %v4540
    %v4669 = vpack.c.bf16 %v4557, %v4541
    %v4670 = vpack.c.bf16 %v4558, %v4542
    %v4671 = vpack.c.bf16 %v4559, %v4543
    %v4672 = vpack.c.bf16 %v4560, %v4544
    %v4673 = vpack.c.bf16 %v4561, %v4545
    %v4674 = vpack.c.bf16 %v4562, %v4546
    %v4675 = vpack.c.bf16 %v4563, %v4547
    %v4676 = vpack.c.bf16 %v4564, %v4548
    %v4677 = vpack.c.bf16 %v4565, %v4549
    %v4678 = vpack.c.bf16 %v4566, %v4550
    %v4679 = vpack.c.bf16 %v4583, %v4567
    %v4680 = vpack.c.bf16 %v4584, %v4568
    %v4681 = vpack.c.bf16 %v4585, %v4569
    %v4682 = vpack.c.bf16 %v4586, %v4570
    %v4683 = vpack.c.bf16 %v4587, %v4571
    %v4684 = vpack.c.bf16 %v4588, %v4572
    %v4685 = vpack.c.bf16 %v4589, %v4573
    %v4686 = vpack.c.bf16 %v4590, %v4574
    %v4687 = vpack.c.bf16 %v4591, %v4575
    %v4688 = vpack.c.bf16 %v4592, %v4576
    %v4689 = vpack.c.bf16 %v4593, %v4577
    %v4690 = vpack.c.bf16 %v4594, %v4578
    %v4691 = vpack.c.bf16 %v4595, %v4579
    %v4692 = vpack.c.bf16 %v4596, %v4580
    %v4693 = vpack.c.bf16 %v4597, %v4581
    %v4694 = vpack.c.bf16 %v4598, %v4582
    %v4695 = vpack.c.bf16 %v4615, %v4599
    %v4696 = vpack.c.bf16 %v4616, %v4600
    %v4697 = vpack.c.bf16 %v4617, %v4601
    %v4698 = vpack.c.bf16 %v4618, %v4602
    %v4699 = vpack.c.bf16 %v4619, %v4603
    %v4700 = vpack.c.bf16 %v4620, %v4604
    %v4701 = vpack.c.bf16 %v4621, %v4605
    %v4702 = vpack.c.bf16 %v4622, %v4606
    %v4703 = vpack.c.bf16 %v4623, %v4607
    %v4704 = vpack.c.bf16 %v4624, %v4608
    %v4705 = vpack.c.bf16 %v4625, %v4609
    %v4706 = vpack.c.bf16 %v4626, %v4610
    %v4707 = vpack.c.bf16 %v4627, %v4611
    %v4708 = vpack.c.bf16 %v4628, %v4612
    %v4709 = vpack.c.bf16 %v4629, %v4613
    %v4710 = vpack.c.bf16 %v4630, %v4614
    %v4711 = vpack.c.bf16 %v4647, %v4631
    %v4712 = vpack.c.bf16 %v4648, %v4632
    %v4713 = vpack.c.bf16 %v4649, %v4633
    %v4714 = vpack.c.bf16 %v4650, %v4634
    %v4715 = vpack.c.bf16 %v4651, %v4635
    %v4716 = vpack.c.bf16 %v4652, %v4636
    %v4717 = vpack.c.bf16 %v4653, %v4637
    %v4718 = vpack.c.bf16 %v4654, %v4638
    %v4719 = vpack.c.bf16 %v4655, %v4639
    %v4720 = vpack.c.bf16 %v4656, %v4640
    %v4721 = vpack.c.bf16 %v4657, %v4641
    %v4722 = vpack.c.bf16 %v4658, %v4642
    %v4723 = vpack.c.bf16 %v4659, %v4643
    %v4724 = vpack.c.bf16 %v4660, %v4644
    %v4725 = vpack.c.bf16 %v4661, %v4645
    %v4726 = vpack.c.bf16 %v4662, %v4646
    %v4727 = vld [vmem:[%s11] sm:$0xf]
    %v4728 = vld [vmem:[%s11 + $0x4] sm:$0xf]
    %v4729 = vld [vmem:[%s11 + $0x8] sm:$0xf]
    %v4730 = vld [vmem:[%s11 + $0xc] sm:$0xf]
    %v4731 = vld [vmem:[%s11 + $0x10] sm:$0xf]
    %v4732 = vld [vmem:[%s11 + $0x14] sm:$0xf]
    %v4733 = vld [vmem:[%s11 + $0x18] sm:$0xf]
    %v4734 = vld [vmem:[%s11 + $0x1c] sm:$0xf]
    %v4735 = vld [vmem:[%s11 + $0x20] sm:$0xf]
    %v4736 = vld [vmem:[%s11 + $0x24] sm:$0xf]
    %v4737 = vld [vmem:[%s11 + $0x28] sm:$0xf]
    %v4738 = vld [vmem:[%s11 + $0x2c] sm:$0xf]
    %v4739 = vld [vmem:[%s11 + $0x30] sm:$0xf]
    %v4740 = vld [vmem:[%s11 + $0x34] sm:$0xf]
    %v4741 = vld [vmem:[%s11 + $0x38] sm:$0xf]
    %v4742 = vld [vmem:[%s11 + $0x3c] sm:$0xf]
    %v4743 = vld [vmem:[%s11 + $0x40] sm:$0xf]
    %v4744 = vld [vmem:[%s11 + $0x44] sm:$0xf]
    %v4745 = vld [vmem:[%s11 + $0x48] sm:$0xf]
    %v4746 = vld [vmem:[%s11 + $0x4c] sm:$0xf]
    %v4747 = vld [vmem:[%s11 + $0x50] sm:$0xf]
    %v4748 = vld [vmem:[%s11 + $0x54] sm:$0xf]
    %v4749 = vld [vmem:[%s11 + $0x58] sm:$0xf]
    %v4750 = vld [vmem:[%s11 + $0x5c] sm:$0xf]
    %v4751 = vld [vmem:[%s11 + $0x60] sm:$0xf]
    %v4752 = vld [vmem:[%s11 + $0x64] sm:$0xf]
    %v4753 = vld [vmem:[%s11 + $0x68] sm:$0xf]
    %v4754 = vld [vmem:[%s11 + $0x6c] sm:$0xf]
    %v4755 = vld [vmem:[%s11 + $0x70] sm:$0xf]
    %v4756 = vld [vmem:[%s11 + $0x74] sm:$0xf]
    %v4757 = vld [vmem:[%s11 + $0x78] sm:$0xf]
    %v4758 = vld [vmem:[%s11 + $0x7c] sm:$0xf]
    %v4759 = vld [vmem:[%s11 + $0x80] sm:$0xf]
    %v4760 = vld [vmem:[%s11 + $0x84] sm:$0xf]
    %v4761 = vld [vmem:[%s11 + $0x88] sm:$0xf]
    %v4762 = vld [vmem:[%s11 + $0x8c] sm:$0xf]
    %v4763 = vld [vmem:[%s11 + $0x90] sm:$0xf]
    %v4764 = vld [vmem:[%s11 + $0x94] sm:$0xf]
    %v4765 = vld [vmem:[%s11 + $0x98] sm:$0xf]
    %v4766 = vld [vmem:[%s11 + $0x9c] sm:$0xf]
    %v4767 = vld [vmem:[%s11 + $0xa0] sm:$0xf]
    %v4768 = vld [vmem:[%s11 + $0xa4] sm:$0xf]
    %v4769 = vld [vmem:[%s11 + $0xa8] sm:$0xf]
    %v4770 = vld [vmem:[%s11 + $0xac] sm:$0xf]
    %v4771 = vld [vmem:[%s11 + $0xb0] sm:$0xf]
    %v4772 = vld [vmem:[%s11 + $0xb4] sm:$0xf]
    %v4773 = vld [vmem:[%s11 + $0xb8] sm:$0xf]
    %v4774 = vld [vmem:[%s11 + $0xbc] sm:$0xf]
    %v4775 = vld [vmem:[%s11 + $0xc0] sm:$0xf]
    %v4776 = vld [vmem:[%s11 + $0xc4] sm:$0xf]
    %v4777 = vld [vmem:[%s11 + $0xc8] sm:$0xf]
    %v4778 = vld [vmem:[%s11 + $0xcc] sm:$0xf]
    %v4779 = vld [vmem:[%s11 + $0xd0] sm:$0xf]
    %v4780 = vld [vmem:[%s11 + $0xd4] sm:$0xf]
    %v4781 = vld [vmem:[%s11 + $0xd8] sm:$0xf]
    %v4782 = vld [vmem:[%s11 + $0xdc] sm:$0xf]
    %v4783 = vld [vmem:[%s11 + $0xe0] sm:$0xf]
    %v4784 = vld [vmem:[%s11 + $0xe4] sm:$0xf]
    %v4785 = vld [vmem:[%s11 + $0xe8] sm:$0xf]
    %v4786 = vld [vmem:[%s11 + $0xec] sm:$0xf]
    %v4787 = vld [vmem:[%s11 + $0xf0] sm:$0xf]
    %v4788 = vld [vmem:[%s11 + $0xf4] sm:$0xf]
    %v4789 = vld [vmem:[%s11 + $0xf8] sm:$0xf]
    %v4790 = vld [vmem:[%s11 + $0xfc] sm:$0xf]
    %v4791 = vld [vmem:[%s11 + $0x100] sm:$0xf]
    %v4792 = vld [vmem:[%s11 + $0x104] sm:$0xf]
    %v4793 = vld [vmem:[%s11 + $0x108] sm:$0xf]
    %v4794 = vld [vmem:[%s11 + $0x10c] sm:$0xf]
    %v4795 = vld [vmem:[%s11 + $0x110] sm:$0xf]
    %v4796 = vld [vmem:[%s11 + $0x114] sm:$0xf]
    %v4797 = vld [vmem:[%s11 + $0x118] sm:$0xf]
    %v4798 = vld [vmem:[%s11 + $0x11c] sm:$0xf]
    %v4799 = vld [vmem:[%s11 + $0x120] sm:$0xf]
    %v4800 = vld [vmem:[%s11 + $0x124] sm:$0xf]
    %v4801 = vld [vmem:[%s11 + $0x128] sm:$0xf]
    %v4802 = vld [vmem:[%s11 + $0x12c] sm:$0xf]
    %v4803 = vld [vmem:[%s11 + $0x130] sm:$0xf]
    %v4804 = vld [vmem:[%s11 + $0x134] sm:$0xf]
    %v4805 = vld [vmem:[%s11 + $0x138] sm:$0xf]
    %v4806 = vld [vmem:[%s11 + $0x13c] sm:$0xf]
    %v4807 = vld [vmem:[%s11 + $0x140] sm:$0xf]
    %v4808 = vld [vmem:[%s11 + $0x144] sm:$0xf]
    %v4809 = vld [vmem:[%s11 + $0x148] sm:$0xf]
    %v4810 = vld [vmem:[%s11 + $0x14c] sm:$0xf]
    %v4811 = vld [vmem:[%s11 + $0x150] sm:$0xf]
    %v4812 = vld [vmem:[%s11 + $0x154] sm:$0xf]
    %v4813 = vld [vmem:[%s11 + $0x158] sm:$0xf]
    %v4814 = vld [vmem:[%s11 + $0x15c] sm:$0xf]
    %v4815 = vld [vmem:[%s11 + $0x160] sm:$0xf]
    %v4816 = vld [vmem:[%s11 + $0x164] sm:$0xf]
    %v4817 = vld [vmem:[%s11 + $0x168] sm:$0xf]
    %v4818 = vld [vmem:[%s11 + $0x16c] sm:$0xf]
    %v4819 = vld [vmem:[%s11 + $0x170] sm:$0xf]
    %v4820 = vld [vmem:[%s11 + $0x174] sm:$0xf]
    %v4821 = vld [vmem:[%s11 + $0x178] sm:$0xf]
    %v4822 = vld [vmem:[%s11 + $0x17c] sm:$0xf]
    %v4823 = vld [vmem:[%s11 + $0x180] sm:$0xf]
    %v4824 = vld [vmem:[%s11 + $0x184] sm:$0xf]
    %v4825 = vld [vmem:[%s11 + $0x188] sm:$0xf]
    %v4826 = vld [vmem:[%s11 + $0x18c] sm:$0xf]
    %v4827 = vld [vmem:[%s11 + $0x190] sm:$0xf]
    %v4828 = vld [vmem:[%s11 + $0x194] sm:$0xf]
    %v4829 = vld [vmem:[%s11 + $0x198] sm:$0xf]
    %v4830 = vld [vmem:[%s11 + $0x19c] sm:$0xf]
    %v4831 = vld [vmem:[%s11 + $0x1a0] sm:$0xf]
    %v4832 = vld [vmem:[%s11 + $0x1a4] sm:$0xf]
    %v4833 = vld [vmem:[%s11 + $0x1a8] sm:$0xf]
    %v4834 = vld [vmem:[%s11 + $0x1ac] sm:$0xf]
    %v4835 = vld [vmem:[%s11 + $0x1b0] sm:$0xf]
    %v4836 = vld [vmem:[%s11 + $0x1b4] sm:$0xf]
    %v4837 = vld [vmem:[%s11 + $0x1b8] sm:$0xf]
    %v4838 = vld [vmem:[%s11 + $0x1bc] sm:$0xf]
    %v4839 = vld [vmem:[%s11 + $0x1c0] sm:$0xf]
    %v4840 = vld [vmem:[%s11 + $0x1c4] sm:$0xf]
    %v4841 = vld [vmem:[%s11 + $0x1c8] sm:$0xf]
    %v4842 = vld [vmem:[%s11 + $0x1cc] sm:$0xf]
    %v4843 = vld [vmem:[%s11 + $0x1d0] sm:$0xf]
    %v4844 = vld [vmem:[%s11 + $0x1d4] sm:$0xf]
    %v4845 = vld [vmem:[%s11 + $0x1d8] sm:$0xf]
    %v4846 = vld [vmem:[%s11 + $0x1dc] sm:$0xf]
    %v4847 = vld [vmem:[%s11 + $0x1e0] sm:$0xf]
    %v4848 = vld [vmem:[%s11 + $0x1e4] sm:$0xf]
    %v4849 = vld [vmem:[%s11 + $0x1e8] sm:$0xf]
    %v4850 = vld [vmem:[%s11 + $0x1ec] sm:$0xf]
    %v4851 = vld [vmem:[%s11 + $0x1f0] sm:$0xf]
    %v4852 = vld [vmem:[%s11 + $0x1f4] sm:$0xf]
    %v4853 = vld [vmem:[%s11 + $0x1f8] sm:$0xf]
    %v4854 = vld [vmem:[%s11 + $0x1fc] sm:$0xf]
    %v4855 = vld [vmem:[%s11 + $0x200] sm:$0xf]
    %v4856 = vld [vmem:[%s11 + $0x204] sm:$0xf]
    %v4857 = vld [vmem:[%s11 + $0x208] sm:$0xf]
    %v4858 = vld [vmem:[%s11 + $0x20c] sm:$0xf]
    %v4859 = vld [vmem:[%s11 + $0x210] sm:$0xf]
    %v4860 = vld [vmem:[%s11 + $0x214] sm:$0xf]
    %v4861 = vld [vmem:[%s11 + $0x218] sm:$0xf]
    %v4862 = vld [vmem:[%s11 + $0x21c] sm:$0xf]
    %v4863 = vld [vmem:[%s11 + $0x220] sm:$0xf]
    %v4864 = vld [vmem:[%s11 + $0x224] sm:$0xf]
    %v4865 = vld [vmem:[%s11 + $0x228] sm:$0xf]
    %v4866 = vld [vmem:[%s11 + $0x22c] sm:$0xf]
    %v4867 = vld [vmem:[%s11 + $0x230] sm:$0xf]
    %v4868 = vld [vmem:[%s11 + $0x234] sm:$0xf]
    %v4869 = vld [vmem:[%s11 + $0x238] sm:$0xf]
    %v4870 = vld [vmem:[%s11 + $0x23c] sm:$0xf]
    %v4871 = vld [vmem:[%s11 + $0x240] sm:$0xf]
    %v4872 = vld [vmem:[%s11 + $0x244] sm:$0xf]
    %v4873 = vld [vmem:[%s11 + $0x248] sm:$0xf]
    %v4874 = vld [vmem:[%s11 + $0x24c] sm:$0xf]
    %v4875 = vld [vmem:[%s11 + $0x250] sm:$0xf]
    %v4876 = vld [vmem:[%s11 + $0x254] sm:$0xf]
    %v4877 = vld [vmem:[%s11 + $0x258] sm:$0xf]
    %v4878 = vld [vmem:[%s11 + $0x25c] sm:$0xf]
    %v4879 = vld [vmem:[%s11 + $0x260] sm:$0xf]
    %v4880 = vld [vmem:[%s11 + $0x264] sm:$0xf]
    %v4881 = vld [vmem:[%s11 + $0x268] sm:$0xf]
    %v4882 = vld [vmem:[%s11 + $0x26c] sm:$0xf]
    %v4883 = vld [vmem:[%s11 + $0x270] sm:$0xf]
    %v4884 = vld [vmem:[%s11 + $0x274] sm:$0xf]
    %v4885 = vld [vmem:[%s11 + $0x278] sm:$0xf]
    %v4886 = vld [vmem:[%s11 + $0x27c] sm:$0xf]
    %v4887 = vld [vmem:[%s11 + $0x280] sm:$0xf]
    %v4888 = vld [vmem:[%s11 + $0x284] sm:$0xf]
    %v4889 = vld [vmem:[%s11 + $0x288] sm:$0xf]
    %v4890 = vld [vmem:[%s11 + $0x28c] sm:$0xf]
    %v4891 = vld [vmem:[%s11 + $0x290] sm:$0xf]
    %v4892 = vld [vmem:[%s11 + $0x294] sm:$0xf]
    %v4893 = vld [vmem:[%s11 + $0x298] sm:$0xf]
    %v4894 = vld [vmem:[%s11 + $0x29c] sm:$0xf]
    %v4895 = vld [vmem:[%s11 + $0x2a0] sm:$0xf]
    %v4896 = vld [vmem:[%s11 + $0x2a4] sm:$0xf]
    %v4897 = vld [vmem:[%s11 + $0x2a8] sm:$0xf]
    %v4898 = vld [vmem:[%s11 + $0x2ac] sm:$0xf]
    %v4899 = vld [vmem:[%s11 + $0x2b0] sm:$0xf]
    %v4900 = vld [vmem:[%s11 + $0x2b4] sm:$0xf]
    %v4901 = vld [vmem:[%s11 + $0x2b8] sm:$0xf]
    %v4902 = vld [vmem:[%s11 + $0x2bc] sm:$0xf]
    %v4903 = vld [vmem:[%s11 + $0x2c0] sm:$0xf]
    %v4904 = vld [vmem:[%s11 + $0x2c4] sm:$0xf]
    %v4905 = vld [vmem:[%s11 + $0x2c8] sm:$0xf]
    %v4906 = vld [vmem:[%s11 + $0x2cc] sm:$0xf]
    %v4907 = vld [vmem:[%s11 + $0x2d0] sm:$0xf]
    %v4908 = vld [vmem:[%s11 + $0x2d4] sm:$0xf]
    %v4909 = vld [vmem:[%s11 + $0x2d8] sm:$0xf]
    %v4910 = vld [vmem:[%s11 + $0x2dc] sm:$0xf]
    %v4911 = vld [vmem:[%s11 + $0x2e0] sm:$0xf]
    %v4912 = vld [vmem:[%s11 + $0x2e4] sm:$0xf]
    %v4913 = vld [vmem:[%s11 + $0x2e8] sm:$0xf]
    %v4914 = vld [vmem:[%s11 + $0x2ec] sm:$0xf]
    %v4915 = vld [vmem:[%s11 + $0x2f0] sm:$0xf]
    %v4916 = vld [vmem:[%s11 + $0x2f4] sm:$0xf]
    %v4917 = vld [vmem:[%s11 + $0x2f8] sm:$0xf]
    %v4918 = vld [vmem:[%s11 + $0x2fc] sm:$0xf]
    %v4919 = vld [vmem:[%s11 + $0x300] sm:$0xf]
    %v4920 = vld [vmem:[%s11 + $0x304] sm:$0xf]
    %v4921 = vld [vmem:[%s11 + $0x308] sm:$0xf]
    %v4922 = vld [vmem:[%s11 + $0x30c] sm:$0xf]
    %v4923 = vld [vmem:[%s11 + $0x310] sm:$0xf]
    %v4924 = vld [vmem:[%s11 + $0x314] sm:$0xf]
    %v4925 = vld [vmem:[%s11 + $0x318] sm:$0xf]
    %v4926 = vld [vmem:[%s11 + $0x31c] sm:$0xf]
    %v4927 = vld [vmem:[%s11 + $0x320] sm:$0xf]
    %v4928 = vld [vmem:[%s11 + $0x324] sm:$0xf]
    %v4929 = vld [vmem:[%s11 + $0x328] sm:$0xf]
    %v4930 = vld [vmem:[%s11 + $0x32c] sm:$0xf]
    %v4931 = vld [vmem:[%s11 + $0x330] sm:$0xf]
    %v4932 = vld [vmem:[%s11 + $0x334] sm:$0xf]
    %v4933 = vld [vmem:[%s11 + $0x338] sm:$0xf]
    %v4934 = vld [vmem:[%s11 + $0x33c] sm:$0xf]
    %v4935 = vld [vmem:[%s11 + $0x340] sm:$0xf]
    %v4936 = vld [vmem:[%s11 + $0x344] sm:$0xf]
    %v4937 = vld [vmem:[%s11 + $0x348] sm:$0xf]
    %v4938 = vld [vmem:[%s11 + $0x34c] sm:$0xf]
    %v4939 = vld [vmem:[%s11 + $0x350] sm:$0xf]
    %v4940 = vld [vmem:[%s11 + $0x354] sm:$0xf]
    %v4941 = vld [vmem:[%s11 + $0x358] sm:$0xf]
    %v4942 = vld [vmem:[%s11 + $0x35c] sm:$0xf]
    %v4943 = vld [vmem:[%s11 + $0x360] sm:$0xf]
    %v4944 = vld [vmem:[%s11 + $0x364] sm:$0xf]
    %v4945 = vld [vmem:[%s11 + $0x368] sm:$0xf]
    %v4946 = vld [vmem:[%s11 + $0x36c] sm:$0xf]
    %v4947 = vld [vmem:[%s11 + $0x370] sm:$0xf]
    %v4948 = vld [vmem:[%s11 + $0x374] sm:$0xf]
    %v4949 = vld [vmem:[%s11 + $0x378] sm:$0xf]
    %v4950 = vld [vmem:[%s11 + $0x37c] sm:$0xf]
    %v4951 = vld [vmem:[%s11 + $0x380] sm:$0xf]
    %v4952 = vld [vmem:[%s11 + $0x384] sm:$0xf]
    %v4953 = vld [vmem:[%s11 + $0x388] sm:$0xf]
    %v4954 = vld [vmem:[%s11 + $0x38c] sm:$0xf]
    %v4955 = vld [vmem:[%s11 + $0x390] sm:$0xf]
    %v4956 = vld [vmem:[%s11 + $0x394] sm:$0xf]
    %v4957 = vld [vmem:[%s11 + $0x398] sm:$0xf]
    %v4958 = vld [vmem:[%s11 + $0x39c] sm:$0xf]
    %v4959 = vld [vmem:[%s11 + $0x3a0] sm:$0xf]
    %v4960 = vld [vmem:[%s11 + $0x3a4] sm:$0xf]
    %v4961 = vld [vmem:[%s11 + $0x3a8] sm:$0xf]
    %v4962 = vld [vmem:[%s11 + $0x3ac] sm:$0xf]
    %v4963 = vld [vmem:[%s11 + $0x3b0] sm:$0xf]
    %v4964 = vld [vmem:[%s11 + $0x3b4] sm:$0xf]
    %v4965 = vld [vmem:[%s11 + $0x3b8] sm:$0xf]
    %v4966 = vld [vmem:[%s11 + $0x3bc] sm:$0xf]
    %v4967 = vld [vmem:[%s11 + $0x3c0] sm:$0xf]
    %v4968 = vld [vmem:[%s11 + $0x3c4] sm:$0xf]
    %v4969 = vld [vmem:[%s11 + $0x3c8] sm:$0xf]
    %v4970 = vld [vmem:[%s11 + $0x3cc] sm:$0xf]
    %v4971 = vld [vmem:[%s11 + $0x3d0] sm:$0xf]
    %v4972 = vld [vmem:[%s11 + $0x3d4] sm:$0xf]
    %v4973 = vld [vmem:[%s11 + $0x3d8] sm:$0xf]
    %v4974 = vld [vmem:[%s11 + $0x3dc] sm:$0xf]
    %v4975 = vld [vmem:[%s11 + $0x3e0] sm:$0xf]
    %v4976 = vld [vmem:[%s11 + $0x3e4] sm:$0xf]
    %v4977 = vld [vmem:[%s11 + $0x3e8] sm:$0xf]
    %v4978 = vld [vmem:[%s11 + $0x3ec] sm:$0xf]
    %v4979 = vld [vmem:[%s11 + $0x3f0] sm:$0xf]
    %v4980 = vld [vmem:[%s11 + $0x3f4] sm:$0xf]
    %v4981 = vld [vmem:[%s11 + $0x3f8] sm:$0xf]
    %v4982 = vld [vmem:[%s11 + $0x3fc] sm:$0xf]
    %v4983 = vld [vmem:[%s12] sm:$0x1]
    %v4985 = vperm.slane %v4983, 0
    %v5243 = vunpack.c.l.b16 %v4727
    %v5244 = vunpack.c.l.b16 %v4728
    %v5245 = vunpack.c.l.b16 %v4729
    %v5246 = vunpack.c.l.b16 %v4730
    %v5247 = vunpack.c.l.b16 %v4731
    %v5248 = vunpack.c.l.b16 %v4732
    %v5249 = vunpack.c.l.b16 %v4733
    %v5250 = vunpack.c.l.b16 %v4734
    %v5251 = vunpack.c.l.b16 %v4735
    %v5252 = vunpack.c.l.b16 %v4736
    %v5253 = vunpack.c.l.b16 %v4737
    %v5254 = vunpack.c.l.b16 %v4738
    %v5255 = vunpack.c.l.b16 %v4739
    %v5256 = vunpack.c.l.b16 %v4740
    %v5257 = vunpack.c.l.b16 %v4741
    %v5258 = vunpack.c.l.b16 %v4742
    %v5259 = vunpack.c.l.b16 %v4743
    %v5260 = vunpack.c.l.b16 %v4744
    %v5261 = vunpack.c.l.b16 %v4745
    %v5262 = vunpack.c.l.b16 %v4746
    %v5263 = vunpack.c.l.b16 %v4747
    %v5264 = vunpack.c.l.b16 %v4748
    %v5265 = vunpack.c.l.b16 %v4749
    %v5266 = vunpack.c.l.b16 %v4750
    %v5267 = vunpack.c.l.b16 %v4751
    %v5268 = vunpack.c.l.b16 %v4752
    %v5269 = vunpack.c.l.b16 %v4753
    %v5270 = vunpack.c.l.b16 %v4754
    %v5271 = vunpack.c.l.b16 %v4755
    %v5272 = vunpack.c.l.b16 %v4756
    %v5273 = vunpack.c.l.b16 %v4757
    %v5274 = vunpack.c.l.b16 %v4758
    %v5275 = vunpack.c.l.b16 %v4759
    %v5276 = vunpack.c.l.b16 %v4760
    %v5277 = vunpack.c.l.b16 %v4761
    %v5278 = vunpack.c.l.b16 %v4762
    %v5279 = vunpack.c.l.b16 %v4763
    %v5280 = vunpack.c.l.b16 %v4764
    %v5281 = vunpack.c.l.b16 %v4765
    %v5282 = vunpack.c.l.b16 %v4766
    %v5283 = vunpack.c.l.b16 %v4767
    %v5284 = vunpack.c.l.b16 %v4768
    %v5285 = vunpack.c.l.b16 %v4769
    %v5286 = vunpack.c.l.b16 %v4770
    %v5287 = vunpack.c.l.b16 %v4771
    %v5288 = vunpack.c.l.b16 %v4772
    %v5289 = vunpack.c.l.b16 %v4773
    %v5290 = vunpack.c.l.b16 %v4774
    %v5291 = vunpack.c.l.b16 %v4775
    %v5292 = vunpack.c.l.b16 %v4776
    %v5293 = vunpack.c.l.b16 %v4777
    %v5294 = vunpack.c.l.b16 %v4778
    %v5295 = vunpack.c.l.b16 %v4779
    %v5296 = vunpack.c.l.b16 %v4780
    %v5297 = vunpack.c.l.b16 %v4781
    %v5298 = vunpack.c.l.b16 %v4782
    %v5299 = vunpack.c.l.b16 %v4783
    %v5300 = vunpack.c.l.b16 %v4784
    %v5301 = vunpack.c.l.b16 %v4785
    %v5302 = vunpack.c.l.b16 %v4786
    %v5303 = vunpack.c.l.b16 %v4787
    %v5304 = vunpack.c.l.b16 %v4788
    %v5305 = vunpack.c.l.b16 %v4789
    %v5306 = vunpack.c.l.b16 %v4790
    %v5307 = vunpack.c.l.b16 %v4791
    %v5308 = vunpack.c.l.b16 %v4792
    %v5309 = vunpack.c.l.b16 %v4793
    %v5310 = vunpack.c.l.b16 %v4794
    %v5311 = vunpack.c.l.b16 %v4795
    %v5312 = vunpack.c.l.b16 %v4796
    %v5313 = vunpack.c.l.b16 %v4797
    %v5314 = vunpack.c.l.b16 %v4798
    %v5315 = vunpack.c.l.b16 %v4799
    %v5316 = vunpack.c.l.b16 %v4800
    %v5317 = vunpack.c.l.b16 %v4801
    %v5318 = vunpack.c.l.b16 %v4802
    %v5319 = vunpack.c.l.b16 %v4803
    %v5320 = vunpack.c.l.b16 %v4804
    %v5321 = vunpack.c.l.b16 %v4805
    %v5322 = vunpack.c.l.b16 %v4806
    %v5323 = vunpack.c.l.b16 %v4807
    %v5324 = vunpack.c.l.b16 %v4808
    %v5325 = vunpack.c.l.b16 %v4809
    %v5326 = vunpack.c.l.b16 %v4810
    %v5327 = vunpack.c.l.b16 %v4811
    %v5328 = vunpack.c.l.b16 %v4812
    %v5329 = vunpack.c.l.b16 %v4813
    %v5330 = vunpack.c.l.b16 %v4814
    %v5331 = vunpack.c.l.b16 %v4815
    %v5332 = vunpack.c.l.b16 %v4816
    %v5333 = vunpack.c.l.b16 %v4817
    %v5334 = vunpack.c.l.b16 %v4818
    %v5335 = vunpack.c.l.b16 %v4819
    %v5336 = vunpack.c.l.b16 %v4820
    %v5337 = vunpack.c.l.b16 %v4821
    %v5338 = vunpack.c.l.b16 %v4822
    %v5339 = vunpack.c.l.b16 %v4823
    %v5340 = vunpack.c.l.b16 %v4824
    %v5341 = vunpack.c.l.b16 %v4825
    %v5342 = vunpack.c.l.b16 %v4826
    %v5343 = vunpack.c.l.b16 %v4827
    %v5344 = vunpack.c.l.b16 %v4828
    %v5345 = vunpack.c.l.b16 %v4829
    %v5346 = vunpack.c.l.b16 %v4830
    %v5347 = vunpack.c.l.b16 %v4831
    %v5348 = vunpack.c.l.b16 %v4832
    %v5349 = vunpack.c.l.b16 %v4833
    %v5350 = vunpack.c.l.b16 %v4834
    %v5351 = vunpack.c.l.b16 %v4835
    %v5352 = vunpack.c.l.b16 %v4836
    %v5353 = vunpack.c.l.b16 %v4837
    %v5354 = vunpack.c.l.b16 %v4838
    %v5355 = vunpack.c.l.b16 %v4839
    %v5356 = vunpack.c.l.b16 %v4840
    %v5357 = vunpack.c.l.b16 %v4841
    %v5358 = vunpack.c.l.b16 %v4842
    %v5359 = vunpack.c.l.b16 %v4843
    %v5360 = vunpack.c.l.b16 %v4844
    %v5361 = vunpack.c.l.b16 %v4845
    %v5362 = vunpack.c.l.b16 %v4846
    %v5363 = vunpack.c.l.b16 %v4847
    %v5364 = vunpack.c.l.b16 %v4848
    %v5365 = vunpack.c.l.b16 %v4849
    %v5366 = vunpack.c.l.b16 %v4850
    %v5367 = vunpack.c.l.b16 %v4851
    %v5368 = vunpack.c.l.b16 %v4852
    %v5369 = vunpack.c.l.b16 %v4853
    %v5370 = vunpack.c.l.b16 %v4854
    %v5371 = vunpack.c.l.b16 %v4855
    %v5372 = vunpack.c.l.b16 %v4856
    %v5373 = vunpack.c.l.b16 %v4857
    %v5374 = vunpack.c.l.b16 %v4858
    %v5375 = vunpack.c.l.b16 %v4859
    %v5376 = vunpack.c.l.b16 %v4860
    %v5377 = vunpack.c.l.b16 %v4861
    %v5378 = vunpack.c.l.b16 %v4862
    %v5379 = vunpack.c.l.b16 %v4863
    %v5380 = vunpack.c.l.b16 %v4864
    %v5381 = vunpack.c.l.b16 %v4865
    %v5382 = vunpack.c.l.b16 %v4866
    %v5383 = vunpack.c.l.b16 %v4867
    %v5384 = vunpack.c.l.b16 %v4868
    %v5385 = vunpack.c.l.b16 %v4869
    %v5386 = vunpack.c.l.b16 %v4870
    %v5387 = vunpack.c.l.b16 %v4871
    %v5388 = vunpack.c.l.b16 %v4872
    %v5389 = vunpack.c.l.b16 %v4873
    %v5390 = vunpack.c.l.b16 %v4874
    %v5391 = vunpack.c.l.b16 %v4875
    %v5392 = vunpack.c.l.b16 %v4876
    %v5393 = vunpack.c.l.b16 %v4877
    %v5394 = vunpack.c.l.b16 %v4878
    %v5395 = vunpack.c.l.b16 %v4879
    %v5396 = vunpack.c.l.b16 %v4880
    %v5397 = vunpack.c.l.b16 %v4881
    %v5398 = vunpack.c.l.b16 %v4882
    %v5399 = vunpack.c.l.b16 %v4883
    %v5400 = vunpack.c.l.b16 %v4884
    %v5401 = vunpack.c.l.b16 %v4885
    %v5402 = vunpack.c.l.b16 %v4886
    %v5403 = vunpack.c.l.b16 %v4887
    %v5404 = vunpack.c.l.b16 %v4888
    %v5405 = vunpack.c.l.b16 %v4889
    %v5406 = vunpack.c.l.b16 %v4890
    %v5407 = vunpack.c.l.b16 %v4891
    %v5408 = vunpack.c.l.b16 %v4892
    %v5409 = vunpack.c.l.b16 %v4893
    %v5410 = vunpack.c.l.b16 %v4894
    %v5411 = vunpack.c.l.b16 %v4895
    %v5412 = vunpack.c.l.b16 %v4896
    %v5413 = vunpack.c.l.b16 %v4897
    %v5414 = vunpack.c.l.b16 %v4898
    %v5415 = vunpack.c.l.b16 %v4899
    %v5416 = vunpack.c.l.b16 %v4900
    %v5417 = vunpack.c.l.b16 %v4901
    %v5418 = vunpack.c.l.b16 %v4902
    %v5419 = vunpack.c.l.b16 %v4903
    %v5420 = vunpack.c.l.b16 %v4904
    %v5421 = vunpack.c.l.b16 %v4905
    %v5422 = vunpack.c.l.b16 %v4906
    %v5423 = vunpack.c.l.b16 %v4907
    %v5424 = vunpack.c.l.b16 %v4908
    %v5425 = vunpack.c.l.b16 %v4909
    %v5426 = vunpack.c.l.b16 %v4910
    %v5427 = vunpack.c.l.b16 %v4911
    %v5428 = vunpack.c.l.b16 %v4912
    %v5429 = vunpack.c.l.b16 %v4913
    %v5430 = vunpack.c.l.b16 %v4914
    %v5431 = vunpack.c.l.b16 %v4915
    %v5432 = vunpack.c.l.b16 %v4916
    %v5433 = vunpack.c.l.b16 %v4917
    %v5434 = vunpack.c.l.b16 %v4918
    %v5435 = vunpack.c.l.b16 %v4919
    %v5436 = vunpack.c.l.b16 %v4920
    %v5437 = vunpack.c.l.b16 %v4921
    %v5438 = vunpack.c.l.b16 %v4922
    %v5439 = vunpack.c.l.b16 %v4923
    %v5440 = vunpack.c.l.b16 %v4924
    %v5441 = vunpack.c.l.b16 %v4925
    %v5442 = vunpack.c.l.b16 %v4926
    %v5443 = vunpack.c.l.b16 %v4927
    %v5444 = vunpack.c.l.b16 %v4928
    %v5445 = vunpack.c.l.b16 %v4929
    %v5446 = vunpack.c.l.b16 %v4930
    %v5447 = vunpack.c.l.b16 %v4931
    %v5448 = vunpack.c.l.b16 %v4932
    %v5449 = vunpack.c.l.b16 %v4933
    %v5450 = vunpack.c.l.b16 %v4934
    %v5451 = vunpack.c.l.b16 %v4935
    %v5452 = vunpack.c.l.b16 %v4936
    %v5453 = vunpack.c.l.b16 %v4937
    %v5454 = vunpack.c.l.b16 %v4938
    %v5455 = vunpack.c.l.b16 %v4939
    %v5456 = vunpack.c.l.b16 %v4940
    %v5457 = vunpack.c.l.b16 %v4941
    %v5458 = vunpack.c.l.b16 %v4942
    %v5459 = vunpack.c.l.b16 %v4943
    %v5460 = vunpack.c.l.b16 %v4944
    %v5461 = vunpack.c.l.b16 %v4945
    %v5462 = vunpack.c.l.b16 %v4946
    %v5463 = vunpack.c.l.b16 %v4947
    %v5464 = vunpack.c.l.b16 %v4948
    %v5465 = vunpack.c.l.b16 %v4949
    %v5466 = vunpack.c.l.b16 %v4950
    %v5467 = vunpack.c.l.b16 %v4951
    %v5468 = vunpack.c.l.b16 %v4952
    %v5469 = vunpack.c.l.b16 %v4953
    %v5470 = vunpack.c.l.b16 %v4954
    %v5471 = vunpack.c.l.b16 %v4955
    %v5472 = vunpack.c.l.b16 %v4956
    %v5473 = vunpack.c.l.b16 %v4957
    %v5474 = vunpack.c.l.b16 %v4958
    %v5475 = vunpack.c.l.b16 %v4959
    %v5476 = vunpack.c.l.b16 %v4960
    %v5477 = vunpack.c.l.b16 %v4961
    %v5478 = vunpack.c.l.b16 %v4962
    %v5479 = vunpack.c.l.b16 %v4963
    %v5480 = vunpack.c.l.b16 %v4964
    %v5481 = vunpack.c.l.b16 %v4965
    %v5482 = vunpack.c.l.b16 %v4966
    %v5483 = vunpack.c.l.b16 %v4967
    %v5484 = vunpack.c.l.b16 %v4968
    %v5485 = vunpack.c.l.b16 %v4969
    %v5486 = vunpack.c.l.b16 %v4970
    %v5487 = vunpack.c.l.b16 %v4971
    %v5488 = vunpack.c.l.b16 %v4972
    %v5489 = vunpack.c.l.b16 %v4973
    %v5490 = vunpack.c.l.b16 %v4974
    %v5491 = vunpack.c.l.b16 %v4975
    %v5492 = vunpack.c.l.b16 %v4976
    %v5493 = vunpack.c.l.b16 %v4977
    %v5494 = vunpack.c.l.b16 %v4978
    %v5495 = vunpack.c.l.b16 %v4979
    %v5496 = vunpack.c.l.b16 %v4980
    %v5497 = vunpack.c.l.b16 %v4981
    %v5498 = vunpack.c.l.b16 %v4982
    %v5499 = vpack.c.b16 %v5244, %v5243
    %v5500 = vpack.c.b16 %v5246, %v5245
    %v5501 = vpack.c.b16 %v5248, %v5247
    %v5502 = vpack.c.b16 %v5250, %v5249
    %v5503 = vpack.c.b16 %v5252, %v5251
    %v5504 = vpack.c.b16 %v5254, %v5253
    %v5505 = vpack.c.b16 %v5256, %v5255
    %v5506 = vpack.c.b16 %v5258, %v5257
    %v5507 = vpack.c.b16 %v5260, %v5259
    %v5508 = vpack.c.b16 %v5262, %v5261
    %v5509 = vpack.c.b16 %v5264, %v5263
    %v5510 = vpack.c.b16 %v5266, %v5265
    %v5511 = vpack.c.b16 %v5268, %v5267
    %v5512 = vpack.c.b16 %v5270, %v5269
    %v5513 = vpack.c.b16 %v5272, %v5271
    %v5514 = vpack.c.b16 %v5274, %v5273
    %v5515 = vpack.c.b16 %v5276, %v5275
    %v5516 = vpack.c.b16 %v5278, %v5277
    %v5517 = vpack.c.b16 %v5280, %v5279
    %v5518 = vpack.c.b16 %v5282, %v5281
    %v5519 = vpack.c.b16 %v5284, %v5283
    %v5520 = vpack.c.b16 %v5286, %v5285
    %v5521 = vpack.c.b16 %v5288, %v5287
    %v5522 = vpack.c.b16 %v5290, %v5289
    %v5523 = vpack.c.b16 %v5292, %v5291
    %v5524 = vpack.c.b16 %v5294, %v5293
    %v5525 = vpack.c.b16 %v5296, %v5295
    %v5526 = vpack.c.b16 %v5298, %v5297
    %v5527 = vpack.c.b16 %v5300, %v5299
    %v5528 = vpack.c.b16 %v5302, %v5301
    %v5529 = vpack.c.b16 %v5304, %v5303
    %v5530 = vpack.c.b16 %v5306, %v5305
    %v5531 = vpack.c.b16 %v5308, %v5307
    %v5532 = vpack.c.b16 %v5310, %v5309
    %v5533 = vpack.c.b16 %v5312, %v5311
    %v5534 = vpack.c.b16 %v5314, %v5313
    %v5535 = vpack.c.b16 %v5316, %v5315
    %v5536 = vpack.c.b16 %v5318, %v5317
    %v5537 = vpack.c.b16 %v5320, %v5319
    %v5538 = vpack.c.b16 %v5322, %v5321
    %v5539 = vpack.c.b16 %v5324, %v5323
    %v5540 = vpack.c.b16 %v5326, %v5325
    %v5541 = vpack.c.b16 %v5328, %v5327
    %v5542 = vpack.c.b16 %v5330, %v5329
    %v5543 = vpack.c.b16 %v5332, %v5331
    %v5544 = vpack.c.b16 %v5334, %v5333
    %v5545 = vpack.c.b16 %v5336, %v5335
    %v5546 = vpack.c.b16 %v5338, %v5337
    %v5547 = vpack.c.b16 %v5340, %v5339
    %v5548 = vpack.c.b16 %v5342, %v5341
    %v5549 = vpack.c.b16 %v5344, %v5343
    %v5550 = vpack.c.b16 %v5346, %v5345
    %v5551 = vpack.c.b16 %v5348, %v5347
    %v5552 = vpack.c.b16 %v5350, %v5349
    %v5553 = vpack.c.b16 %v5352, %v5351
    %v5554 = vpack.c.b16 %v5354, %v5353
    %v5555 = vpack.c.b16 %v5356, %v5355
    %v5556 = vpack.c.b16 %v5358, %v5357
    %v5557 = vpack.c.b16 %v5360, %v5359
    %v5558 = vpack.c.b16 %v5362, %v5361
    %v5559 = vpack.c.b16 %v5364, %v5363
    %v5560 = vpack.c.b16 %v5366, %v5365
    %v5561 = vpack.c.b16 %v5368, %v5367
    %v5562 = vpack.c.b16 %v5370, %v5369
    %v5563 = vpack.c.b16 %v5372, %v5371
    %v5564 = vpack.c.b16 %v5374, %v5373
    %v5565 = vpack.c.b16 %v5376, %v5375
    %v5566 = vpack.c.b16 %v5378, %v5377
    %v5567 = vpack.c.b16 %v5380, %v5379
    %v5568 = vpack.c.b16 %v5382, %v5381
    %v5569 = vpack.c.b16 %v5384, %v5383
    %v5570 = vpack.c.b16 %v5386, %v5385
    %v5571 = vpack.c.b16 %v5388, %v5387
    %v5572 = vpack.c.b16 %v5390, %v5389
    %v5573 = vpack.c.b16 %v5392, %v5391
    %v5574 = vpack.c.b16 %v5394, %v5393
    %v5575 = vpack.c.b16 %v5396, %v5395
    %v5576 = vpack.c.b16 %v5398, %v5397
    %v5577 = vpack.c.b16 %v5400, %v5399
    %v5578 = vpack.c.b16 %v5402, %v5401
    %v5579 = vpack.c.b16 %v5404, %v5403
    %v5580 = vpack.c.b16 %v5406, %v5405
    %v5581 = vpack.c.b16 %v5408, %v5407
    %v5582 = vpack.c.b16 %v5410, %v5409
    %v5583 = vpack.c.b16 %v5412, %v5411
    %v5584 = vpack.c.b16 %v5414, %v5413
    %v5585 = vpack.c.b16 %v5416, %v5415
    %v5586 = vpack.c.b16 %v5418, %v5417
    %v5587 = vpack.c.b16 %v5420, %v5419
    %v5588 = vpack.c.b16 %v5422, %v5421
    %v5589 = vpack.c.b16 %v5424, %v5423
    %v5590 = vpack.c.b16 %v5426, %v5425
    %v5591 = vpack.c.b16 %v5428, %v5427
    %v5592 = vpack.c.b16 %v5430, %v5429
    %v5593 = vpack.c.b16 %v5432, %v5431
    %v5594 = vpack.c.b16 %v5434, %v5433
    %v5595 = vpack.c.b16 %v5436, %v5435
    %v5596 = vpack.c.b16 %v5438, %v5437
    %v5597 = vpack.c.b16 %v5440, %v5439
    %v5598 = vpack.c.b16 %v5442, %v5441
    %v5599 = vpack.c.b16 %v5444, %v5443
    %v5600 = vpack.c.b16 %v5446, %v5445
    %v5601 = vpack.c.b16 %v5448, %v5447
    %v5602 = vpack.c.b16 %v5450, %v5449
    %v5603 = vpack.c.b16 %v5452, %v5451
    %v5604 = vpack.c.b16 %v5454, %v5453
    %v5605 = vpack.c.b16 %v5456, %v5455
    %v5606 = vpack.c.b16 %v5458, %v5457
    %v5607 = vpack.c.b16 %v5460, %v5459
    %v5608 = vpack.c.b16 %v5462, %v5461
    %v5609 = vpack.c.b16 %v5464, %v5463
    %v5610 = vpack.c.b16 %v5466, %v5465
    %v5611 = vpack.c.b16 %v5468, %v5467
    %v5612 = vpack.c.b16 %v5470, %v5469
    %v5613 = vpack.c.b16 %v5472, %v5471
    %v5614 = vpack.c.b16 %v5474, %v5473
    %v5615 = vpack.c.b16 %v5476, %v5475
    %v5616 = vpack.c.b16 %v5478, %v5477
    %v5617 = vpack.c.b16 %v5480, %v5479
    %v5618 = vpack.c.b16 %v5482, %v5481
    %v5619 = vpack.c.b16 %v5484, %v5483
    %v5620 = vpack.c.b16 %v5486, %v5485
    %v5621 = vpack.c.b16 %v5488, %v5487
    %v5622 = vpack.c.b16 %v5490, %v5489
    %v5623 = vpack.c.b16 %v5492, %v5491
    %v5624 = vpack.c.b16 %v5494, %v5493
    %v5625 = vpack.c.b16 %v5496, %v5495
    %v5626 = vpack.c.b16 %v5498, %v5497
    %5755 = vmatpush.bf16.msra.mxu0 %v5506
    %5756 = vmatpush.bf16.msra.mxu0 %v5505
    %5757 = vmatpush.bf16.msra.mxu0 %v5504
    %5758 = vmatpush.bf16.msra.mxu0 %v5503
    %5759 = vmatpush.bf16.msra.mxu0 %v5502
    %5760 = vmatpush.bf16.msra.mxu0 %v5501
    %5761 = vmatpush.bf16.msra.mxu0 %v5500
    %5762 = vmatpush.bf16.msra.mxu0 %v5499
    %5763 = vmatmul.bf16.gmra.mxu0 %v4663
    %v5764 = vpop.f32.mrf.mxu0
    %v5765 = vpop.f32.mrf.mxu0
    %5766 = vmatmul.bf16.gmra.mxu0 %v4679
    %v5767 = vpop.f32.mrf.mxu0
    %v5768 = vpop.f32.mrf.mxu0
    %5769 = vmatmul.bf16.gmra.mxu0 %v4695
    %v5770 = vpop.f32.mrf.mxu0
    %v5771 = vpop.f32.mrf.mxu0
    %5772 = vmatmul.bf16.gmra.mxu0 %v4711
    %v5773 = vpop.f32.mrf.mxu0
    %v5774 = vpop.f32.mrf.mxu0
    %v5775 = vadd.f32 %v4985, %v5774
    %5776 = vdwg.mxu0
    %5777 = vmatpush.bf16.msra.mxu0 %v5514
    %5778 = vmatpush.bf16.msra.mxu0 %v5513
    %5779 = vmatpush.bf16.msra.mxu0 %v5512
    %5780 = vmatpush.bf16.msra.mxu0 %v5511
    %5781 = vmatpush.bf16.msra.mxu0 %v5510
    %5782 = vmatpush.bf16.msra.mxu0 %v5509
    %5783 = vmatpush.bf16.msra.mxu0 %v5508
    %5784 = vmatpush.bf16.msra.mxu0 %v5507
    %5785 = vmatmul.bf16.gmra.mxu0 %v4664
    %v5786 = vpop.f32.mrf.mxu0
    %v5787 = vpop.f32.mrf.mxu0
    %5788 = vmatmul.bf16.gmra.mxu0 %v4680
    %v5789 = vpop.f32.mrf.mxu0
    %v5790 = vpop.f32.mrf.mxu0
    %5791 = vmatmul.bf16.gmra.mxu0 %v4696
    %v5792 = vpop.f32.mrf.mxu0
    %v5793 = vpop.f32.mrf.mxu0
    %5794 = vmatmul.bf16.gmra.mxu0 %v4712
    %v5795 = vpop.f32.mrf.mxu0
    %v5796 = vpop.f32.mrf.mxu0
    %v5797 = vadd.f32 %v5775, %v5796
    %5798 = vdwg.mxu0
    %5799 = vmatpush.bf16.msra.mxu0 %v5522
    %5800 = vmatpush.bf16.msra.mxu0 %v5521
    %5801 = vmatpush.bf16.msra.mxu0 %v5520
    %5802 = vmatpush.bf16.msra.mxu0 %v5519
    %5803 = vmatpush.bf16.msra.mxu0 %v5518
    %5804 = vmatpush.bf16.msra.mxu0 %v5517
    %5805 = vmatpush.bf16.msra.mxu0 %v5516
    %5806 = vmatpush.bf16.msra.mxu0 %v5515
    %5807 = vmatmul.bf16.gmra.mxu0 %v4665
    %v5808 = vpop.f32.mrf.mxu0
    %v5809 = vpop.f32.mrf.mxu0
    %5810 = vmatmul.bf16.gmra.mxu0 %v4681
    %v5811 = vpop.f32.mrf.mxu0
    %v5812 = vpop.f32.mrf.mxu0
    %5813 = vmatmul.bf16.gmra.mxu0 %v4697
    %v5814 = vpop.f32.mrf.mxu0
    %v5815 = vpop.f32.mrf.mxu0
    %5816 = vmatmul.bf16.gmra.mxu0 %v4713
    %v5817 = vpop.f32.mrf.mxu0
    %v5818 = vpop.f32.mrf.mxu0
    %v5819 = vadd.f32 %v5797, %v5818
    %5820 = vdwg.mxu0
    %5821 = vmatpush.bf16.msra.mxu0 %v5530
    %5822 = vmatpush.bf16.msra.mxu0 %v5529
    %5823 = vmatpush.bf16.msra.mxu0 %v5528
    %5824 = vmatpush.bf16.msra.mxu0 %v5527
    %5825 = vmatpush.bf16.msra.mxu0 %v5526
    %5826 = vmatpush.bf16.msra.mxu0 %v5525
    %5827 = vmatpush.bf16.msra.mxu0 %v5524
    %5828 = vmatpush.bf16.msra.mxu0 %v5523
    %5829 = vmatmul.bf16.gmra.mxu0 %v4666
    %v5830 = vpop.f32.mrf.mxu0
    %v5831 = vpop.f32.mrf.mxu0
    %5832 = vmatmul.bf16.gmra.mxu0 %v4682
    %v5833 = vpop.f32.mrf.mxu0
    %v5834 = vpop.f32.mrf.mxu0
    %5835 = vmatmul.bf16.gmra.mxu0 %v4698
    %v5836 = vpop.f32.mrf.mxu0
    %v5837 = vpop.f32.mrf.mxu0
    %5838 = vmatmul.bf16.gmra.mxu0 %v4714
    %v5839 = vpop.f32.mrf.mxu0
    %v5840 = vpop.f32.mrf.mxu0
    %v5841 = vadd.f32 %v5819, %v5840
    %5842 = vdwg.mxu0
    %5843 = vmatpush.bf16.msra.mxu0 %v5538
    %5844 = vmatpush.bf16.msra.mxu0 %v5537
    %5845 = vmatpush.bf16.msra.mxu0 %v5536
    %5846 = vmatpush.bf16.msra.mxu0 %v5535
    %5847 = vmatpush.bf16.msra.mxu0 %v5534
    %5848 = vmatpush.bf16.msra.mxu0 %v5533
    %5849 = vmatpush.bf16.msra.mxu0 %v5532
    %5850 = vmatpush.bf16.msra.mxu0 %v5531
    %5851 = vmatmul.bf16.gmra.mxu0 %v4667
    %v5852 = vpop.f32.mrf.mxu0
    %v5853 = vpop.f32.mrf.mxu0
    %5854 = vmatmul.bf16.gmra.mxu0 %v4683
    %v5855 = vpop.f32.mrf.mxu0
    %v5856 = vpop.f32.mrf.mxu0
    %5857 = vmatmul.bf16.gmra.mxu0 %v4699
    %v5858 = vpop.f32.mrf.mxu0
    %v5859 = vpop.f32.mrf.mxu0
    %5860 = vmatmul.bf16.gmra.mxu0 %v4715
    %v5861 = vpop.f32.mrf.mxu0
    %v5862 = vpop.f32.mrf.mxu0
    %v5863 = vadd.f32 %v5841, %v5862
    %5864 = vdwg.mxu0
    %5865 = vmatpush.bf16.msra.mxu0 %v5546
    %5866 = vmatpush.bf16.msra.mxu0 %v5545
    %5867 = vmatpush.bf16.msra.mxu0 %v5544
    %5868 = vmatpush.bf16.msra.mxu0 %v5543
    %5869 = vmatpush.bf16.msra.mxu0 %v5542
    %5870 = vmatpush.bf16.msra.mxu0 %v5541
    %5871 = vmatpush.bf16.msra.mxu0 %v5540
    %5872 = vmatpush.bf16.msra.mxu0 %v5539
    %5873 = vmatmul.bf16.gmra.mxu0 %v4668
    %v5874 = vpop.f32.mrf.mxu0
    %v5875 = vpop.f32.mrf.mxu0
    %5876 = vmatmul.bf16.gmra.mxu0 %v4684
    %v5877 = vpop.f32.mrf.mxu0
    %v5878 = vpop.f32.mrf.mxu0
    %5879 = vmatmul.bf16.gmra.mxu0 %v4700
    %v5880 = vpop.f32.mrf.mxu0
    %v5881 = vpop.f32.mrf.mxu0
    %5882 = vmatmul.bf16.gmra.mxu0 %v4716
    %v5883 = vpop.f32.mrf.mxu0
    %v5884 = vpop.f32.mrf.mxu0
    %v5885 = vadd.f32 %v5863, %v5884
    %5886 = vdwg.mxu0
    %5887 = vmatpush.bf16.msra.mxu0 %v5554
    %5888 = vmatpush.bf16.msra.mxu0 %v5553
    %5889 = vmatpush.bf16.msra.mxu0 %v5552
    %5890 = vmatpush.bf16.msra.mxu0 %v5551
    %5891 = vmatpush.bf16.msra.mxu0 %v5550
    %5892 = vmatpush.bf16.msra.mxu0 %v5549
    %5893 = vmatpush.bf16.msra.mxu0 %v5548
    %5894 = vmatpush.bf16.msra.mxu0 %v5547
    %5895 = vmatmul.bf16.gmra.mxu0 %v4669
    %v5896 = vpop.f32.mrf.mxu0
    %v5897 = vpop.f32.mrf.mxu0
    %5898 = vmatmul.bf16.gmra.mxu0 %v4685
    %v5899 = vpop.f32.mrf.mxu0
    %v5900 = vpop.f32.mrf.mxu0
    %5901 = vmatmul.bf16.gmra.mxu0 %v4701
    %v5902 = vpop.f32.mrf.mxu0
    %v5903 = vpop.f32.mrf.mxu0
    %5904 = vmatmul.bf16.gmra.mxu0 %v4717
    %v5905 = vpop.f32.mrf.mxu0
    %v5906 = vpop.f32.mrf.mxu0
    %v5907 = vadd.f32 %v5885, %v5906
    %5908 = vdwg.mxu0
    %5909 = vmatpush.bf16.msra.mxu0 %v5562
    %5910 = vmatpush.bf16.msra.mxu0 %v5561
    %5911 = vmatpush.bf16.msra.mxu0 %v5560
    %5912 = vmatpush.bf16.msra.mxu0 %v5559
    %5913 = vmatpush.bf16.msra.mxu0 %v5558
    %5914 = vmatpush.bf16.msra.mxu0 %v5557
    %5915 = vmatpush.bf16.msra.mxu0 %v5556
    %5916 = vmatpush.bf16.msra.mxu0 %v5555
    %5917 = vmatmul.bf16.gmra.mxu0 %v4670
    %v5918 = vpop.f32.mrf.mxu0
    %v5919 = vpop.f32.mrf.mxu0
    %5920 = vmatmul.bf16.gmra.mxu0 %v4686
    %v5921 = vpop.f32.mrf.mxu0
    %v5922 = vpop.f32.mrf.mxu0
    %5923 = vmatmul.bf16.gmra.mxu0 %v4702
    %v5924 = vpop.f32.mrf.mxu0
    %v5925 = vpop.f32.mrf.mxu0
    %5926 = vmatmul.bf16.gmra.mxu0 %v4718
    %v5927 = vpop.f32.mrf.mxu0
    %v5928 = vpop.f32.mrf.mxu0
    %v5929 = vadd.f32 %v5907, %v5928
    %5930 = vdwg.mxu0
    %5931 = vmatpush.bf16.msra.mxu0 %v5570
    %5932 = vmatpush.bf16.msra.mxu0 %v5569
    %5933 = vmatpush.bf16.msra.mxu0 %v5568
    %5934 = vmatpush.bf16.msra.mxu0 %v5567
    %5935 = vmatpush.bf16.msra.mxu0 %v5566
    %5936 = vmatpush.bf16.msra.mxu0 %v5565
    %5937 = vmatpush.bf16.msra.mxu0 %v5564
    %5938 = vmatpush.bf16.msra.mxu0 %v5563
    %5939 = vmatmul.bf16.gmra.mxu0 %v4671
    %v5940 = vpop.f32.mrf.mxu0
    %v5941 = vpop.f32.mrf.mxu0
    %5942 = vmatmul.bf16.gmra.mxu0 %v4687
    %v5943 = vpop.f32.mrf.mxu0
    %v5944 = vpop.f32.mrf.mxu0
    %5945 = vmatmul.bf16.gmra.mxu0 %v4703
    %v5946 = vpop.f32.mrf.mxu0
    %v5947 = vpop.f32.mrf.mxu0
    %5948 = vmatmul.bf16.gmra.mxu0 %v4719
    %v5949 = vpop.f32.mrf.mxu0
    %v5950 = vpop.f32.mrf.mxu0
    %v5951 = vadd.f32 %v5929, %v5950
    %5952 = vdwg.mxu0
    %5953 = vmatpush.bf16.msra.mxu0 %v5578
    %5954 = vmatpush.bf16.msra.mxu0 %v5577
    %5955 = vmatpush.bf16.msra.mxu0 %v5576
    %5956 = vmatpush.bf16.msra.mxu0 %v5575
    %5957 = vmatpush.bf16.msra.mxu0 %v5574
    %5958 = vmatpush.bf16.msra.mxu0 %v5573
    %5959 = vmatpush.bf16.msra.mxu0 %v5572
    %5960 = vmatpush.bf16.msra.mxu0 %v5571
    %5961 = vmatmul.bf16.gmra.mxu0 %v4672
    %v5962 = vpop.f32.mrf.mxu0
    %v5963 = vpop.f32.mrf.mxu0
    %5964 = vmatmul.bf16.gmra.mxu0 %v4688
    %v5965 = vpop.f32.mrf.mxu0
    %v5966 = vpop.f32.mrf.mxu0
    %5967 = vmatmul.bf16.gmra.mxu0 %v4704
    %v5968 = vpop.f32.mrf.mxu0
    %v5969 = vpop.f32.mrf.mxu0
    %5970 = vmatmul.bf16.gmra.mxu0 %v4720
    %v5971 = vpop.f32.mrf.mxu0
    %v5972 = vpop.f32.mrf.mxu0
    %v5973 = vadd.f32 %v5951, %v5972
    %5974 = vdwg.mxu0
    %5975 = vmatpush.bf16.msra.mxu0 %v5586
    %5976 = vmatpush.bf16.msra.mxu0 %v5585
    %5977 = vmatpush.bf16.msra.mxu0 %v5584
    %5978 = vmatpush.bf16.msra.mxu0 %v5583
    %5979 = vmatpush.bf16.msra.mxu0 %v5582
    %5980 = vmatpush.bf16.msra.mxu0 %v5581
    %5981 = vmatpush.bf16.msra.mxu0 %v5580
    %5982 = vmatpush.bf16.msra.mxu0 %v5579
    %5983 = vmatmul.bf16.gmra.mxu0 %v4673
    %v5984 = vpop.f32.mrf.mxu0
    %v5985 = vpop.f32.mrf.mxu0
    %5986 = vmatmul.bf16.gmra.mxu0 %v4689
    %v5987 = vpop.f32.mrf.mxu0
    %v5988 = vpop.f32.mrf.mxu0
    %5989 = vmatmul.bf16.gmra.mxu0 %v4705
    %v5990 = vpop.f32.mrf.mxu0
    %v5991 = vpop.f32.mrf.mxu0
    %5992 = vmatmul.bf16.gmra.mxu0 %v4721
    %v5993 = vpop.f32.mrf.mxu0
    %v5994 = vpop.f32.mrf.mxu0
    %v5995 = vadd.f32 %v5973, %v5994
    %5996 = vdwg.mxu0
    %5997 = vmatpush.bf16.msra.mxu0 %v5594
    %5998 = vmatpush.bf16.msra.mxu0 %v5593
    %5999 = vmatpush.bf16.msra.mxu0 %v5592
    %6000 = vmatpush.bf16.msra.mxu0 %v5591
    %6001 = vmatpush.bf16.msra.mxu0 %v5590
    %6002 = vmatpush.bf16.msra.mxu0 %v5589
    %6003 = vmatpush.bf16.msra.mxu0 %v5588
    %6004 = vmatpush.bf16.msra.mxu0 %v5587
    %6005 = vmatmul.bf16.gmra.mxu0 %v4674
    %v6006 = vpop.f32.mrf.mxu0
    %v6007 = vpop.f32.mrf.mxu0
    %6008 = vmatmul.bf16.gmra.mxu0 %v4690
    %v6009 = vpop.f32.mrf.mxu0
    %v6010 = vpop.f32.mrf.mxu0
    %6011 = vmatmul.bf16.gmra.mxu0 %v4706
    %v6012 = vpop.f32.mrf.mxu0
    %v6013 = vpop.f32.mrf.mxu0
    %6014 = vmatmul.bf16.gmra.mxu0 %v4722
    %v6015 = vpop.f32.mrf.mxu0
    %v6016 = vpop.f32.mrf.mxu0
    %v6017 = vadd.f32 %v5995, %v6016
    %6018 = vdwg.mxu0
    %6019 = vmatpush.bf16.msra.mxu0 %v5602
    %6020 = vmatpush.bf16.msra.mxu0 %v5601
    %6021 = vmatpush.bf16.msra.mxu0 %v5600
    %6022 = vmatpush.bf16.msra.mxu0 %v5599
    %6023 = vmatpush.bf16.msra.mxu0 %v5598
    %6024 = vmatpush.bf16.msra.mxu0 %v5597
    %6025 = vmatpush.bf16.msra.mxu0 %v5596
    %6026 = vmatpush.bf16.msra.mxu0 %v5595
    %6027 = vmatmul.bf16.gmra.mxu0 %v4675
    %v6028 = vpop.f32.mrf.mxu0
    %v6029 = vpop.f32.mrf.mxu0
    %6030 = vmatmul.bf16.gmra.mxu0 %v4691
    %v6031 = vpop.f32.mrf.mxu0
    %v6032 = vpop.f32.mrf.mxu0
    %6033 = vmatmul.bf16.gmra.mxu0 %v4707
    %v6034 = vpop.f32.mrf.mxu0
    %v6035 = vpop.f32.mrf.mxu0
    %6036 = vmatmul.bf16.gmra.mxu0 %v4723
    %v6037 = vpop.f32.mrf.mxu0
    %v6038 = vpop.f32.mrf.mxu0
    %v6039 = vadd.f32 %v6017, %v6038
    %6040 = vdwg.mxu0
    %6041 = vmatpush.bf16.msra.mxu0 %v5610
    %6042 = vmatpush.bf16.msra.mxu0 %v5609
    %6043 = vmatpush.bf16.msra.mxu0 %v5608
    %6044 = vmatpush.bf16.msra.mxu0 %v5607
    %6045 = vmatpush.bf16.msra.mxu0 %v5606
    %6046 = vmatpush.bf16.msra.mxu0 %v5605
    %6047 = vmatpush.bf16.msra.mxu0 %v5604
    %6048 = vmatpush.bf16.msra.mxu0 %v5603
    %6049 = vmatmul.bf16.gmra.mxu0 %v4676
    %v6050 = vpop.f32.mrf.mxu0
    %v6051 = vpop.f32.mrf.mxu0
    %6052 = vmatmul.bf16.gmra.mxu0 %v4692
    %v6053 = vpop.f32.mrf.mxu0
    %v6054 = vpop.f32.mrf.mxu0
    %6055 = vmatmul.bf16.gmra.mxu0 %v4708
    %v6056 = vpop.f32.mrf.mxu0
    %v6057 = vpop.f32.mrf.mxu0
    %6058 = vmatmul.bf16.gmra.mxu0 %v4724
    %v6059 = vpop.f32.mrf.mxu0
    %v6060 = vpop.f32.mrf.mxu0
    %v6061 = vadd.f32 %v6039, %v6060
    %6062 = vdwg.mxu0
    %6063 = vmatpush.bf16.msra.mxu0 %v5618
    %6064 = vmatpush.bf16.msra.mxu0 %v5617
    %6065 = vmatpush.bf16.msra.mxu0 %v5616
    %6066 = vmatpush.bf16.msra.mxu0 %v5615
    %6067 = vmatpush.bf16.msra.mxu0 %v5614
    %6068 = vmatpush.bf16.msra.mxu0 %v5613
    %6069 = vmatpush.bf16.msra.mxu0 %v5612
    %6070 = vmatpush.bf16.msra.mxu0 %v5611
    %6071 = vmatmul.bf16.gmra.mxu0 %v4677
    %v6072 = vpop.f32.mrf.mxu0
    %v6073 = vpop.f32.mrf.mxu0
    %6074 = vmatmul.bf16.gmra.mxu0 %v4693
    %v6075 = vpop.f32.mrf.mxu0
    %v6076 = vpop.f32.mrf.mxu0
    %6077 = vmatmul.bf16.gmra.mxu0 %v4709
    %v6078 = vpop.f32.mrf.mxu0
    %v6079 = vpop.f32.mrf.mxu0
    %6080 = vmatmul.bf16.gmra.mxu0 %v4725
    %v6081 = vpop.f32.mrf.mxu0
    %v6082 = vpop.f32.mrf.mxu0
    %v6083 = vadd.f32 %v6061, %v6082
    %6084 = vdwg.mxu0
    %6085 = vmatpush.bf16.msra.mxu0 %v5626
    %6086 = vmatpush.bf16.msra.mxu0 %v5625
    %6087 = vmatpush.bf16.msra.mxu0 %v5624
    %6088 = vmatpush.bf16.msra.mxu0 %v5623
    %6089 = vmatpush.bf16.msra.mxu0 %v5622
    %6090 = vmatpush.bf16.msra.mxu0 %v5621
    %6091 = vmatpush.bf16.msra.mxu0 %v5620
    %6092 = vmatpush.bf16.msra.mxu0 %v5619
    %6093 = vmatmul.bf16.gmra.mxu0 %v4678
    %v6094 = vpop.f32.mrf.mxu0
    %v6095 = vpop.f32.mrf.mxu0
    %6096 = vmatmul.bf16.gmra.mxu0 %v4694
    %v6097 = vpop.f32.mrf.mxu0
    %v6098 = vpop.f32.mrf.mxu0
    %6099 = vmatmul.bf16.gmra.mxu0 %v4710
    %v6100 = vpop.f32.mrf.mxu0
    %v6101 = vpop.f32.mrf.mxu0
    %6102 = vmatmul.bf16.gmra.mxu0 %v4726
    %v6103 = vpop.f32.mrf.mxu0
    %v6104 = vpop.f32.mrf.mxu0
    %v6105 = vadd.f32 %v6083, %v6104
    %6106 = vdwg.mxu0
    %v6107 = vadd.f32 %v3634, %v6105
    %v6108 = vld [vmem:[%s13] sm:$0x1]
    %v6109 = vld [vmem:[%s14] sm:$0x1]
    %v6110 = vsel %vm193, %v6107, 0.0
    %6111 = vadd.xlane.f32.xlu0 %v6110
    %v6112 = vpop.xlane.xlu0 %6111
    %v6113 = vmul.f32 %v6112, %v3460
    %v6114 = vsub.f32 %v6107, %v6113
    %v6115 = vmul.f32 %v6114, %v6114
    %v6116 = vsel %vm193, %v6115, 0.0
    %6117 = vadd.xlane.f32.xlu0 %v6116
    %v6118 = vpop.xlane.xlu0 %6117
    %v6119 = vmul.f32 %v6118, %v3460
    %v6120 = vadd.f32 %v6119, 1e-05
    %v6121 = vrsqrt.pop %v6120
    %v6122 = vmul.f32 %v6121, %v6120
    %v6123 = vmul.f32 %v6122, %v6121
    %v6124 = vmul.f32 0.5, %v6123
    %v6125 = vsub.f32 1.5, %v6124
    %v6126 = vmul.f32 %v6121, %v6125
    %vm6127 = vweird.f32 %v6120
    %vm6128 = vweird.f32 %v6121
    %vm6129 = vmor %vm6127, %vm6128
    %v6130 = vsel %vm6129, %v6121, %v6126
    %v6131 = vmul.f32 %v6114, %v6130
    %v6133 = vperm.slane %v6108, 0
    %v6135 = vmul.f32 %v6131, %v6133
    %v6137 = vperm.slane %v6109, 0
    %v6139 = vadd.f32 %v6135, %v6137
    %v6140 = vld [vmem:[%s15] sm:$0x1]
    %v6142 = vperm.slane %v6140, 0
    %v6144 = vmul.f32 %v6139, %v6142
    %v6145 = vsel %vm193, %v6144, 0.0
    %6146 = vadd.xlane.f32.xlu0 %v6145
    %v6147 = vpop.xlane.xlu0 %6146
    %v6148 = vld [vmem:[#allocation2] sm:$0x1]
    %6150 = vset.pattern.permute.xlu0 0
    %6151 = vperm.xlu0 %6150, %v6148
    %v6152 = vpop.permute.xlu0 %6151
    %v6154 = vperm.slane %v6152, 0
    %v6155 = vadd.f32 %v6147, %v6154
    %v6157 = vlaneseq
    %v6158 = vand.u32 %v6157, 127
    %v6159 = vperm.slane %v6155, %v6158
    %vm6161 = vcmask 57344
    %6162 = vst.msk [vmem:[#allocation3] sm:$0x1] %vm6161, %v6159
    // Predicated region
    $region78: #{tpu_custom_call.1} parent=1 // pred_check
      _
    $region79: #{tpu_custom_call.1} parent=1 // pred_check_branch
      %6164 = sbr.rel (0) target = $region81
    $region80: #{tpu_custom_call.1} parent=1 // pred_region
      %6166 = vsyncadd [#allocation4], 0
      %s6168 = sshll.u32 [#allocation3], 4
      %s6169 = int_to_ptr.vmem [resolvable:$true] %s6168
      %s6170 = sshll.u32 %s19, 4
      %s6171 = int_to_ptr.hbm [resolvable:$true] %s6170
      %6173 = dma.vmem_to_hbm [thread:$0]  %s6169, 16, %s6171, [#allocation4]
    $region81: #{tpu_custom_call.1} parent=1 // pred_fallthru
      _
    // Predicated region
    $region82: #{tpu_custom_call.1} parent=1 // pred_check
      _
    $region83: #{tpu_custom_call.1} parent=1 // pred_check_branch
      %6175 = sbr.rel (0) target = $region85
    $region84: #{tpu_custom_call.1} parent=1 // pred_region
      %6177 = dma.done [#allocation4], 16
    $region85: #{tpu_custom_call.1} parent=1 // pred_fallthru
      _
    %6178 = vsyncpa [#allocation4], 1

</llo_original>
